<compile_context>
chip_gen: v6e
topology: v6e:2x2x1
jax: 0.10.0
libtpu: 0.0.40
codegen_flags: <defaults>
</compile_context>

<pallas_src>
import functools
import math

import jax
import jax.numpy as jnp
from jax.experimental import pallas as pl
from jax.experimental.pallas import tpu as pltpu


_VMEM_LIMIT = 32 * 1024 * 1024  # safe on v5e/v6e/v7x; raises v5e's 16 MiB default


# ---------------------------------------------------------------------------
# helpers
# ---------------------------------------------------------------------------
def _round_up(x, m):
    return ((x + m - 1) // m) * m


def _pick_tile(padded, max_tile):
    """Largest multiple-of-128 divisor of `padded` that is <= max_tile."""
    n = padded // 128
    for d in range(min(n, max_tile // 128), 0, -1):
        if n % d == 0:
            return 128 * d
    return 128


def _m_tiling(m, max_tm=256):
    """Row tile (multiple of 8) and padded M that the tile divides.

    Prefers >= 2 M tiles so both TensorCores get work on dual-TC chips (v7x).
    """
    tm = min(max_tm, _round_up(-(-m // 2), 8))
    return _round_up(m, tm), tm


# ---------------------------------------------------------------------------
# Pallas kernels
# ---------------------------------------------------------------------------
def _ln_matmul_kernel(x_ref, g_ref, lnb_ref, w_ref, bias_ref, o_ref, xn_ref,
                      *, relu, c_real):
    """o = maybe_relu(LayerNorm(x) @ W + bias).  K (=n_embd) untiled.

    The LN + gamma/beta + f32->bf16 cast runs once per M tile (first N step)
    into the xn_ref VMEM scratch and is reused for all N tiles.
    """
    @pl.when(pl.program_id(1) == 0)
    def _():
        x = x_ref[...].astype(jnp.float32)                    # (tm, Kp)
        kp = x.shape[1]
        if kp != c_real:                                       # masked LN stats
            mask = jax.lax.broadcasted_iota(jnp.int32, x.shape, 1) < c_real
            xz = jnp.where(mask, x, 0.0)
        else:
            mask = None
            xz = x
        mean = jnp.sum(xz, axis=1, keepdims=True) * (1.0 / c_real)
        diff = x - mean
        if mask is not None:
            diff = jnp.where(mask, diff, 0.0)
        var = jnp.sum(diff * diff, axis=1, keepdims=True) * (1.0 / c_real)
        xn = diff * jax.lax.rsqrt(var + 1e-5) * g_ref[...] + lnb_ref[...]
        if mask is not None:
            xn = jnp.where(mask, xn, 0.0)
        xn_ref[...] = xn.astype(xn_ref.dtype)

    y = jnp.dot(xn_ref[...], w_ref[...], preferred_element_type=jnp.float32)
    y = y + bias_ref[...]
    if relu:
        y = jnp.maximum(y, 0.0)
    o_ref[...] = y.astype(o_ref.dtype)


def _attn_proj_kernel(qkv_ref, wp_ref, bp_ref, res_ref, o_ref, *, n_head, scale):
    """One batch element per grid step:
        y_h = softmax(q_h k_h^T * scale) v_h          (heads split in-kernel)
        o   = sum_h y_h @ Wproj[h*Dh:(h+1)*Dh, :] + bproj + residual
    All HBM loads/stores are lane-dense (last dim 3C / C)."""
    C = o_ref.shape[2]
    Dh = C // n_head
    qkv = qkv_ref[0]                                   # (T, 3C) bf16
    acc = bp_ref[...] + res_ref[0]                     # (T, C) f32
    for h in range(n_head):
        qh = qkv[:, h * Dh:(h + 1) * Dh]
        kh = qkv[:, C + h * Dh:C + (h + 1) * Dh]
        vh = qkv[:, 2 * C + h * Dh:2 * C + (h + 1) * Dh]
        s = jax.lax.dot_general(qh, kh, (((1,), (1,)), ((), ())),
                                preferred_element_type=jnp.float32) * scale
        m = jnp.max(s, axis=-1, keepdims=True)
        p = jnp.exp(s - m)
        p = p * pl.reciprocal(jnp.sum(p, axis=-1, keepdims=True), approx=True)
        yh = jnp.dot(p.astype(jnp.bfloat16), vh,
                     preferred_element_type=jnp.float32)        # (T, Dh)
        acc = acc + jnp.dot(yh.astype(jnp.bfloat16),
                            wp_ref[h * Dh:(h + 1) * Dh, :],
                            preferred_element_type=jnp.float32)
    o_ref[0] = acc.astype(o_ref.dtype)


def _matmul_res_kernel(a_ref, w_ref, bias_ref, r_ref, o_ref):
    """out = A @ W + bias + residual (single K step, no accumulator scratch)."""
    y = jnp.dot(a_ref[...], w_ref[...], preferred_element_type=jnp.float32)
    o_ref[...] = (y + bias_ref[...] + r_ref[...]).astype(o_ref.dtype)


def _matmul_res_acc_kernel(a_ref, w_ref, bias_ref, r_ref, o_ref, acc_ref):
    """out = A @ W + bias + residual; K tiled (innermost axis)."""
    k = pl.program_id(2)

    @pl.when(k == 0)
    def _():
        acc_ref[...] = jnp.zeros_like(acc_ref)

    acc_ref[...] += jnp.dot(a_ref[...], w_ref[...],
                            preferred_element_type=jnp.float32)

    @pl.when(k == pl.num_programs(2) - 1)
    def _():
        o_ref[...] = (acc_ref[...] + bias_ref[...] + r_ref[...]).astype(o_ref.dtype)


# ---------------------------------------------------------------------------
# kernel wrappers
# ---------------------------------------------------------------------------
def ln_matmul(x, gamma, beta, w, bias, *, relu, out_dtype=jnp.bfloat16):
    """maybe_relu(LayerNorm(x) @ w + bias).  x: (M, C) f32, w: (C, N)."""
    M, C = x.shape
    _, N = w.shape
    Mp, tm = _m_tiling(M)
    Kp = _round_up(C, 128)
    Np = _round_up(N, 128)
    tn = _pick_tile(Np, 512)
    # TODO(synk): for very large n_embd the untiled-K x block should get a K
    # grid axis to stay inside v7x's 64 MiB / v5e's scoped VMEM budget.

    x_p = x if (Mp == M and Kp == C) else jnp.pad(x, ((0, Mp - M), (0, Kp - C)))
    g_p = gamma.reshape(1, C)
    lb_p = beta.reshape(1, C)
    if Kp != C:
        g_p = jnp.pad(g_p, ((0, 0), (0, Kp - C)))
        lb_p = jnp.pad(lb_p, ((0, 0), (0, Kp - C)))
    w_p = w.astype(jnp.bfloat16)
    if Kp != C or Np != N:
        w_p = jnp.pad(w_p, ((0, Kp - C), (0, Np - N)))
    b_p = bias.reshape(1, N)
    if Np != N:
        b_p = jnp.pad(b_p, ((0, 0), (0, Np - N)))

    out = pl.pallas_call(
        functools.partial(_ln_matmul_kernel, relu=relu, c_real=C),
        out_shape=jax.ShapeDtypeStruct((Mp, Np), out_dtype),
        grid_spec=pltpu.PrefetchScalarGridSpec(
            num_scalar_prefetch=0,
            grid=(Mp // tm, Np // tn),
            in_specs=[
                pl.BlockSpec((tm, Kp), lambda i, j: (i, 0)),
                pl.BlockSpec((1, Kp), lambda i, j: (0, 0)),
                pl.BlockSpec((1, Kp), lambda i, j: (0, 0)),
                pl.BlockSpec((Kp, tn), lambda i, j: (0, j)),
                pl.BlockSpec((1, tn), lambda i, j: (0, j)),
            ],
            out_specs=pl.BlockSpec((tm, tn), lambda i, j: (i, j)),
            scratch_shapes=[pltpu.VMEM((tm, Kp), jnp.bfloat16)],
        ),
        compiler_params=pltpu.CompilerParams(
            dimension_semantics=("parallel", "arbitrary"),
            vmem_limit_bytes=_VMEM_LIMIT),
    )(x_p, g_p, lb_p, w_p, b_p)
    if Mp != M or Np != N:
        out = out[:M, :N]
    return out


def attention_proj_residual(qkv, x_res, w_proj, b_proj, n_head):
    """qkv: (B, T, 3C) bf16, x_res: (B, T, C) f32 -> x_res + proj(attn)."""
    B, T, C3 = qkv.shape
    C = C3 // 3
    Dh = C // n_head
    scale = 1.0 / math.sqrt(Dh)

    # TODO(synk): full (T, 3C) tile per batch; long sequences need a
    # flash-style kernel with a key-tile grid axis and online softmax.
    return pl.pallas_call(
        functools.partial(_attn_proj_kernel, n_head=n_head, scale=scale),
        out_shape=jax.ShapeDtypeStruct((B, T, C), jnp.float32),
        grid_spec=pltpu.PrefetchScalarGridSpec(
            num_scalar_prefetch=0,
            grid=(B,),
            in_specs=[
                pl.BlockSpec((1, T, C3), lambda b: (b, 0, 0)),
                pl.BlockSpec((C, C), lambda b: (0, 0)),
                pl.BlockSpec((1, C), lambda b: (0, 0)),
                pl.BlockSpec((1, T, C), lambda b: (b, 0, 0)),
            ],
            out_specs=pl.BlockSpec((1, T, C), lambda b: (b, 0, 0)),
        ),
        compiler_params=pltpu.CompilerParams(
            dimension_semantics=("parallel",),
            vmem_limit_bytes=_VMEM_LIMIT),
        input_output_aliases={3: 0},
    )(qkv, w_proj.astype(jnp.bfloat16), b_proj.reshape(1, C), x_res)


def matmul_residual(a, w, bias, residual):
    """a @ w + bias + residual.  a: (M, K), w: (K, N), residual: (M, N) f32."""
    M, K = a.shape
    _, N = w.shape
    Mp, tm = _m_tiling(M)
    Kp = _round_up(K, 128)
    Np = _round_up(N, 128)
    tk = _pick_tile(Kp, 512)
    tn = _pick_tile(Np, 512)

    a_p = a if a.dtype == jnp.bfloat16 else a.astype(jnp.bfloat16)
    if Mp != M or Kp != K:
        a_p = jnp.pad(a_p, ((0, Mp - M), (0, Kp - K)))
    w_p = w.astype(jnp.bfloat16)
    if Kp != K or Np != N:
        w_p = jnp.pad(w_p, ((0, Kp - K), (0, Np - N)))
    b_p = bias.reshape(1, N)
    if Np != N:
        b_p = jnp.pad(b_p, ((0, 0), (0, Np - N)))
    r_p = residual if residual.dtype == jnp.float32 else residual.astype(jnp.float32)
    if Mp != M or Np != N:
        r_p = jnp.pad(r_p, ((0, Mp - M), (0, Np - N)))

    if Kp == tk:  # single K step: no accumulator scratch, no init/finalize
        kernel = _matmul_res_kernel
        grid = (Mp // tm, Np // tn)
        in_specs = [
            pl.BlockSpec((tm, Kp), lambda i, j: (i, 0)),
            pl.BlockSpec((Kp, tn), lambda i, j: (0, j)),
            pl.BlockSpec((1, tn), lambda i, j: (0, j)),
            pl.BlockSpec((tm, tn), lambda i, j: (i, j)),
        ]
        out_specs = pl.BlockSpec((tm, tn), lambda i, j: (i, j))
        scratch = []
        semantics = ("parallel", "parallel")
    else:
        kernel = _matmul_res_acc_kernel
        grid = (Mp // tm, Np // tn, Kp // tk)
        in_specs = [
            pl.BlockSpec((tm, tk), lambda i, j, k: (i, k)),
            pl.BlockSpec((tk, tn), lambda i, j, k: (k, j)),
            pl.BlockSpec((1, tn), lambda i, j, k: (0, j)),
            pl.BlockSpec((tm, tn), lambda i, j, k: (i, j)),
        ]
        out_specs = pl.BlockSpec((tm, tn), lambda i, j, k: (i, j))
        scratch = [pltpu.VMEM((tm, tn), jnp.float32)]
        semantics = ("parallel", "parallel", "arbitrary")

    out = pl.pallas_call(
        kernel,
        out_shape=jax.ShapeDtypeStruct((Mp, Np), jnp.float32),
        grid_spec=pltpu.PrefetchScalarGridSpec(
            num_scalar_prefetch=0,
            grid=grid,
            in_specs=in_specs,
            out_specs=out_specs,
            scratch_shapes=scratch,
        ),
        compiler_params=pltpu.CompilerParams(
            dimension_semantics=semantics,
            vmem_limit_bytes=_VMEM_LIMIT),
        input_output_aliases={3: 0},
    )(a_p, w_p, b_p, r_p)
    if Mp != M or Np != N:
        out = out[:M, :N]
    return out


# ---------------------------------------------------------------------------
# Block forward
# ---------------------------------------------------------------------------
def block_forward(x, params, *, n_head):
    """x: (B, T, C) f32 -> (B, T, C) f32.  Dropout = identity (inference)."""
    B, T, C = x.shape
    M = B * T
    x2 = x.reshape(M, C)

    # --- attention branch: x = x + proj(attn(LN1(x))) ---
    qkv = ln_matmul(x2, params["ln1_g"], params["ln1_b"],
                    params["w_qkv"], params["b_qkv"], relu=False)     # (M, 3C) bf16
    x3 = attention_proj_residual(qkv.reshape(B, T, 3 * C), x,
                                 params["w_proj"], params["b_proj"], n_head)
    x2 = x3.reshape(M, C)                                             # f32 residual

    # --- MLP branch: x = x + fc2(relu(fc1(LN2(x)))) ---
    h = ln_matmul(x2, params["ln2_g"], params["ln2_b"],
                  params["w_fc1"], params["b_fc1"], relu=True)        # (M, 4C) bf16
    x2 = matmul_residual(h, params["w_fc2"], params["b_fc2"], residual=x2)

    return x2.reshape(B, T, C)


# ---------------------------------------------------------------------------
# parameters (synthetic, PyTorch nn.Linear-style init) + pure-JAX reference
# ---------------------------------------------------------------------------
def init_block_params(key, n_embd, n_head, block_exp):
    assert n_embd % n_head == 0

    def linear(k, din, dout):
        kw, kb = jax.random.split(k)
        bound = 1.0 / math.sqrt(din)
        w = jax.random.uniform(kw, (din, dout), jnp.float32, -bound, bound)
        b = jax.random.uniform(kb, (dout,), jnp.float32, -bound, bound)
        return w, b

    keys = jax.random.split(key, 6)
    wq, bq = linear(keys[0], n_embd, n_embd)
    wk, bk = linear(keys[1], n_embd, n_embd)
    wv, bv = linear(keys[2], n_embd, n_embd)
    wp, bp = linear(keys[3], n_embd, n_embd)
    w1, b1 = linear(keys[4], n_embd, block_exp * n_embd)
    w2, b2 = linear(keys[5], block_exp * n_embd, n_embd)
    return {
        "ln1_g": jnp.ones((n_embd,), jnp.float32),
        "ln1_b": jnp.zeros((n_embd,), jnp.float32),
        "ln2_g": jnp.ones((n_embd,), jnp.float32),
        "ln2_b": jnp.zeros((n_embd,), jnp.float32),
        "w_qkv": jnp.concatenate([wq, wk, wv], axis=1),
        "b_qkv": jnp.concatenate([bq, bk, bv]),
        "w_proj": wp, "b_proj": bp,
        "w_fc1": w1, "b_fc1": b1,
        "w_fc2": w2, "b_fc2": b2,
    }


def reference_block(x, params, *, n_head):
    def ln(t, g, b):
        mu = jnp.mean(t, axis=-1, keepdims=True)
        var = jnp.mean((t - mu) ** 2, axis=-1, keepdims=True)
        return (t - mu) * jax.lax.rsqrt(var + 1e-5) * g + b

    B, T, C = x.shape
    Dh = C // n_head
    h = ln(x, params["ln1_g"], params["ln1_b"])
    qkv = h @ params["w_qkv"] + params["b_qkv"]
    q, k, v = jnp.split(qkv, 3, axis=-1)

    def sp(t):
        return t.reshape(B, T, n_head, Dh).transpose(0, 2, 1, 3)

    q, k, v = sp(q), sp(k), sp(v)
    att = jax.nn.softmax(
        jnp.einsum("bhqd,bhkd->bhqk", q, k) / math.sqrt(Dh), axis=-1)
    y = (jnp.einsum("bhqk,bhkd->bhqd", att, v)
           .transpose(0, 2, 1, 3).reshape(B, T, C))
    x = x + y @ params["w_proj"] + params["b_proj"]
    h2 = ln(x, params["ln2_g"], params["ln2_b"])
    m = jnp.maximum(h2 @ params["w_fc1"] + params["b_fc1"], 0.0)
    return x + m @ params["w_fc2"] + params["b_fc2"]


# ---------------------------------------------------------------------------
if __name__ == "__main__":
    n_embd, n_head, block_exp = 128, 4, 4
    B, T = 2, 64

    key = jax.random.PRNGKey(0)
    pkey, xkey = jax.random.split(key)
    params = init_block_params(pkey, n_embd, n_head, block_exp)
    x = jax.random.normal(xkey, (B, T, n_embd), jnp.float32)

    fwd = jax.jit(functools.partial(block_forward, n_head=n_head))
    out = jax.block_until_ready(fwd(x, params))

    assert out.shape == (B, T, n_embd), out.shape
    assert bool(jnp.all(jnp.isfinite(out)))

    ref = reference_block(x, params, n_head=n_head)
    max_err = float(jnp.max(jnp.abs(out - ref)))
    assert max_err < 5e-2, f"max abs error vs f32 reference: {max_err}"

    print("KERNEL_OK")
</pallas_src>

<mosaic_0001>
module attributes {stable_mosaic.version = 11 : i64} {
  func.func @_ln_matmul_kernel(%arg0: i32, %arg1: i32, %arg2: memref<64x128xf32, #tpu.memory_space<vmem>>, %arg3: memref<1x128xf32, #tpu.memory_space<vmem>>, %arg4: memref<1x128xf32, #tpu.memory_space<vmem>>, %arg5: memref<128x384xbf16, #tpu.memory_space<vmem>>, %arg6: memref<1x384xf32, #tpu.memory_space<vmem>>, %arg7: memref<64x384xbf16, #tpu.memory_space<vmem>>, %arg8: memref<64x128xbf16, #tpu.memory_space<vmem>>) attributes {dimension_semantics = [#tpu.dimension_semantics<parallel>, #tpu.dimension_semantics<arbitrary>], iteration_bounds = array<i64: 2, 1>, scalar_prefetch = 0 : i64, scratch_operands = 1 : i64, tpu.core_type = #tpu.core_type<tc>, window_params = [{transform_indices = @transform_0, window_bounds = array<i64: 64, 128>}, {pipeline_mode = #tpu.pipeline_mode<synchronous>, transform_indices = @transform_1, window_bounds = array<i64: 1, 128>}, {pipeline_mode = #tpu.pipeline_mode<synchronous>, transform_indices = @transform_2, window_bounds = array<i64: 1, 128>}, {transform_indices = @transform_3, window_bounds = array<i64: 128, 384>}, {transform_indices = @transform_4, window_bounds = array<i64: 1, 384>}, {transform_indices = @transform_5, window_bounds = array<i64: 64, 384>}]} {
    %c0_i32 = arith.constant 0 : i32
    %0 = arith.cmpi eq, %arg1, %c0_i32 : i32
    %1 = arith.extui %0 : i1 to i32
    %c0_i32_0 = arith.constant 0 : i32
    %2 = arith.cmpi ne, %1, %c0_i32_0 : i32
    scf.if %2 {
      %c0_8 = arith.constant 0 : index
      %c0_9 = arith.constant 0 : index
      %11 = vector.load %arg2[%c0_8, %c0_9] : memref<64x128xf32, #tpu.memory_space<vmem>>, vector<64x128xf32>
      %cst_10 = arith.constant dense<0.000000e+00> : vector<64xf32>
      %12 = vector.multi_reduction <add>, %11, %cst_10 [1] : vector<64x128xf32> to vector<64xf32>
      %13 = vector.shape_cast %12 : vector<64xf32> to vector<64x1xf32>
      %cst_11 = arith.constant 7.812500e-03 : f32
      %14 = vector.broadcast %cst_11 : f32 to vector<64x1xf32>
      %15 = arith.mulf %13, %14 : vector<64x1xf32>
      %16 = vector.broadcast %15 : vector<64x1xf32> to vector<64x128xf32>
      %17 = arith.subf %11, %16 : vector<64x128xf32>
      %18 = arith.mulf %17, %17 : vector<64x128xf32>
      %cst_12 = arith.constant dense<0.000000e+00> : vector<64xf32>
      %19 = vector.multi_reduction <add>, %18, %cst_12 [1] : vector<64x128xf32> to vector<64xf32>
      %20 = vector.shape_cast %19 : vector<64xf32> to vector<64x1xf32>
      %cst_13 = arith.constant 7.812500e-03 : f32
      %21 = vector.broadcast %cst_13 : f32 to vector<64x1xf32>
      %22 = arith.mulf %20, %21 : vector<64x1xf32>
      %cst_14 = arith.constant 9.99999974E-6 : f32
      %23 = vector.broadcast %cst_14 : f32 to vector<64x1xf32>
      %24 = arith.addf %22, %23 : vector<64x1xf32>
      %25 = math.rsqrt %24 : vector<64x1xf32>
      %26 = vector.broadcast %25 : vector<64x1xf32> to vector<64x128xf32>
      %27 = arith.mulf %17, %26 : vector<64x128xf32>
      %c0_15 = arith.constant 0 : index
      %c0_16 = arith.constant 0 : index
      %28 = vector.load %arg3[%c0_15, %c0_16] : memref<1x128xf32, #tpu.memory_space<vmem>>, vector<1x128xf32>
      %29 = vector.broadcast %28 : vector<1x128xf32> to vector<64x128xf32>
      %30 = arith.mulf %27, %29 : vector<64x128xf32>
      %c0_17 = arith.constant 0 : index
      %c0_18 = arith.constant 0 : index
      %31 = vector.load %arg4[%c0_17, %c0_18] : memref<1x128xf32, #tpu.memory_space<vmem>>, vector<1x128xf32>
      %32 = vector.broadcast %31 : vector<1x128xf32> to vector<64x128xf32>
      %33 = arith.addf %30, %32 : vector<64x128xf32>
      %34 = arith.truncf %33 : vector<64x128xf32> to vector<64x128xbf16>
      %c0_19 = arith.constant 0 : index
      %c0_20 = arith.constant 0 : index
      %35 = vector.load %arg8[%c0_19, %c0_20] : memref<64x128xbf16, #tpu.memory_space<vmem>>, vector<64x128xbf16>
      tpu.vector_store %arg8[%c0_19, %c0_20], %34 {strides = array<i32>} : memref<64x128xbf16, #tpu.memory_space<vmem>>, vector<64x128xbf16>,
    } else {
    }
    %c0 = arith.constant 0 : index
    %c0_1 = arith.constant 0 : index
    %3 = vector.load %arg8[%c0, %c0_1] : memref<64x128xbf16, #tpu.memory_space<vmem>>, vector<64x128xbf16>
    %c0_2 = arith.constant 0 : index
    %c0_3 = arith.constant 0 : index
    %4 = vector.load %arg5[%c0_2, %c0_3] : memref<128x384xbf16, #tpu.memory_space<vmem>>, vector<128x384xbf16>
    %cst = arith.constant dense<0.000000e+00> : vector<64x384xf32>
    %5 = tpu.matmul %3, %4, %cst {dimension_numbers = #tpu.dot_dimension_numbers<[1], [0], [0], [1], [0, 0, 1, 1], [], []>} : vector<64x128xbf16>, vector<128x384xbf16>, vector<64x384xf32> -> vector<64x384xf32>
    %c0_4 = arith.constant 0 : index
    %c0_5 = arith.constant 0 : index
    %6 = vector.load %arg6[%c0_4, %c0_5] : memref<1x384xf32, #tpu.memory_space<vmem>>, vector<1x384xf32>
    %7 = vector.broadcast %6 : vector<1x384xf32> to vector<64x384xf32>
    %8 = arith.addf %5, %7 : vector<64x384xf32>
    %9 = arith.truncf %8 : vector<64x384xf32> to vector<64x384xbf16>
    %c0_6 = arith.constant 0 : index
    %c0_7 = arith.constant 0 : index
    %10 = vector.load %arg7[%c0_6, %c0_7] : memref<64x384xbf16, #tpu.memory_space<vmem>>, vector<64x384xbf16>
    tpu.vector_store %arg7[%c0_6, %c0_7], %9 {strides = array<i32>} : memref<64x384xbf16, #tpu.memory_space<vmem>>, vector<64x384xbf16>,
    return
  }
  func.func @transform_0(%arg0: i32, %arg1: i32) -> (i32, i32) {
    %c0_i32 = arith.constant 0 : i32
    %c0_i32_0 = arith.constant 0 : i32
    return %arg0, %c0_i32 : i32, i32
  }
  func.func @transform_1(%arg0: i32, %arg1: i32) -> (i32, i32) {
    %c0_i32 = arith.constant 0 : i32
    %c0_i32_0 = arith.constant 0 : i32
    %c0_i32_1 = arith.constant 0 : i32
    return %c0_i32, %c0_i32_0 : i32, i32
  }
  func.func @transform_2(%arg0: i32, %arg1: i32) -> (i32, i32) {
    %c0_i32 = arith.constant 0 : i32
    %c0_i32_0 = arith.constant 0 : i32
    %c0_i32_1 = arith.constant 0 : i32
    return %c0_i32, %c0_i32_0 : i32, i32
  }
  func.func @transform_3(%arg0: i32, %arg1: i32) -> (i32, i32) {
    %c0_i32 = arith.constant 0 : i32
    %c0_i32_0 = arith.constant 0 : i32
    return %c0_i32, %arg1 : i32, i32
  }
  func.func @transform_4(%arg0: i32, %arg1: i32) -> (i32, i32) {
    %c0_i32 = arith.constant 0 : i32
    %c0_i32_0 = arith.constant 0 : i32
    return %c0_i32, %arg1 : i32, i32
  }
  func.func @transform_5(%arg0: i32, %arg1: i32) -> (i32, i32) {
    %c0_i32 = arith.constant 0 : i32
    return %arg0, %arg1 : i32, i32
  }
}

module attributes {stable_mosaic.version = 11 : i64} {
  func.func @_matmul_res_kernel(%arg0: i32, %arg1: i32, %arg2: memref<64x512xbf16, #tpu.memory_space<vmem>>, %arg3: memref<512x128xbf16, #tpu.memory_space<vmem>>, %arg4: memref<1x128xf32, #tpu.memory_space<vmem>>, %arg5: memref<64x128xf32, #tpu.memory_space<vmem>>, %arg6: memref<64x128xf32, #tpu.memory_space<vmem>>) attributes {dimension_semantics = [#tpu.dimension_semantics<parallel>, #tpu.dimension_semantics<parallel>], iteration_bounds = array<i64: 2, 1>, scalar_prefetch = 0 : i64, scratch_operands = 0 : i64, tpu.core_type = #tpu.core_type<tc>, window_params = [{transform_indices = @transform_0, window_bounds = array<i64: 64, 512>}, {transform_indices = @transform_1, window_bounds = array<i64: 512, 128>}, {transform_indices = @transform_2, window_bounds = array<i64: 1, 128>}, {transform_indices = @transform_3, window_bounds = array<i64: 64, 128>}, {transform_indices = @transform_4, window_bounds = array<i64: 64, 128>}]} {
    %c0 = arith.constant 0 : index
    %c0_0 = arith.constant 0 : index
    %0 = vector.load %arg2[%c0, %c0_0] : memref<64x512xbf16, #tpu.memory_space<vmem>>, vector<64x512xbf16>
    %c0_1 = arith.constant 0 : index
    %c0_2 = arith.constant 0 : index
    %1 = vector.load %arg3[%c0_1, %c0_2] : memref<512x128xbf16, #tpu.memory_space<vmem>>, vector<512x128xbf16>
    %cst = arith.constant dense<0.000000e+00> : vector<64x128xf32>
    %2 = tpu.matmul %0, %1, %cst {dimension_numbers = #tpu.dot_dimension_numbers<[1], [0], [0], [1], [0, 0, 1, 1], [], []>} : vector<64x512xbf16>, vector<512x128xbf16>, vector<64x128xf32> -> vector<64x128xf32>
    %c0_3 = arith.constant 0 : index
    %c0_4 = arith.constant 0 : index
    %3 = vector.load %arg4[%c0_3, %c0_4] : memref<1x128xf32, #tpu.memory_space<vmem>>, vector<1x128xf32>
    %4 = vector.broadcast %3 : vector<1x128xf32> to vector<64x128xf32>
    %5 = arith.addf %2, %4 : vector<64x128xf32>
    %c0_5 = arith.constant 0 : index
    %c0_6 = arith.constant 0 : index
    %6 = vector.load %arg5[%c0_5, %c0_6] : memref<64x128xf32, #tpu.memory_space<vmem>>, vector<64x128xf32>
    %7 = arith.addf %5, %6 : vector<64x128xf32>
    %c0_7 = arith.constant 0 : index
    %c0_8 = arith.constant 0 : index
    %8 = vector.load %arg6[%c0_7, %c0_8] : memref<64x128xf32, #tpu.memory_space<vmem>>, vector<64x128xf32>
    tpu.vector_store %arg6[%c0_7, %c0_8], %7 {strides = array<i32>} : memref<64x128xf32, #tpu.memory_space<vmem>>, vector<64x128xf32>,
    return
  }
  func.func @transform_0(%arg0: i32, %arg1: i32) -> (i32, i32) {
    %c0_i32 = arith.constant 0 : i32
    %c0_i32_0 = arith.constant 0 : i32
    return %arg0, %c0_i32 : i32, i32
  }
  func.func @transform_1(%arg0: i32, %arg1: i32) -> (i32, i32) {
    %c0_i32 = arith.constant 0 : i32
    %c0_i32_0 = arith.constant 0 : i32
    return %c0_i32, %arg1 : i32, i32
  }
  func.func @transform_2(%arg0: i32, %arg1: i32) -> (i32, i32) {
    %c0_i32 = arith.constant 0 : i32
    %c0_i32_0 = arith.constant 0 : i32
    return %c0_i32, %arg1 : i32, i32
  }
  func.func @transform_3(%arg0: i32, %arg1: i32) -> (i32, i32) {
    %c0_i32 = arith.constant 0 : i32
    return %arg0, %arg1 : i32, i32
  }
  func.func @transform_4(%arg0: i32, %arg1: i32) -> (i32, i32) {
    %c0_i32 = arith.constant 0 : i32
    return %arg0, %arg1 : i32, i32
  }
}

module attributes {stable_mosaic.version = 11 : i64} {
  func.func @_attn_proj_kernel(%arg0: i32, %arg1: memref<1x64x384xbf16, #tpu.memory_space<vmem>>, %arg2: memref<128x128xbf16, #tpu.memory_space<vmem>>, %arg3: memref<1x128xf32, #tpu.memory_space<vmem>>, %arg4: memref<1x64x128xf32, #tpu.memory_space<vmem>>, %arg5: memref<1x64x128xf32, #tpu.memory_space<vmem>>) attributes {dimension_semantics = [#tpu.dimension_semantics<parallel>], iteration_bounds = array<i64: 2>, scalar_prefetch = 0 : i64, scratch_operands = 0 : i64, tpu.core_type = #tpu.core_type<tc>, window_params = [{transform_indices = @transform_0, window_bounds = array<i64: 1, 64, 384>}, {pipeline_mode = #tpu.pipeline_mode<synchronous>, transform_indices = @transform_1, window_bounds = array<i64: 128, 128>}, {pipeline_mode = #tpu.pipeline_mode<synchronous>, transform_indices = @transform_2, window_bounds = array<i64: 1, 128>}, {transform_indices = @transform_3, window_bounds = array<i64: 1, 64, 128>}, {transform_indices = @transform_4, window_bounds = array<i64: 1, 64, 128>}]} {
    %c0 = arith.constant 0 : index
    %c0_0 = arith.constant 0 : index
    %c0_1 = arith.constant 0 : index
    %0 = vector.load %arg1[%c0, %c0_0, %c0_1] : memref<1x64x384xbf16, #tpu.memory_space<vmem>>, vector<1x64x384xbf16>
    %1 = vector.shape_cast %0 : vector<1x64x384xbf16> to vector<64x384xbf16>
    %c0_2 = arith.constant 0 : index
    %c0_3 = arith.constant 0 : index
    %2 = vector.load %arg3[%c0_2, %c0_3] : memref<1x128xf32, #tpu.memory_space<vmem>>, vector<1x128xf32>
    %c0_4 = arith.constant 0 : index
    %c0_5 = arith.constant 0 : index
    %c0_6 = arith.constant 0 : index
    %3 = vector.load %arg4[%c0_4, %c0_5, %c0_6] : memref<1x64x128xf32, #tpu.memory_space<vmem>>, vector<1x64x128xf32>
    %4 = vector.shape_cast %3 : vector<1x64x128xf32> to vector<64x128xf32>
    %5 = vector.broadcast %2 : vector<1x128xf32> to vector<64x128xf32>
    %6 = arith.addf %5, %4 : vector<64x128xf32>
    %7 = vector.extract_strided_slice %1 {offsets = [0, 0], sizes = [64, 32], strides = [1, 1]} : vector<64x384xbf16> to vector<64x32xbf16>
    %8 = vector.extract_strided_slice %1 {offsets = [0, 128], sizes = [64, 32], strides = [1, 1]} : vector<64x384xbf16> to vector<64x32xbf16>
    %9 = vector.extract_strided_slice %1 {offsets = [0, 256], sizes = [64, 32], strides = [1, 1]} : vector<64x384xbf16> to vector<64x32xbf16>
    %cst = arith.constant dense<0.000000e+00> : vector<64x64xf32>
    %10 = tpu.matmul %7, %8, %cst {dimension_numbers = #tpu.dot_dimension_numbers<[1], [1], [0], [0], [0, 0, 1, 0], [], []>} : vector<64x32xbf16>, vector<64x32xbf16>, vector<64x64xf32> -> vector<64x64xf32>
    %cst_7 = arith.constant 0.176776692 : f32
    %11 = vector.broadcast %cst_7 : f32 to vector<64x64xf32>
    %12 = arith.mulf %10, %11 : vector<64x64xf32>
    %cst_8 = arith.constant dense<0xFF800000> : vector<64xf32>
    %13 = vector.multi_reduction <maximumf>, %12, %cst_8 [1] : vector<64x64xf32> to vector<64xf32>
    %14 = vector.shape_cast %13 : vector<64xf32> to vector<64x1xf32>
    %15 = vector.broadcast %14 : vector<64x1xf32> to vector<64x64xf32>
    %16 = arith.subf %12, %15 : vector<64x64xf32>
    %17 = math.exp %16 : vector<64x64xf32>
    %cst_9 = arith.constant dense<0.000000e+00> : vector<64xf32>
    %18 = vector.multi_reduction <add>, %17, %cst_9 [1] : vector<64x64xf32> to vector<64xf32>
    %19 = vector.shape_cast %18 : vector<64xf32> to vector<64x1xf32>
    %20 = tpu.reciprocal %19 {approx = true} : vector<64x1xf32> -> vector<64x1xf32>
    %21 = vector.broadcast %20 : vector<64x1xf32> to vector<64x64xf32>
    %22 = arith.mulf %17, %21 : vector<64x64xf32>
    %23 = arith.truncf %22 : vector<64x64xf32> to vector<64x64xbf16>
    %cst_10 = arith.constant dense<0.000000e+00> : vector<64x32xf32>
    %24 = tpu.matmul %23, %9, %cst_10 {dimension_numbers = #tpu.dot_dimension_numbers<[1], [0], [0], [1], [0, 0, 1, 1], [], []>} : vector<64x64xbf16>, vector<64x32xbf16>, vector<64x32xf32> -> vector<64x32xf32>
    %25 = arith.truncf %24 : vector<64x32xf32> to vector<64x32xbf16>
    %c0_11 = arith.constant 0 : index
    %c0_12 = arith.constant 0 : index
    %26 = vector.load %arg2[%c0_11, %c0_12] : memref<128x128xbf16, #tpu.memory_space<vmem>>, vector<32x128xbf16>
    %cst_13 = arith.constant dense<0.000000e+00> : vector<64x128xf32>
    %27 = tpu.matmul %25, %26, %cst_13 {dimension_numbers = #tpu.dot_dimension_numbers<[1], [0], [0], [1], [0, 0, 1, 1], [], []>} : vector<64x32xbf16>, vector<32x128xbf16>, vector<64x128xf32> -> vector<64x128xf32>
    %28 = arith.addf %6, %27 : vector<64x128xf32>
    %29 = vector.extract_strided_slice %1 {offsets = [0, 32], sizes = [64, 32], strides = [1, 1]} : vector<64x384xbf16> to vector<64x32xbf16>
    %30 = vector.extract_strided_slice %1 {offsets = [0, 160], sizes = [64, 32], strides = [1, 1]} : vector<64x384xbf16> to vector<64x32xbf16>
    %31 = vector.extract_strided_slice %1 {offsets = [0, 288], sizes = [64, 32], strides = [1, 1]} : vector<64x384xbf16> to vector<64x32xbf16>
    %cst_14 = arith.constant dense<0.000000e+00> : vector<64x64xf32>
    %32 = tpu.matmul %29, %30, %cst_14 {dimension_numbers = #tpu.dot_dimension_numbers<[1], [1], [0], [0], [0, 0, 1, 0], [], []>} : vector<64x32xbf16>, vector<64x32xbf16>, vector<64x64xf32> -> vector<64x64xf32>
    %cst_15 = arith.constant 0.176776692 : f32
    %33 = vector.broadcast %cst_15 : f32 to vector<64x64xf32>
    %34 = arith.mulf %32, %33 : vector<64x64xf32>
    %cst_16 = arith.constant dense<0xFF800000> : vector<64xf32>
    %35 = vector.multi_reduction <maximumf>, %34, %cst_16 [1] : vector<64x64xf32> to vector<64xf32>
    %36 = vector.shape_cast %35 : vector<64xf32> to vector<64x1xf32>
    %37 = vector.broadcast %36 : vector<64x1xf32> to vector<64x64xf32>
    %38 = arith.subf %34, %37 : vector<64x64xf32>
    %39 = math.exp %38 : vector<64x64xf32>
    %cst_17 = arith.constant dense<0.000000e+00> : vector<64xf32>
    %40 = vector.multi_reduction <add>, %39, %cst_17 [1] : vector<64x64xf32> to vector<64xf32>
    %41 = vector.shape_cast %40 : vector<64xf32> to vector<64x1xf32>
    %42 = tpu.reciprocal %41 {approx = true} : vector<64x1xf32> -> vector<64x1xf32>
    %43 = vector.broadcast %42 : vector<64x1xf32> to vector<64x64xf32>
    %44 = arith.mulf %39, %43 : vector<64x64xf32>
    %45 = arith.truncf %44 : vector<64x64xf32> to vector<64x64xbf16>
    %cst_18 = arith.constant dense<0.000000e+00> : vector<64x32xf32>
    %46 = tpu.matmul %45, %31, %cst_18 {dimension_numbers = #tpu.dot_dimension_numbers<[1], [0], [0], [1], [0, 0, 1, 1], [], []>} : vector<64x64xbf16>, vector<64x32xbf16>, vector<64x32xf32> -> vector<64x32xf32>
    %47 = arith.truncf %46 : vector<64x32xf32> to vector<64x32xbf16>
    %c32 = arith.constant 32 : index
    %c0_19 = arith.constant 0 : index
    %48 = vector.load %arg2[%c32, %c0_19] : memref<128x128xbf16, #tpu.memory_space<vmem>>, vector<32x128xbf16>
    %cst_20 = arith.constant dense<0.000000e+00> : vector<64x128xf32>
    %49 = tpu.matmul %47, %48, %cst_20 {dimension_numbers = #tpu.dot_dimension_numbers<[1], [0], [0], [1], [0, 0, 1, 1], [], []>} : vector<64x32xbf16>, vector<32x128xbf16>, vector<64x128xf32> -> vector<64x128xf32>
    %50 = arith.addf %28, %49 : vector<64x128xf32>
    %51 = vector.extract_strided_slice %1 {offsets = [0, 64], sizes = [64, 32], strides = [1, 1]} : vector<64x384xbf16> to vector<64x32xbf16>
    %52 = vector.extract_strided_slice %1 {offsets = [0, 192], sizes = [64, 32], strides = [1, 1]} : vector<64x384xbf16> to vector<64x32xbf16>
    %53 = vector.extract_strided_slice %1 {offsets = [0, 320], sizes = [64, 32], strides = [1, 1]} : vector<64x384xbf16> to vector<64x32xbf16>
    %cst_21 = arith.constant dense<0.000000e+00> : vector<64x64xf32>
    %54 = tpu.matmul %51, %52, %cst_21 {dimension_numbers = #tpu.dot_dimension_numbers<[1], [1], [0], [0], [0, 0, 1, 0], [], []>} : vector<64x32xbf16>, vector<64x32xbf16>, vector<64x64xf32> -> vector<64x64xf32>
    %cst_22 = arith.constant 0.176776692 : f32
    %55 = vector.broadcast %cst_22 : f32 to vector<64x64xf32>
    %56 = arith.mulf %54, %55 : vector<64x64xf32>
    %cst_23 = arith.constant dense<0xFF800000> : vector<64xf32>
    %57 = vector.multi_reduction <maximumf>, %56, %cst_23 [1] : vector<64x64xf32> to vector<64xf32>
    %58 = vector.shape_cast %57 : vector<64xf32> to vector<64x1xf32>
    %59 = vector.broadcast %58 : vector<64x1xf32> to vector<64x64xf32>
    %60 = arith.subf %56, %59 : vector<64x64xf32>
    %61 = math.exp %60 : vector<64x64xf32>
    %cst_24 = arith.constant dense<0.000000e+00> : vector<64xf32>
    %62 = vector.multi_reduction <add>, %61, %cst_24 [1] : vector<64x64xf32> to vector<64xf32>
    %63 = vector.shape_cast %62 : vector<64xf32> to vector<64x1xf32>
    %64 = tpu.reciprocal %63 {approx = true} : vector<64x1xf32> -> vector<64x1xf32>
    %65 = vector.broadcast %64 : vector<64x1xf32> to vector<64x64xf32>
    %66 = arith.mulf %61, %65 : vector<64x64xf32>
    %67 = arith.truncf %66 : vector<64x64xf32> to vector<64x64xbf16>
    %cst_25 = arith.constant dense<0.000000e+00> : vector<64x32xf32>
    %68 = tpu.matmul %67, %53, %cst_25 {dimension_numbers = #tpu.dot_dimension_numbers<[1], [0], [0], [1], [0, 0, 1, 1], [], []>} : vector<64x64xbf16>, vector<64x32xbf16>, vector<64x32xf32> -> vector<64x32xf32>
    %69 = arith.truncf %68 : vector<64x32xf32> to vector<64x32xbf16>
    %c64 = arith.constant 64 : index
    %c0_26 = arith.constant 0 : index
    %70 = vector.load %arg2[%c64, %c0_26] : memref<128x128xbf16, #tpu.memory_space<vmem>>, vector<32x128xbf16>
    %cst_27 = arith.constant dense<0.000000e+00> : vector<64x128xf32>
    %71 = tpu.matmul %69, %70, %cst_27 {dimension_numbers = #tpu.dot_dimension_numbers<[1], [0], [0], [1], [0, 0, 1, 1], [], []>} : vector<64x32xbf16>, vector<32x128xbf16>, vector<64x128xf32> -> vector<64x128xf32>
    %72 = arith.addf %50, %71 : vector<64x128xf32>
    %73 = vector.extract_strided_slice %1 {offsets = [0, 96], sizes = [64, 32], strides = [1, 1]} : vector<64x384xbf16> to vector<64x32xbf16>
    %74 = vector.extract_strided_slice %1 {offsets = [0, 224], sizes = [64, 32], strides = [1, 1]} : vector<64x384xbf16> to vector<64x32xbf16>
    %75 = vector.extract_strided_slice %1 {offsets = [0, 352], sizes = [64, 32], strides = [1, 1]} : vector<64x384xbf16> to vector<64x32xbf16>
    %cst_28 = arith.constant dense<0.000000e+00> : vector<64x64xf32>
    %76 = tpu.matmul %73, %74, %cst_28 {dimension_numbers = #tpu.dot_dimension_numbers<[1], [1], [0], [0], [0, 0, 1, 0], [], []>} : vector<64x32xbf16>, vector<64x32xbf16>, vector<64x64xf32> -> vector<64x64xf32>
    %cst_29 = arith.constant 0.176776692 : f32
    %77 = vector.broadcast %cst_29 : f32 to vector<64x64xf32>
    %78 = arith.mulf %76, %77 : vector<64x64xf32>
    %cst_30 = arith.constant dense<0xFF800000> : vector<64xf32>
    %79 = vector.multi_reduction <maximumf>, %78, %cst_30 [1] : vector<64x64xf32> to vector<64xf32>
    %80 = vector.shape_cast %79 : vector<64xf32> to vector<64x1xf32>
    %81 = vector.broadcast %80 : vector<64x1xf32> to vector<64x64xf32>
    %82 = arith.subf %78, %81 : vector<64x64xf32>
    %83 = math.exp %82 : vector<64x64xf32>
    %cst_31 = arith.constant dense<0.000000e+00> : vector<64xf32>
    %84 = vector.multi_reduction <add>, %83, %cst_31 [1] : vector<64x64xf32> to vector<64xf32>
    %85 = vector.shape_cast %84 : vector<64xf32> to vector<64x1xf32>
    %86 = tpu.reciprocal %85 {approx = true} : vector<64x1xf32> -> vector<64x1xf32>
    %87 = vector.broadcast %86 : vector<64x1xf32> to vector<64x64xf32>
    %88 = arith.mulf %83, %87 : vector<64x64xf32>
    %89 = arith.truncf %88 : vector<64x64xf32> to vector<64x64xbf16>
    %cst_32 = arith.constant dense<0.000000e+00> : vector<64x32xf32>
    %90 = tpu.matmul %89, %75, %cst_32 {dimension_numbers = #tpu.dot_dimension_numbers<[1], [0], [0], [1], [0, 0, 1, 1], [], []>} : vector<64x64xbf16>, vector<64x32xbf16>, vector<64x32xf32> -> vector<64x32xf32>
    %91 = arith.truncf %90 : vector<64x32xf32> to vector<64x32xbf16>
    %c96 = arith.constant 96 : index
    %c0_33 = arith.constant 0 : index
    %92 = vector.load %arg2[%c96, %c0_33] : memref<128x128xbf16, #tpu.memory_space<vmem>>, vector<32x128xbf16>
    %cst_34 = arith.constant dense<0.000000e+00> : vector<64x128xf32>
    %93 = tpu.matmul %91, %92, %cst_34 {dimension_numbers = #tpu.dot_dimension_numbers<[1], [0], [0], [1], [0, 0, 1, 1], [], []>} : vector<64x32xbf16>, vector<32x128xbf16>, vector<64x128xf32> -> vector<64x128xf32>
    %94 = arith.addf %72, %93 : vector<64x128xf32>
    %c0_35 = arith.constant 0 : index
    %c0_36 = arith.constant 0 : index
    %c0_37 = arith.constant 0 : index
    %95 = vector.load %arg5[%c0_35, %c0_36, %c0_37] : memref<1x64x128xf32, #tpu.memory_space<vmem>>, vector<1x64x128xf32>
    %96 = vector.shape_cast %95 : vector<1x64x128xf32> to vector<64x128xf32>
    %97 = vector.shape_cast %94 : vector<64x128xf32> to vector<1x64x128xf32>
    tpu.vector_store %arg5[%c0_35, %c0_36, %c0_37], %97 {strides = array<i32>} : memref<1x64x128xf32, #tpu.memory_space<vmem>>, vector<1x64x128xf32>,
    return
  }
  func.func @transform_0(%arg0: i32) -> (i32, i32, i32) {
    %c0_i32 = arith.constant 0 : i32
    %c0_i32_0 = arith.constant 0 : i32
    %c0_i32_1 = arith.constant 0 : i32
    return %arg0, %c0_i32, %c0_i32_0 : i32, i32, i32
  }
  func.func @transform_1(%arg0: i32) -> (i32, i32) {
    %c0_i32 = arith.constant 0 : i32
    %c0_i32_0 = arith.constant 0 : i32
    %c0_i32_1 = arith.constant 0 : i32
    return %c0_i32, %c0_i32_0 : i32, i32
  }
  func.func @transform_2(%arg0: i32) -> (i32, i32) {
    %c0_i32 = arith.constant 0 : i32
    %c0_i32_0 = arith.constant 0 : i32
    %c0_i32_1 = arith.constant 0 : i32
    return %c0_i32, %c0_i32_0 : i32, i32
  }
  func.func @transform_3(%arg0: i32) -> (i32, i32, i32) {
    %c0_i32 = arith.constant 0 : i32
    %c0_i32_0 = arith.constant 0 : i32
    %c0_i32_1 = arith.constant 0 : i32
    return %arg0, %c0_i32, %c0_i32_0 : i32, i32, i32
  }
  func.func @transform_4(%arg0: i32) -> (i32, i32, i32) {
    %c0_i32 = arith.constant 0 : i32
    %c0_i32_0 = arith.constant 0 : i32
    %c0_i32_1 = arith.constant 0 : i32
    return %arg0, %c0_i32, %c0_i32_0 : i32, i32, i32
  }
}

module attributes {stable_mosaic.version = 11 : i64} {
  func.func @_ln_matmul_kernel(%arg0: i32, %arg1: i32, %arg2: memref<64x128xf32, #tpu.memory_space<vmem>>, %arg3: memref<1x128xf32, #tpu.memory_space<vmem>>, %arg4: memref<1x128xf32, #tpu.memory_space<vmem>>, %arg5: memref<128x512xbf16, #tpu.memory_space<vmem>>, %arg6: memref<1x512xf32, #tpu.memory_space<vmem>>, %arg7: memref<64x512xbf16, #tpu.memory_space<vmem>>, %arg8: memref<64x128xbf16, #tpu.memory_space<vmem>>) attributes {dimension_semantics = [#tpu.dimension_semantics<parallel>, #tpu.dimension_semantics<arbitrary>], iteration_bounds = array<i64: 2, 1>, scalar_prefetch = 0 : i64, scratch_operands = 1 : i64, tpu.core_type = #tpu.core_type<tc>, window_params = [{transform_indices = @transform_0, window_bounds = array<i64: 64, 128>}, {pipeline_mode = #tpu.pipeline_mode<synchronous>, transform_indices = @transform_1, window_bounds = array<i64: 1, 128>}, {pipeline_mode = #tpu.pipeline_mode<synchronous>, transform_indices = @transform_2, window_bounds = array<i64: 1, 128>}, {transform_indices = @transform_3, window_bounds = array<i64: 128, 512>}, {transform_indices = @transform_4, window_bounds = array<i64: 1, 512>}, {transform_indices = @transform_5, window_bounds = array<i64: 64, 512>}]} {
    %c0_i32 = arith.constant 0 : i32
    %0 = arith.cmpi eq, %arg1, %c0_i32 : i32
    %1 = arith.extui %0 : i1 to i32
    %c0_i32_0 = arith.constant 0 : i32
    %2 = arith.cmpi ne, %1, %c0_i32_0 : i32
    scf.if %2 {
      %c0_9 = arith.constant 0 : index
      %c0_10 = arith.constant 0 : index
      %13 = vector.load %arg2[%c0_9, %c0_10] : memref<64x128xf32, #tpu.memory_space<vmem>>, vector<64x128xf32>
      %cst_11 = arith.constant dense<0.000000e+00> : vector<64xf32>
      %14 = vector.multi_reduction <add>, %13, %cst_11 [1] : vector<64x128xf32> to vector<64xf32>
      %15 = vector.shape_cast %14 : vector<64xf32> to vector<64x1xf32>
      %cst_12 = arith.constant 7.812500e-03 : f32
      %16 = vector.broadcast %cst_12 : f32 to vector<64x1xf32>
      %17 = arith.mulf %15, %16 : vector<64x1xf32>
      %18 = vector.broadcast %17 : vector<64x1xf32> to vector<64x128xf32>
      %19 = arith.subf %13, %18 : vector<64x128xf32>
      %20 = arith.mulf %19, %19 : vector<64x128xf32>
      %cst_13 = arith.constant dense<0.000000e+00> : vector<64xf32>
      %21 = vector.multi_reduction <add>, %20, %cst_13 [1] : vector<64x128xf32> to vector<64xf32>
      %22 = vector.shape_cast %21 : vector<64xf32> to vector<64x1xf32>
      %cst_14 = arith.constant 7.812500e-03 : f32
      %23 = vector.broadcast %cst_14 : f32 to vector<64x1xf32>
      %24 = arith.mulf %22, %23 : vector<64x1xf32>
      %cst_15 = arith.constant 9.99999974E-6 : f32
      %25 = vector.broadcast %cst_15 : f32 to vector<64x1xf32>
      %26 = arith.addf %24, %25 : vector<64x1xf32>
      %27 = math.rsqrt %26 : vector<64x1xf32>
      %28 = vector.broadcast %27 : vector<64x1xf32> to vector<64x128xf32>
      %29 = arith.mulf %19, %28 : vector<64x128xf32>
      %c0_16 = arith.constant 0 : index
      %c0_17 = arith.constant 0 : index
      %30 = vector.load %arg3[%c0_16, %c0_17] : memref<1x128xf32, #tpu.memory_space<vmem>>, vector<1x128xf32>
      %31 = vector.broadcast %30 : vector<1x128xf32> to vector<64x128xf32>
      %32 = arith.mulf %29, %31 : vector<64x128xf32>
      %c0_18 = arith.constant 0 : index
      %c0_19 = arith.constant 0 : index
      %33 = vector.load %arg4[%c0_18, %c0_19] : memref<1x128xf32, #tpu.memory_space<vmem>>, vector<1x128xf32>
      %34 = vector.broadcast %33 : vector<1x128xf32> to vector<64x128xf32>
      %35 = arith.addf %32, %34 : vector<64x128xf32>
      %36 = arith.truncf %35 : vector<64x128xf32> to vector<64x128xbf16>
      %c0_20 = arith.constant 0 : index
      %c0_21 = arith.constant 0 : index
      %37 = vector.load %arg8[%c0_20, %c0_21] : memref<64x128xbf16, #tpu.memory_space<vmem>>, vector<64x128xbf16>
      tpu.vector_store %arg8[%c0_20, %c0_21], %36 {strides = array<i32>} : memref<64x128xbf16, #tpu.memory_space<vmem>>, vector<64x128xbf16>,
    } else {
    }
    %c0 = arith.constant 0 : index
    %c0_1 = arith.constant 0 : index
    %3 = vector.load %arg8[%c0, %c0_1] : memref<64x128xbf16, #tpu.memory_space<vmem>>, vector<64x128xbf16>
    %c0_2 = arith.constant 0 : index
    %c0_3 = arith.constant 0 : index
    %4 = vector.load %arg5[%c0_2, %c0_3] : memref<128x512xbf16, #tpu.memory_space<vmem>>, vector<128x512xbf16>
    %cst = arith.constant dense<0.000000e+00> : vector<64x512xf32>
    %5 = tpu.matmul %3, %4, %cst {dimension_numbers = #tpu.dot_dimension_numbers<[1], [0], [0], [1], [0, 0, 1, 1], [], []>} : vector<64x128xbf16>, vector<128x512xbf16>, vector<64x512xf32> -> vector<64x512xf32>
    %c0_4 = arith.constant 0 : index
    %c0_5 = arith.constant 0 : index
    %6 = vector.load %arg6[%c0_4, %c0_5] : memref<1x512xf32, #tpu.memory_space<vmem>>, vector<1x512xf32>
    %7 = vector.broadcast %6 : vector<1x512xf32> to vector<64x512xf32>
    %8 = arith.addf %5, %7 : vector<64x512xf32>
    %cst_6 = arith.constant 0.000000e+00 : f32
    %9 = vector.broadcast %cst_6 : f32 to vector<64x512xf32>
    %10 = arith.maximumf %8, %9 : vector<64x512xf32>
    %11 = arith.truncf %10 : vector<64x512xf32> to vector<64x512xbf16>
    %c0_7 = arith.constant 0 : index
    %c0_8 = arith.constant 0 : index
    %12 = vector.load %arg7[%c0_7, %c0_8] : memref<64x512xbf16, #tpu.memory_space<vmem>>, vector<64x512xbf16>
    tpu.vector_store %arg7[%c0_7, %c0_8], %11 {strides = array<i32>} : memref<64x512xbf16, #tpu.memory_space<vmem>>, vector<64x512xbf16>,
    return
  }
  func.func @transform_0(%arg0: i32, %arg1: i32) -> (i32, i32) {
    %c0_i32 = arith.constant 0 : i32
    %c0_i32_0 = arith.constant 0 : i32
    return %arg0, %c0_i32 : i32, i32
  }
  func.func @transform_1(%arg0: i32, %arg1: i32) -> (i32, i32) {
    %c0_i32 = arith.constant 0 : i32
    %c0_i32_0 = arith.constant 0 : i32
    %c0_i32_1 = arith.constant 0 : i32
    return %c0_i32, %c0_i32_0 : i32, i32
  }
  func.func @transform_2(%arg0: i32, %arg1: i32) -> (i32, i32) {
    %c0_i32 = arith.constant 0 : i32
    %c0_i32_0 = arith.constant 0 : i32
    %c0_i32_1 = arith.constant 0 : i32
    return %c0_i32, %c0_i32_0 : i32, i32
  }
  func.func @transform_3(%arg0: i32, %arg1: i32) -> (i32, i32) {
    %c0_i32 = arith.constant 0 : i32
    %c0_i32_0 = arith.constant 0 : i32
    return %c0_i32, %arg1 : i32, i32
  }
  func.func @transform_4(%arg0: i32, %arg1: i32) -> (i32, i32) {
    %c0_i32 = arith.constant 0 : i32
    %c0_i32_0 = arith.constant 0 : i32
    return %c0_i32, %arg1 : i32, i32
  }
  func.func @transform_5(%arg0: i32, %arg1: i32) -> (i32, i32) {
    %c0_i32 = arith.constant 0 : i32
    return %arg0, %arg1 : i32, i32
  }
}

</mosaic_0001>

<llo_original>
// kernel: block_forward.7
$region0: #{block_forward.7}
  #allocation0 [shape = 'u32[]', space=smem, size = 0x4, offset = 0x4, fixed_abs, tag = 'smem constant byte address 0x4 - core index']
  #allocation1 [shape = 'u32[144,128]{1,0:T(1,128)}', space=vmem, size = 0x12000, scoped, tag = 'internal scratch']
  %s0 = inlined_call_operand.vmem [shape: bf16[128,512], index: 0, kind: input, shape index: {}]
  %s1 = inlined_call_operand.vmem [shape: bf16[512,128], index: 1, kind: input, shape index: {}]
  %s2 = inlined_call_operand.vmem [shape: f32[1,128], index: 2, kind: input, shape index: {}]
  %s3 = inlined_call_operand.vmem [shape: f32[128,128], index: 3, kind: input, shape index: {}, may-alias: {3,4}]
  %s4 = inlined_call_operand.vmem [shape: f32[128,128], index: 4, kind: output, shape index: {}, may-alias: {3,4}]
  %s5 = sld [smem:[#allocation0]]
  $region49: #{block_forward.7} parent=0
    _
  %s7 = ssub.s32 1, %s5
  %s8 = scalar_select 0, %s7, %s5
  loop: start=0, step=1, limit=4
  $region2: #{block_forward.7} parent=0 // loop_pre_header
    _
  $region3: #{block_forward.7} parent=0 // loop_header
    %s10 = sphi 0, %s14
    %p11 = scmp.ge.s32.totalorder %s10, 4
    %s17 = sphi 0, %s29
    %s18 = sphi 0, %s25
    %s19 = sphi 0, %s17
    %s20 = sphi 0, %s18
    %s21 = sphi 0, %s19
    %s22 = sphi 0, %s20
    %s32 = sphi 0, %s34
    %s35 = sphi 0, %s32
    %s36 = sphi 0, %s35
    %s52 = sphi 0, %s36
    %s58 = sphi 0, %s60
    %s61 = sphi 0, %s58
    %s62 = sphi 0, %s61
    %s78 = sphi 0, %s62
    %s84 = sphi 0, %s86
    %s87 = sphi 0, %s84
    %s88 = sphi 0, %s87
    %s104 = sphi 0, %s88
    %s112 = sphi 0, %s114
    %s115 = sphi 0, %s112
    %s116 = sphi 0, %s115
    %s132 = sphi 0, %s116
    %s140 = sphi 0, %s142
    %s143 = sphi 0, %s140
    %s144 = sphi 0, %s143
    %s160 = sphi 0, %s144
  $region4: #{block_forward.7} parent=0 // loop_header_branch
    %13 = sbr.rel (%p11) target = $region8
  $region5: #{block_forward.7} parent=0 // loop_body
    %s15 = ssub.s32 %s10, 1
    %s16 = ssub.s32 %s10, 2
    %s23 = sadd.s32 1, %s18
    %p24 = scmp.ge.s32.totalorder %s23, 1
    %s25 = scalar_select %p24, 0, %s23
    %s26 = sadd.s32 1, %s17
    %s27 = scalar_select %p24, %s26, %s17
    %p28 = scmp.ge.s32.totalorder %s27, 2
    %s29 = scalar_select %p28, 0, %s27
    %s30 = ssub.s32 %s17, %s29
    %p31 = scmp.eq.s32.totalorder %s30, 0
    %s33 = sadd.s32 %s32, 1
    %s34 = scalar_select %p31, %s32, %s33
    %p37 = pneg %p31
    %p38 = scmp.eq.s32.totalorder %s10, 1
    %p39 = por %p37, %p38
    %p40 = scmp.ne.s32.totalorder %s32, %s35
    %p41 = scmp.eq.s32.totalorder %s10, 0
    %p42 = por %p40, %p41
    %p43 = scmp.ne.s32.totalorder %s32, %s35
    %p44 = scmp.eq.s32.totalorder %s15, 1
    %p45 = por %p43, %p44
    %p46 = scmp.ne.s32.totalorder %s35, %s36
    %p47 = scmp.eq.s32.totalorder %s15, 0
    %p48 = por %p46, %p47
    %p49 = scmp.ne.s32.totalorder %s35, %s36
    %p50 = scmp.eq.s32.totalorder %s16, 1
    %p51 = por %p49, %p50
    %p53 = scmp.ne.s32.totalorder %s36, %s52
    %p54 = scmp.eq.s32.totalorder %s16, 0
    %p55 = por %p53, %p54
    %s56 = ssub.s32 %s18, %s25
    %p57 = scmp.eq.s32.totalorder %s56, 0
    %s59 = sadd.s32 %s58, 1
    %s60 = scalar_select %p57, %s58, %s59
    %p63 = pneg %p57
    %p64 = scmp.eq.s32.totalorder %s10, 1
    %p65 = por %p63, %p64
    %p66 = scmp.ne.s32.totalorder %s58, %s61
    %p67 = scmp.eq.s32.totalorder %s10, 0
    %p68 = por %p66, %p67
    %p69 = scmp.ne.s32.totalorder %s58, %s61
    %p70 = scmp.eq.s32.totalorder %s15, 1
    %p71 = por %p69, %p70
    %p72 = scmp.ne.s32.totalorder %s61, %s62
    %p73 = scmp.eq.s32.totalorder %s15, 0
    %p74 = por %p72, %p73
    %p75 = scmp.ne.s32.totalorder %s61, %s62
    %p76 = scmp.eq.s32.totalorder %s16, 1
    %p77 = por %p75, %p76
    %p79 = scmp.ne.s32.totalorder %s62, %s78
    %p80 = scmp.eq.s32.totalorder %s16, 0
    %p81 = por %p79, %p80
    %s82 = ssub.s32 %s18, %s25
    %p83 = scmp.eq.s32.totalorder %s82, 0
    %s85 = sadd.s32 %s84, 1
    %s86 = scalar_select %p83, %s84, %s85
    %p89 = pneg %p83
    %p90 = scmp.eq.s32.totalorder %s10, 1
    %p91 = por %p89, %p90
    %p92 = scmp.ne.s32.totalorder %s84, %s87
    %p93 = scmp.eq.s32.totalorder %s10, 0
    %p94 = por %p92, %p93
    %p95 = scmp.ne.s32.totalorder %s84, %s87
    %p96 = scmp.eq.s32.totalorder %s15, 1
    %p97 = por %p95, %p96
    %p98 = scmp.ne.s32.totalorder %s87, %s88
    %p99 = scmp.eq.s32.totalorder %s15, 0
    %p100 = por %p98, %p99
    %p101 = scmp.ne.s32.totalorder %s87, %s88
    %p102 = scmp.eq.s32.totalorder %s16, 1
    %p103 = por %p101, %p102
    %p105 = scmp.ne.s32.totalorder %s88, %s104
    %p106 = scmp.eq.s32.totalorder %s16, 0
    %p107 = por %p105, %p106
    %s108 = ssub.s32 %s17, %s29
    %s109 = ssub.s32 %s18, %s25
    %s110 = sor.u32 %s108, %s109
    %p111 = scmp.eq.s32.totalorder %s110, 0
    %s113 = sadd.s32 %s112, 1
    %s114 = scalar_select %p111, %s112, %s113
    %p117 = pneg %p111
    %p118 = scmp.eq.s32.totalorder %s10, 1
    %p119 = por %p117, %p118
    %p120 = scmp.ne.s32.totalorder %s112, %s115
    %p121 = scmp.eq.s32.totalorder %s10, 0
    %p122 = por %p120, %p121
    %p123 = scmp.ne.s32.totalorder %s112, %s115
    %p124 = scmp.eq.s32.totalorder %s15, 1
    %p125 = por %p123, %p124
    %p126 = scmp.ne.s32.totalorder %s115, %s116
    %p127 = scmp.eq.s32.totalorder %s15, 0
    %p128 = por %p126, %p127
    %p129 = scmp.ne.s32.totalorder %s115, %s116
    %p130 = scmp.eq.s32.totalorder %s16, 1
    %p131 = por %p129, %p130
    %p133 = scmp.ne.s32.totalorder %s116, %s132
    %p134 = scmp.eq.s32.totalorder %s16, 0
    %p135 = por %p133, %p134
    %s136 = ssub.s32 %s17, %s29
    %s137 = ssub.s32 %s18, %s25
    %s138 = sor.u32 %s136, %s137
    %p139 = scmp.eq.s32.totalorder %s138, 0
    %s141 = sadd.s32 %s140, 1
    %s142 = scalar_select %p139, %s140, %s141
    %p145 = pneg %p139
    %p146 = scmp.eq.s32.totalorder %s10, 1
    %p147 = por %p145, %p146
    %p148 = scmp.ne.s32.totalorder %s140, %s143
    %p149 = scmp.eq.s32.totalorder %s10, 0
    %p150 = por %p148, %p149
    %p151 = scmp.ne.s32.totalorder %s140, %s143
    %p152 = scmp.eq.s32.totalorder %s15, 1
    %p153 = por %p151, %p152
    %p154 = scmp.ne.s32.totalorder %s143, %s144
    %p155 = scmp.eq.s32.totalorder %s15, 0
    %p156 = por %p154, %p155
    %p157 = scmp.ne.s32.totalorder %s143, %s144
    %p158 = scmp.eq.s32.totalorder %s16, 1
    %p159 = por %p157, %p158
    %p161 = scmp.ne.s32.totalorder %s144, %s160
    %p162 = scmp.eq.s32.totalorder %s16, 0
    %p163 = por %p161, %p162
    %p164 = scmp.le.s32.totalorder 1, %s10
    %p165 = scmp.lt.s32.totalorder %s10, 3
    %p166 = pnand %p164, %p165
    %p167 = pneg %p166
    // Predicated region
    $region9: #{block_forward.7} parent=5 // pred_check
      _
    $region10: #{block_forward.7} parent=5 // pred_check_branch
      %169 = sbr.rel (%p166) target = $region12
    $region11: #{block_forward.7} parent=5 // pred_region
      %s170 = ssub.s32 %s10, 1
      // Predicated region
      $region13: #{block_forward.7} parent=11 // pred_check
        %p171 = pneg %p74
      $region14: #{block_forward.7} parent=11 // pred_check_branch
        %173 = sbr.rel (%p171) target = $region16
      $region15: #{block_forward.7} parent=11 // pred_region
        %p174 = scmp.lt.s32.totalorder %s20, 0
        %s175 = scalar_select %p174, %s20, 0
        %s176 = smul.addr %s175, 4
        %s177 = scalar_lea.vmem %s1, %s176
      $region16: #{block_forward.7} parent=11 // pred_fallthru
        _
      // Predicated region
      $region17: #{block_forward.7} parent=11 // pred_check
        %p178 = pneg %p100
      $region18: #{block_forward.7} parent=11 // pred_check_branch
        %180 = sbr.rel (%p178) target = $region20
      $region19: #{block_forward.7} parent=11 // pred_region
        %p181 = scmp.lt.s32.totalorder %s20, 0
        %s182 = scalar_select %p181, %s20, 0
        %s183 = scalar_lea.vmem %s2, %s182
      $region20: #{block_forward.7} parent=11 // pred_fallthru
        _
    $region12: #{block_forward.7} parent=5 // pred_fallthru
      _
    %p184 = scmp.lt.s32.totalorder %s10, 2
    // Predicated region
    $region21: #{block_forward.7} parent=5 // pred_check
      %p185 = pneg %p184
    $region22: #{block_forward.7} parent=5 // pred_check_branch
      %187 = sbr.rel (%p185) target = $region24
    $region23: #{block_forward.7} parent=5 // pred_region
      // Predicated region
      $region25: #{block_forward.7} parent=23 // pred_check
        %p188 = pneg %p42
      $region26: #{block_forward.7} parent=23 // pred_check_branch
        %190 = sbr.rel (%p188) target = $region28
      $region27: #{block_forward.7} parent=23 // pred_region
        %s191 = smul.u32 8, %s17
        %p192 = scmp.lt.s32.totalorder %s191, 15
        %s193 = scalar_select %p192, %s191, 15
        %s194 = smul.addr %s193, 4
        %s195 = smul.addr %s194, 4
        %s196 = scalar_lea.vmem %s0, %s195
        %s197 = smul.u32 8, %s17
      $region28: #{block_forward.7} parent=23 // pred_fallthru
        _
      // Predicated region
      $region29: #{block_forward.7} parent=23 // pred_check
        %p198 = pneg %p122
      $region30: #{block_forward.7} parent=23 // pred_check_branch
        %200 = sbr.rel (%p198) target = $region32
      $region31: #{block_forward.7} parent=23 // pred_region
        %s201 = smul.u32 8, %s17
        %p202 = scmp.lt.s32.totalorder %s201, 15
        %s203 = scalar_select %p202, %s201, 15
        %p204 = scmp.lt.s32.totalorder %s18, 0
        %s205 = scalar_select %p204, %s18, 0
        %s206 = sadd.s32 %s205, %s203
        %s207 = smul.addr %s206, 8
        %s208 = scalar_lea.vmem %s3, %s207
        %s209 = smul.u32 8, %s17
      $region32: #{block_forward.7} parent=23 // pred_fallthru
        _
    $region24: #{block_forward.7} parent=5 // pred_fallthru
      _
    %p210 = scmp.le.s32.totalorder 1, %s10
    %p211 = scmp.lt.s32.totalorder %s10, 3
    %p212 = pnand %p210, %p211
    %p213 = pneg %p212
    // Predicated region
    $region33: #{block_forward.7} parent=5 // pred_check
      _
    $region34: #{block_forward.7} parent=5 // pred_check_branch
      %215 = sbr.rel (%p212) target = $region36
    $region35: #{block_forward.7} parent=5 // pred_region
      %s216 = ssub.s32 %s10, 1
      %s217 = smul.u32 8, %s19
      %p218 = scmp.lt.s32.totalorder %s217, 15
      %s219 = scalar_select %p218, %s217, 15
      %s220 = smul.addr %s219, 4
      %s221 = smul.addr %s220, 4
      %s222 = scalar_lea.vmem %s0, %s221
      %p223 = pneg %p48
      %p224 = pneg %p45
      %p225 = scmp.lt.s32.totalorder %s20, 0
      %s226 = scalar_select %p225, %s20, 0
      %s227 = smul.addr %s226, 4
      %s228 = scalar_lea.vmem %s1, %s227
      %p229 = pneg %p74
      %p230 = pneg %p71
      %p231 = scmp.lt.s32.totalorder %s20, 0
      %s232 = scalar_select %p231, %s20, 0
      %s233 = scalar_lea.vmem %s2, %s232
      %p234 = pneg %p100
      %p235 = pneg %p97
      %s236 = smul.u32 8, %s19
      %p237 = scmp.lt.s32.totalorder %s236, 15
      %s238 = scalar_select %p237, %s236, 15
      %p239 = scmp.lt.s32.totalorder %s20, 0
      %s240 = scalar_select %p239, %s20, 0
      %s241 = sadd.s32 %s240, %s238
      %s242 = smul.addr %s241, 8
      %s243 = scalar_lea.vmem %s3, %s242
      %p244 = pneg %p128
      %p245 = pneg %p125
      %p246 = pneg %p156
      %p247 = pneg %p153
      %s248 = smul.u32 8, %s19
      %p249 = scmp.lt.s32.totalorder %s248, 15
      %s250 = scalar_select %p249, %s248, 15
      %p251 = scmp.lt.s32.totalorder %s20, 0
      %s252 = scalar_select %p251, %s20, 0
      %s253 = sadd.s32 %s252, %s250
      %s254 = smul.addr %s253, 8
      %s255 = scalar_lea.vmem %s4, %s254
      %s256 = smul.u32 8, %s19
      %p257 = scmp.lt.s32.totalorder %s256, 15
      %s258 = scalar_select %p257, %s256, 15
      %s259 = smul.addr %s258, 4
      %s260 = smul.addr %s259, 4
      %s261 = scalar_lea.vmem %s0, %s260
      %s262 = smul.u32 8, %s19
      %p263 = scmp.lt.s32.totalorder %s20, 0
      %s264 = scalar_select %p263, %s20, 0
      %s265 = smul.addr %s264, 4
      %s266 = scalar_lea.vmem %s1, %s265
      %p267 = scmp.lt.s32.totalorder %s20, 0
      %s268 = scalar_select %p267, %s20, 0
      %s269 = scalar_lea.vmem %s2, %s268
      %s270 = smul.u32 8, %s19
      %p271 = scmp.lt.s32.totalorder %s270, 15
      %s272 = scalar_select %p271, %s270, 15
      %p273 = scmp.lt.s32.totalorder %s20, 0
      %s274 = scalar_select %p273, %s20, 0
      %s275 = sadd.s32 %s274, %s272
      %s276 = smul.addr %s275, 8
      %s277 = scalar_lea.vmem %s3, %s276
      %s278 = smul.u32 8, %s19
      %s279 = smul.u32 8, %s19
      %p280 = scmp.lt.s32.totalorder %s279, 15
      %s281 = scalar_select %p280, %s279, 15
      %p282 = scmp.lt.s32.totalorder %s20, 0
      %s283 = scalar_select %p282, %s20, 0
      %s284 = sadd.s32 %s283, %s281
      %s285 = smul.addr %s284, 8
      %s286 = scalar_lea.vmem %s4, %s285
      %s287 = smul.u32 8, %s19
      %v289 = vld [vmem:[%s261] sm:$0xff]
      %v290 = vld [vmem:[%s261 + $0x8] sm:$0xff]
      %v291 = vld [vmem:[%s261 + $0x10] sm:$0xff]
      %v292 = vld [vmem:[%s261 + $0x18] sm:$0xff]
      %v293 = vld [vmem:[%s261 + $0x20] sm:$0xff]
      %v294 = vld [vmem:[%s261 + $0x28] sm:$0xff]
      %v295 = vld [vmem:[%s261 + $0x30] sm:$0xff]
      %v296 = vld [vmem:[%s261 + $0x38] sm:$0xff]
      %v297 = vld [vmem:[%s261 + $0x40] sm:$0xff]
      %v298 = vld [vmem:[%s261 + $0x48] sm:$0xff]
      %v299 = vld [vmem:[%s261 + $0x50] sm:$0xff]
      %v300 = vld [vmem:[%s261 + $0x58] sm:$0xff]
      %v301 = vld [vmem:[%s261 + $0x60] sm:$0xff]
      %v302 = vld [vmem:[%s261 + $0x68] sm:$0xff]
      %v303 = vld [vmem:[%s261 + $0x70] sm:$0xff]
      %v304 = vld [vmem:[%s261 + $0x78] sm:$0xff]
      %v305 = vld [vmem:[%s266] sm:$0xf]
      %v306 = vld [vmem:[%s266 + $0x4] sm:$0xf]
      %v307 = vld [vmem:[%s266 + $0x8] sm:$0xf]
      %v308 = vld [vmem:[%s266 + $0xc] sm:$0xf]
      %v309 = vld [vmem:[%s266 + $0x10] sm:$0xf]
      %v310 = vld [vmem:[%s266 + $0x14] sm:$0xf]
      %v311 = vld [vmem:[%s266 + $0x18] sm:$0xf]
      %v312 = vld [vmem:[%s266 + $0x1c] sm:$0xf]
      %v313 = vld [vmem:[%s266 + $0x20] sm:$0xf]
      %v314 = vld [vmem:[%s266 + $0x24] sm:$0xf]
      %v315 = vld [vmem:[%s266 + $0x28] sm:$0xf]
      %v316 = vld [vmem:[%s266 + $0x2c] sm:$0xf]
      %v317 = vld [vmem:[%s266 + $0x30] sm:$0xf]
      %v318 = vld [vmem:[%s266 + $0x34] sm:$0xf]
      %v319 = vld [vmem:[%s266 + $0x38] sm:$0xf]
      %v320 = vld [vmem:[%s266 + $0x3c] sm:$0xf]
      %v321 = vld [vmem:[%s266 + $0x40] sm:$0xf]
      %v322 = vld [vmem:[%s266 + $0x44] sm:$0xf]
      %v323 = vld [vmem:[%s266 + $0x48] sm:$0xf]
      %v324 = vld [vmem:[%s266 + $0x4c] sm:$0xf]
      %v325 = vld [vmem:[%s266 + $0x50] sm:$0xf]
      %v326 = vld [vmem:[%s266 + $0x54] sm:$0xf]
      %v327 = vld [vmem:[%s266 + $0x58] sm:$0xf]
      %v328 = vld [vmem:[%s266 + $0x5c] sm:$0xf]
      %v329 = vld [vmem:[%s266 + $0x60] sm:$0xf]
      %v330 = vld [vmem:[%s266 + $0x64] sm:$0xf]
      %v331 = vld [vmem:[%s266 + $0x68] sm:$0xf]
      %v332 = vld [vmem:[%s266 + $0x6c] sm:$0xf]
      %v333 = vld [vmem:[%s266 + $0x70] sm:$0xf]
      %v334 = vld [vmem:[%s266 + $0x74] sm:$0xf]
      %v335 = vld [vmem:[%s266 + $0x78] sm:$0xf]
      %v336 = vld [vmem:[%s266 + $0x7c] sm:$0xf]
      %v337 = vld [vmem:[%s266 + $0x80] sm:$0xf]
      %v338 = vld [vmem:[%s266 + $0x84] sm:$0xf]
      %v339 = vld [vmem:[%s266 + $0x88] sm:$0xf]
      %v340 = vld [vmem:[%s266 + $0x8c] sm:$0xf]
      %v341 = vld [vmem:[%s266 + $0x90] sm:$0xf]
      %v342 = vld [vmem:[%s266 + $0x94] sm:$0xf]
      %v343 = vld [vmem:[%s266 + $0x98] sm:$0xf]
      %v344 = vld [vmem:[%s266 + $0x9c] sm:$0xf]
      %v345 = vld [vmem:[%s266 + $0xa0] sm:$0xf]
      %v346 = vld [vmem:[%s266 + $0xa4] sm:$0xf]
      %v347 = vld [vmem:[%s266 + $0xa8] sm:$0xf]
      %v348 = vld [vmem:[%s266 + $0xac] sm:$0xf]
      %v349 = vld [vmem:[%s266 + $0xb0] sm:$0xf]
      %v350 = vld [vmem:[%s266 + $0xb4] sm:$0xf]
      %v351 = vld [vmem:[%s266 + $0xb8] sm:$0xf]
      %v352 = vld [vmem:[%s266 + $0xbc] sm:$0xf]
      %v353 = vld [vmem:[%s266 + $0xc0] sm:$0xf]
      %v354 = vld [vmem:[%s266 + $0xc4] sm:$0xf]
      %v355 = vld [vmem:[%s266 + $0xc8] sm:$0xf]
      %v356 = vld [vmem:[%s266 + $0xcc] sm:$0xf]
      %v357 = vld [vmem:[%s266 + $0xd0] sm:$0xf]
      %v358 = vld [vmem:[%s266 + $0xd4] sm:$0xf]
      %v359 = vld [vmem:[%s266 + $0xd8] sm:$0xf]
      %v360 = vld [vmem:[%s266 + $0xdc] sm:$0xf]
      %v361 = vld [vmem:[%s266 + $0xe0] sm:$0xf]
      %v362 = vld [vmem:[%s266 + $0xe4] sm:$0xf]
      %v363 = vld [vmem:[%s266 + $0xe8] sm:$0xf]
      %v364 = vld [vmem:[%s266 + $0xec] sm:$0xf]
      %v365 = vld [vmem:[%s266 + $0xf0] sm:$0xf]
      %v366 = vld [vmem:[%s266 + $0xf4] sm:$0xf]
      %v367 = vld [vmem:[%s266 + $0xf8] sm:$0xf]
      %v368 = vld [vmem:[%s266 + $0xfc] sm:$0xf]
      %v369 = vld [vmem:[%s269] sm:$0x1]
      %v371 = vlaneseq
      %v372 = vshrl.u32 %v371, 7
      %v373 = vsub.s32 0, %v372
      %v374 = vrot.slane %v369, %v373
      %v392 = vunpack.c.l.b16 %v289
      %v393 = vunpack.c.h.b16 %v289
      %v394 = vunpack.c.l.b16 %v290
      %v395 = vunpack.c.h.b16 %v290
      %v396 = vunpack.c.l.b16 %v291
      %v397 = vunpack.c.h.b16 %v291
      %v398 = vunpack.c.l.b16 %v292
      %v399 = vunpack.c.h.b16 %v292
      %v400 = vunpack.c.l.b16 %v293
      %v401 = vunpack.c.h.b16 %v293
      %v402 = vunpack.c.l.b16 %v294
      %v403 = vunpack.c.h.b16 %v294
      %v404 = vunpack.c.l.b16 %v295
      %v405 = vunpack.c.h.b16 %v295
      %v406 = vunpack.c.l.b16 %v296
      %v407 = vunpack.c.h.b16 %v296
      %v408 = vunpack.c.l.b16 %v297
      %v409 = vunpack.c.h.b16 %v297
      %v410 = vunpack.c.l.b16 %v298
      %v411 = vunpack.c.h.b16 %v298
      %v412 = vunpack.c.l.b16 %v299
      %v413 = vunpack.c.h.b16 %v299
      %v414 = vunpack.c.l.b16 %v300
      %v415 = vunpack.c.h.b16 %v300
      %v416 = vunpack.c.l.b16 %v301
      %v417 = vunpack.c.h.b16 %v301
      %v418 = vunpack.c.l.b16 %v302
      %v419 = vunpack.c.h.b16 %v302
      %v420 = vunpack.c.l.b16 %v303
      %v421 = vunpack.c.h.b16 %v303
      %v422 = vunpack.c.l.b16 %v304
      %v423 = vunpack.c.h.b16 %v304
      %v424 = vpack.c.b16 %v396, %v392
      %v425 = vpack.c.b16 %v397, %v393
      %v426 = vpack.c.b16 %v398, %v394
      %v427 = vpack.c.b16 %v399, %v395
      %v428 = vpack.c.b16 %v404, %v400
      %v429 = vpack.c.b16 %v405, %v401
      %v430 = vpack.c.b16 %v406, %v402
      %v431 = vpack.c.b16 %v407, %v403
      %v432 = vpack.c.b16 %v412, %v408
      %v433 = vpack.c.b16 %v413, %v409
      %v434 = vpack.c.b16 %v414, %v410
      %v435 = vpack.c.b16 %v415, %v411
      %v436 = vpack.c.b16 %v420, %v416
      %v437 = vpack.c.b16 %v421, %v417
      %v438 = vpack.c.b16 %v422, %v418
      %v439 = vpack.c.b16 %v423, %v419
      %v520 = vunpack.c.l.b16 %v305
      %v521 = vunpack.c.l.b16 %v306
      %v522 = vunpack.c.l.b16 %v307
      %v523 = vunpack.c.l.b16 %v308
      %v524 = vunpack.c.l.b16 %v309
      %v525 = vunpack.c.l.b16 %v310
      %v526 = vunpack.c.l.b16 %v311
      %v527 = vunpack.c.l.b16 %v312
      %v528 = vunpack.c.l.b16 %v313
      %v529 = vunpack.c.l.b16 %v314
      %v530 = vunpack.c.l.b16 %v315
      %v531 = vunpack.c.l.b16 %v316
      %v532 = vunpack.c.l.b16 %v317
      %v533 = vunpack.c.l.b16 %v318
      %v534 = vunpack.c.l.b16 %v319
      %v535 = vunpack.c.l.b16 %v320
      %v536 = vunpack.c.l.b16 %v321
      %v537 = vunpack.c.l.b16 %v322
      %v538 = vunpack.c.l.b16 %v323
      %v539 = vunpack.c.l.b16 %v324
      %v540 = vunpack.c.l.b16 %v325
      %v541 = vunpack.c.l.b16 %v326
      %v542 = vunpack.c.l.b16 %v327
      %v543 = vunpack.c.l.b16 %v328
      %v544 = vunpack.c.l.b16 %v329
      %v545 = vunpack.c.l.b16 %v330
      %v546 = vunpack.c.l.b16 %v331
      %v547 = vunpack.c.l.b16 %v332
      %v548 = vunpack.c.l.b16 %v333
      %v549 = vunpack.c.l.b16 %v334
      %v550 = vunpack.c.l.b16 %v335
      %v551 = vunpack.c.l.b16 %v336
      %v552 = vunpack.c.l.b16 %v337
      %v553 = vunpack.c.l.b16 %v338
      %v554 = vunpack.c.l.b16 %v339
      %v555 = vunpack.c.l.b16 %v340
      %v556 = vunpack.c.l.b16 %v341
      %v557 = vunpack.c.l.b16 %v342
      %v558 = vunpack.c.l.b16 %v343
      %v559 = vunpack.c.l.b16 %v344
      %v560 = vunpack.c.l.b16 %v345
      %v561 = vunpack.c.l.b16 %v346
      %v562 = vunpack.c.l.b16 %v347
      %v563 = vunpack.c.l.b16 %v348
      %v564 = vunpack.c.l.b16 %v349
      %v565 = vunpack.c.l.b16 %v350
      %v566 = vunpack.c.l.b16 %v351
      %v567 = vunpack.c.l.b16 %v352
      %v568 = vunpack.c.l.b16 %v353
      %v569 = vunpack.c.l.b16 %v354
      %v570 = vunpack.c.l.b16 %v355
      %v571 = vunpack.c.l.b16 %v356
      %v572 = vunpack.c.l.b16 %v357
      %v573 = vunpack.c.l.b16 %v358
      %v574 = vunpack.c.l.b16 %v359
      %v575 = vunpack.c.l.b16 %v360
      %v576 = vunpack.c.l.b16 %v361
      %v577 = vunpack.c.l.b16 %v362
      %v578 = vunpack.c.l.b16 %v363
      %v579 = vunpack.c.l.b16 %v364
      %v580 = vunpack.c.l.b16 %v365
      %v581 = vunpack.c.l.b16 %v366
      %v582 = vunpack.c.l.b16 %v367
      %v583 = vunpack.c.l.b16 %v368
      %v584 = vpack.c.b16 %v521, %v520
      %v585 = vpack.c.b16 %v523, %v522
      %v586 = vpack.c.b16 %v525, %v524
      %v587 = vpack.c.b16 %v527, %v526
      %v588 = vpack.c.b16 %v529, %v528
      %v589 = vpack.c.b16 %v531, %v530
      %v590 = vpack.c.b16 %v533, %v532
      %v591 = vpack.c.b16 %v535, %v534
      %v592 = vpack.c.b16 %v537, %v536
      %v593 = vpack.c.b16 %v539, %v538
      %v594 = vpack.c.b16 %v541, %v540
      %v595 = vpack.c.b16 %v543, %v542
      %v596 = vpack.c.b16 %v545, %v544
      %v597 = vpack.c.b16 %v547, %v546
      %v598 = vpack.c.b16 %v549, %v548
      %v599 = vpack.c.b16 %v551, %v550
      %v600 = vpack.c.b16 %v553, %v552
      %v601 = vpack.c.b16 %v555, %v554
      %v602 = vpack.c.b16 %v557, %v556
      %v603 = vpack.c.b16 %v559, %v558
      %v604 = vpack.c.b16 %v561, %v560
      %v605 = vpack.c.b16 %v563, %v562
      %v606 = vpack.c.b16 %v565, %v564
      %v607 = vpack.c.b16 %v567, %v566
      %v608 = vpack.c.b16 %v569, %v568
      %v609 = vpack.c.b16 %v571, %v570
      %v610 = vpack.c.b16 %v573, %v572
      %v611 = vpack.c.b16 %v575, %v574
      %v612 = vpack.c.b16 %v577, %v576
      %v613 = vpack.c.b16 %v579, %v578
      %v614 = vpack.c.b16 %v581, %v580
      %v615 = vpack.c.b16 %v583, %v582
      %648 = vmatprep.subr.bf16.mxu0 0
      %649 = vmatpush1.bf16.msra.mxu0 %v591
      %650 = vmatprep.subr.bf16.mxu0 0
      %651 = vmatpush1.bf16.msra.mxu0 %v590
      %652 = vmatprep.subr.bf16.mxu0 0
      %653 = vmatpush1.bf16.msra.mxu0 %v589
      %654 = vmatprep.subr.bf16.mxu0 0
      %655 = vmatpush1.bf16.msra.mxu0 %v588
      %656 = vmatprep.subr.bf16.mxu0 0
      %657 = vmatpush1.bf16.msra.mxu0 %v587
      %658 = vmatprep.subr.bf16.mxu0 0
      %659 = vmatpush1.bf16.msra.mxu0 %v586
      %660 = vmatprep.subr.bf16.mxu0 0
      %661 = vmatpush1.bf16.msra.mxu0 %v585
      %662 = vmatprep.subr.bf16.mxu0 0
      %663 = vmatpush1.bf16.msra.mxu0 %v584
      %664 = vmatprep.subr.bf16.mxu0 0
      %665 = vmatpush2.bf16.msra.mxu0 %v599
      %666 = vmatprep.subr.bf16.mxu0 0
      %667 = vmatpush2.bf16.msra.mxu0 %v598
      %668 = vmatprep.subr.bf16.mxu0 0
      %669 = vmatpush2.bf16.msra.mxu0 %v597
      %670 = vmatprep.subr.bf16.mxu0 0
      %671 = vmatpush2.bf16.msra.mxu0 %v596
      %672 = vmatprep.subr.bf16.mxu0 0
      %673 = vmatpush2.bf16.msra.mxu0 %v595
      %674 = vmatprep.subr.bf16.mxu0 0
      %675 = vmatpush2.bf16.msra.mxu0 %v594
      %676 = vmatprep.subr.bf16.mxu0 0
      %677 = vmatpush2.bf16.msra.mxu0 %v593
      %678 = vmatprep.subr.bf16.mxu0 0
      %679 = vmatpush2.bf16.msra.mxu0 %v592
      %680 = vmatprep.mubr.bf16.mxu0 %v425
      %681 = vmatmul.mubr.bf16.gmra.mxu0 %v424
      %v682 = vpop.f32.mrf.mxu0
      %v683 = vadd.f32 %v374, %v682
      %v684 = vpop.f32.mrf.mxu0
      %v685 = vpop.f32.mrf.mxu0
      %v686 = vadd.f32 %v374, %v685
      %v687 = vpop.f32.mrf.mxu0
      %688 = vmatprep.mubr.bf16.mxu0 %v429
      %689 = vmatmul.mubr.bf16.gmra.mxu0 %v428
      %v690 = vpop.f32.mrf.mxu0
      %v691 = vadd.f32 %v374, %v690
      %v692 = vpop.f32.mrf.mxu0
      %v693 = vpop.f32.mrf.mxu0
      %v694 = vadd.f32 %v374, %v693
      %v695 = vpop.f32.mrf.mxu0
      %696 = vmatprep.mubr.bf16.mxu0 %v433
      %697 = vmatmul.mubr.bf16.gmra.mxu0 %v432
      %v698 = vpop.f32.mrf.mxu0
      %v699 = vadd.f32 %v374, %v698
      %v700 = vpop.f32.mrf.mxu0
      %v701 = vpop.f32.mrf.mxu0
      %v702 = vadd.f32 %v374, %v701
      %v703 = vpop.f32.mrf.mxu0
      %704 = vmatprep.mubr.bf16.mxu0 %v437
      %705 = vmatmul.mubr.bf16.gmra.mxu0 %v436
      %v706 = vpop.f32.mrf.mxu0
      %v707 = vadd.f32 %v374, %v706
      %v708 = vpop.f32.mrf.mxu0
      %v709 = vpop.f32.mrf.mxu0
      %v710 = vadd.f32 %v374, %v709
      %v711 = vpop.f32.mrf.mxu0
      %712 = vdwg.mxu0
      %713 = vmatprep.subr.bf16.mxu0 0
      %714 = vmatpush1.bf16.msra.mxu0 %v607
      %715 = vmatprep.subr.bf16.mxu0 0
      %716 = vmatpush1.bf16.msra.mxu0 %v606
      %717 = vmatprep.subr.bf16.mxu0 0
      %718 = vmatpush1.bf16.msra.mxu0 %v605
      %719 = vmatprep.subr.bf16.mxu0 0
      %720 = vmatpush1.bf16.msra.mxu0 %v604
      %721 = vmatprep.subr.bf16.mxu0 0
      %722 = vmatpush1.bf16.msra.mxu0 %v603
      %723 = vmatprep.subr.bf16.mxu0 0
      %724 = vmatpush1.bf16.msra.mxu0 %v602
      %725 = vmatprep.subr.bf16.mxu0 0
      %726 = vmatpush1.bf16.msra.mxu0 %v601
      %727 = vmatprep.subr.bf16.mxu0 0
      %728 = vmatpush1.bf16.msra.mxu0 %v600
      %729 = vmatprep.subr.bf16.mxu0 0
      %730 = vmatpush2.bf16.msra.mxu0 %v615
      %731 = vmatprep.subr.bf16.mxu0 0
      %732 = vmatpush2.bf16.msra.mxu0 %v614
      %733 = vmatprep.subr.bf16.mxu0 0
      %734 = vmatpush2.bf16.msra.mxu0 %v613
      %735 = vmatprep.subr.bf16.mxu0 0
      %736 = vmatpush2.bf16.msra.mxu0 %v612
      %737 = vmatprep.subr.bf16.mxu0 0
      %738 = vmatpush2.bf16.msra.mxu0 %v611
      %739 = vmatprep.subr.bf16.mxu0 0
      %740 = vmatpush2.bf16.msra.mxu0 %v610
      %741 = vmatprep.subr.bf16.mxu0 0
      %742 = vmatpush2.bf16.msra.mxu0 %v609
      %743 = vmatprep.subr.bf16.mxu0 0
      %744 = vmatpush2.bf16.msra.mxu0 %v608
      %745 = vmatprep.mubr.bf16.mxu0 %v427
      %746 = vmatmul.mubr.bf16.gmra.mxu0 %v426
      %v747 = vpop.f32.mrf.mxu0
      %v748 = vadd.f32 %v683, %v747
      %v749 = vpop.f32.mrf.mxu0
      %v750 = vpop.f32.mrf.mxu0
      %v751 = vadd.f32 %v686, %v750
      %v752 = vpop.f32.mrf.mxu0
      %753 = vmatprep.mubr.bf16.mxu0 %v431
      %754 = vmatmul.mubr.bf16.gmra.mxu0 %v430
      %v755 = vpop.f32.mrf.mxu0
      %v756 = vadd.f32 %v691, %v755
      %v757 = vpop.f32.mrf.mxu0
      %v758 = vpop.f32.mrf.mxu0
      %v759 = vadd.f32 %v694, %v758
      %v760 = vpop.f32.mrf.mxu0
      %761 = vmatprep.mubr.bf16.mxu0 %v435
      %762 = vmatmul.mubr.bf16.gmra.mxu0 %v434
      %v763 = vpop.f32.mrf.mxu0
      %v764 = vadd.f32 %v699, %v763
      %v765 = vpop.f32.mrf.mxu0
      %v766 = vpop.f32.mrf.mxu0
      %v767 = vadd.f32 %v702, %v766
      %v768 = vpop.f32.mrf.mxu0
      %769 = vmatprep.mubr.bf16.mxu0 %v439
      %770 = vmatmul.mubr.bf16.gmra.mxu0 %v438
      %v771 = vpop.f32.mrf.mxu0
      %v772 = vadd.f32 %v707, %v771
      %v773 = vpop.f32.mrf.mxu0
      %v774 = vpop.f32.mrf.mxu0
      %v775 = vadd.f32 %v710, %v774
      %v776 = vpop.f32.mrf.mxu0
      %777 = vdwg.mxu0
      %v778 = vld [vmem:[%s277] sm:$0xff]
      %v779 = vld [vmem:[%s277 + $0x8] sm:$0xff]
      %v780 = vld [vmem:[%s277 + $0x10] sm:$0xff]
      %v781 = vld [vmem:[%s277 + $0x18] sm:$0xff]
      %v782 = vld [vmem:[%s277 + $0x20] sm:$0xff]
      %v783 = vld [vmem:[%s277 + $0x28] sm:$0xff]
      %v784 = vld [vmem:[%s277 + $0x30] sm:$0xff]
      %v785 = vld [vmem:[%s277 + $0x38] sm:$0xff]
      %v786 = vadd.f32 %v748, %v778
      %v787 = vadd.f32 %v751, %v779
      %v788 = vadd.f32 %v756, %v780
      %v789 = vadd.f32 %v759, %v781
      %v790 = vadd.f32 %v764, %v782
      %v791 = vadd.f32 %v767, %v783
      %v792 = vadd.f32 %v772, %v784
      %v793 = vadd.f32 %v775, %v785
      %794 = vst [vmem:[%s286] sm:$0xff] %v786
      %795 = vst [vmem:[%s286 + $0x8] sm:$0xff] %v787
      %796 = vst [vmem:[%s286 + $0x10] sm:$0xff] %v788
      %797 = vst [vmem:[%s286 + $0x18] sm:$0xff] %v789
      %798 = vst [vmem:[%s286 + $0x20] sm:$0xff] %v790
      %799 = vst [vmem:[%s286 + $0x28] sm:$0xff] %v791
      %800 = vst [vmem:[%s286 + $0x30] sm:$0xff] %v792
      %801 = vst [vmem:[%s286 + $0x38] sm:$0xff] %v793
      %s802 = smul.u32 8, %s19
      %p803 = scmp.lt.s32.totalorder %s802, 15
      %s804 = scalar_select %p803, %s802, 15
      %p805 = scmp.lt.s32.totalorder %s20, 0
      %s806 = scalar_select %p805, %s20, 0
      %s807 = sadd.s32 %s806, %s804
      %s808 = smul.addr %s807, 8
      %s809 = scalar_lea.vmem %s4, %s808
      // Predicated region
      $region37: #{block_forward.7} parent=35 // pred_check
        %p810 = pneg %p153
      $region38: #{block_forward.7} parent=35 // pred_check_branch
        %812 = sbr.rel (%p810) target = $region40
      $region39: #{block_forward.7} parent=35 // pred_region
        %s813 = smul.u32 8, %s19
      $region40: #{block_forward.7} parent=35 // pred_fallthru
        _
    $region36: #{block_forward.7} parent=5 // pred_fallthru
      _
    %p814 = scmp.le.s32.totalorder 2, %s10
    // Predicated region
    $region41: #{block_forward.7} parent=5 // pred_check
      %p815 = pneg %p814
    $region42: #{block_forward.7} parent=5 // pred_check_branch
      %817 = sbr.rel (%p815) target = $region44
    $region43: #{block_forward.7} parent=5 // pred_region
      %s818 = ssub.s32 %s10, 2
      // Predicated region
      $region45: #{block_forward.7} parent=43 // pred_check
        %p819 = pneg %p159
      $region46: #{block_forward.7} parent=43 // pred_check_branch
        %821 = sbr.rel (%p819) target = $region48
      $region47: #{block_forward.7} parent=43 // pred_region
        %s822 = smul.u32 8, %s21
        %p823 = scmp.lt.s32.totalorder %s822, 15
        %s824 = scalar_select %p823, %s822, 15
        %p825 = scmp.lt.s32.totalorder %s22, 0
        %s826 = scalar_select %p825, %s22, 0
        %s827 = sadd.s32 %s826, %s824
        %s828 = smul.addr %s827, 8
        %s829 = scalar_lea.vmem %s4, %s828
      $region48: #{block_forward.7} parent=43 // pred_fallthru
        _
    $region44: #{block_forward.7} parent=5 // pred_fallthru
      _
  $region6: #{block_forward.7} parent=0 // loop_footer
    %s14 = sadd.s32 1, %s10
  $region7: #{block_forward.7} parent=0 // loop_footer_branch
    %9 = sbr.rel target = $region3
  $region8: #{block_forward.7} parent=0 // loop_exit
    _

// kernel: block_forward.4
$region0: #{block_forward.4}
  #allocation0 [shape = 'u32[]', space=smem, size = 0x4, offset = 0x4, fixed_abs, tag = 'smem constant byte address 0x4 - core index']
  #allocation1 [shape = 'u32[144,128]{1,0:T(1,128)}', space=vmem, size = 0x12000, scoped, tag = 'internal scratch']
  #allocation2 [shape = 'bf16[64,128]{1,0:T(8,128)(2,1)}', space=vmem, size = 0x4000, scoped, tag = 'scratch operand']
  %s0 = inlined_call_operand.vmem [shape: f32[128,128], index: 0, kind: input, shape index: {}]
  %s1 = inlined_call_operand.vmem [shape: f32[1,128], index: 1, kind: input, shape index: {}]
  %s2 = inlined_call_operand.vmem [shape: f32[1,128], index: 2, kind: input, shape index: {}]
  %s3 = inlined_call_operand.vmem [shape: bf16[128,384], index: 3, kind: input, shape index: {}]
  %s4 = inlined_call_operand.vmem [shape: f32[1,384], index: 4, kind: input, shape index: {}]
  %s5 = inlined_call_operand.vmem [shape: bf16[128,384], index: 5, kind: output, shape index: {}]
  %s6 = sld [smem:[#allocation0]]
  $region57: #{block_forward.4} parent=0
    _
  %s8 = ssub.s32 1, %s6
  %s9 = scalar_select 0, %s8, %s6
  loop: start=0, step=1, limit=4
  $region2: #{block_forward.4} parent=0 // loop_pre_header
    _
  $region3: #{block_forward.4} parent=0 // loop_header
    %s11 = sphi 0, %s15
    %p12 = scmp.ge.s32.totalorder %s11, 4
    %s18 = sphi 0, %s30
    %s19 = sphi 0, %s26
    %s20 = sphi 0, %s18
    %s21 = sphi 0, %s19
    %s22 = sphi 0, %s20
    %s23 = sphi 0, %s21
    %s33 = sphi 0, %s35
    %s36 = sphi 0, %s33
    %s37 = sphi 0, %s36
    %s53 = sphi 0, %s37
    %s57 = sphi 0, %s57
    %s59 = sphi 0, %s57
    %s60 = sphi 0, %s59
    %s74 = sphi 0, %s60
    %s78 = sphi 0, %s78
    %s80 = sphi 0, %s78
    %s81 = sphi 0, %s80
    %s95 = sphi 0, %s81
    %s101 = sphi 0, %s103
    %s104 = sphi 0, %s101
    %s105 = sphi 0, %s104
    %s121 = sphi 0, %s105
    %s127 = sphi 0, %s129
    %s130 = sphi 0, %s127
    %s131 = sphi 0, %s130
    %s147 = sphi 0, %s131
    %s155 = sphi 0, %s157
    %s158 = sphi 0, %s155
    %s159 = sphi 0, %s158
    %s175 = sphi 0, %s159
  $region4: #{block_forward.4} parent=0 // loop_header_branch
    %14 = sbr.rel (%p12) target = $region8
  $region5: #{block_forward.4} parent=0 // loop_body
    %s16 = ssub.s32 %s11, 1
    %s17 = ssub.s32 %s11, 2
    %s24 = sadd.s32 1, %s19
    %p25 = scmp.ge.s32.totalorder %s24, 1
    %s26 = scalar_select %p25, 0, %s24
    %s27 = sadd.s32 1, %s18
    %s28 = scalar_select %p25, %s27, %s18
    %p29 = scmp.ge.s32.totalorder %s28, 2
    %s30 = scalar_select %p29, 0, %s28
    %s31 = ssub.s32 %s18, %s30
    %p32 = scmp.eq.s32.totalorder %s31, 0
    %s34 = sadd.s32 %s33, 1
    %s35 = scalar_select %p32, %s33, %s34
    %p38 = pneg %p32
    %p39 = scmp.eq.s32.totalorder %s11, 1
    %p40 = por %p38, %p39
    %p41 = scmp.ne.s32.totalorder %s33, %s36
    %p42 = scmp.eq.s32.totalorder %s11, 0
    %p43 = por %p41, %p42
    %p44 = scmp.ne.s32.totalorder %s33, %s36
    %p45 = scmp.eq.s32.totalorder %s16, 1
    %p46 = por %p44, %p45
    %p47 = scmp.ne.s32.totalorder %s36, %s37
    %p48 = scmp.eq.s32.totalorder %s16, 0
    %p49 = por %p47, %p48
    %p50 = scmp.ne.s32.totalorder %s36, %s37
    %p51 = scmp.eq.s32.totalorder %s17, 1
    %p52 = por %p50, %p51
    %p54 = scmp.ne.s32.totalorder %s37, %s53
    %p55 = scmp.eq.s32.totalorder %s17, 0
    %p56 = por %p54, %p55
    %s58 = sadd.s32 %s57, 1
    %p61 = scmp.eq.s32.totalorder %s11, 1
    %p62 = scmp.ne.s32.totalorder %s57, %s59
    %p63 = scmp.eq.s32.totalorder %s11, 0
    %p64 = por %p62, %p63
    %p65 = scmp.ne.s32.totalorder %s57, %s59
    %p66 = scmp.eq.s32.totalorder %s16, 1
    %p67 = por %p65, %p66
    %p68 = scmp.ne.s32.totalorder %s59, %s60
    %p69 = scmp.eq.s32.totalorder %s16, 0
    %p70 = por %p68, %p69
    %p71 = scmp.ne.s32.totalorder %s59, %s60
    %p72 = scmp.eq.s32.totalorder %s17, 1
    %p73 = por %p71, %p72
    %p75 = scmp.ne.s32.totalorder %s60, %s74
    %p76 = scmp.eq.s32.totalorder %s17, 0
    %p77 = por %p75, %p76
    %s79 = sadd.s32 %s78, 1
    %p82 = scmp.eq.s32.totalorder %s11, 1
    %p83 = scmp.ne.s32.totalorder %s78, %s80
    %p84 = scmp.eq.s32.totalorder %s11, 0
    %p85 = por %p83, %p84
    %p86 = scmp.ne.s32.totalorder %s78, %s80
    %p87 = scmp.eq.s32.totalorder %s16, 1
    %p88 = por %p86, %p87
    %p89 = scmp.ne.s32.totalorder %s80, %s81
    %p90 = scmp.eq.s32.totalorder %s16, 0
    %p91 = por %p89, %p90
    %p92 = scmp.ne.s32.totalorder %s80, %s81
    %p93 = scmp.eq.s32.totalorder %s17, 1
    %p94 = por %p92, %p93
    %p96 = scmp.ne.s32.totalorder %s81, %s95
    %p97 = scmp.eq.s32.totalorder %s17, 0
    %p98 = por %p96, %p97
    %s99 = ssub.s32 %s19, %s26
    %p100 = scmp.eq.s32.totalorder %s99, 0
    %s102 = sadd.s32 %s101, 1
    %s103 = scalar_select %p100, %s101, %s102
    %p106 = pneg %p100
    %p107 = scmp.eq.s32.totalorder %s11, 1
    %p108 = por %p106, %p107
    %p109 = scmp.ne.s32.totalorder %s101, %s104
    %p110 = scmp.eq.s32.totalorder %s11, 0
    %p111 = por %p109, %p110
    %p112 = scmp.ne.s32.totalorder %s101, %s104
    %p113 = scmp.eq.s32.totalorder %s16, 1
    %p114 = por %p112, %p113
    %p115 = scmp.ne.s32.totalorder %s104, %s105
    %p116 = scmp.eq.s32.totalorder %s16, 0
    %p117 = por %p115, %p116
    %p118 = scmp.ne.s32.totalorder %s104, %s105
    %p119 = scmp.eq.s32.totalorder %s17, 1
    %p120 = por %p118, %p119
    %p122 = scmp.ne.s32.totalorder %s105, %s121
    %p123 = scmp.eq.s32.totalorder %s17, 0
    %p124 = por %p122, %p123
    %s125 = ssub.s32 %s19, %s26
    %p126 = scmp.eq.s32.totalorder %s125, 0
    %s128 = sadd.s32 %s127, 1
    %s129 = scalar_select %p126, %s127, %s128
    %p132 = pneg %p126
    %p133 = scmp.eq.s32.totalorder %s11, 1
    %p134 = por %p132, %p133
    %p135 = scmp.ne.s32.totalorder %s127, %s130
    %p136 = scmp.eq.s32.totalorder %s11, 0
    %p137 = por %p135, %p136
    %p138 = scmp.ne.s32.totalorder %s127, %s130
    %p139 = scmp.eq.s32.totalorder %s16, 1
    %p140 = por %p138, %p139
    %p141 = scmp.ne.s32.totalorder %s130, %s131
    %p142 = scmp.eq.s32.totalorder %s16, 0
    %p143 = por %p141, %p142
    %p144 = scmp.ne.s32.totalorder %s130, %s131
    %p145 = scmp.eq.s32.totalorder %s17, 1
    %p146 = por %p144, %p145
    %p148 = scmp.ne.s32.totalorder %s131, %s147
    %p149 = scmp.eq.s32.totalorder %s17, 0
    %p150 = por %p148, %p149
    %s151 = ssub.s32 %s18, %s30
    %s152 = ssub.s32 %s19, %s26
    %s153 = sor.u32 %s151, %s152
    %p154 = scmp.eq.s32.totalorder %s153, 0
    %s156 = sadd.s32 %s155, 1
    %s157 = scalar_select %p154, %s155, %s156
    %p160 = pneg %p154
    %p161 = scmp.eq.s32.totalorder %s11, 1
    %p162 = por %p160, %p161
    %p163 = scmp.ne.s32.totalorder %s155, %s158
    %p164 = scmp.eq.s32.totalorder %s11, 0
    %p165 = por %p163, %p164
    %p166 = scmp.ne.s32.totalorder %s155, %s158
    %p167 = scmp.eq.s32.totalorder %s16, 1
    %p168 = por %p166, %p167
    %p169 = scmp.ne.s32.totalorder %s158, %s159
    %p170 = scmp.eq.s32.totalorder %s16, 0
    %p171 = por %p169, %p170
    %p172 = scmp.ne.s32.totalorder %s158, %s159
    %p173 = scmp.eq.s32.totalorder %s17, 1
    %p174 = por %p172, %p173
    %p176 = scmp.ne.s32.totalorder %s159, %s175
    %p177 = scmp.eq.s32.totalorder %s17, 0
    %p178 = por %p176, %p177
    %p179 = scmp.le.s32.totalorder 1, %s11
    %p180 = scmp.lt.s32.totalorder %s11, 3
    %p181 = pnand %p179, %p180
    %p182 = pneg %p181
    // Predicated region
    $region9: #{block_forward.4} parent=5 // pred_check
      _
    $region10: #{block_forward.4} parent=5 // pred_check_branch
      %184 = sbr.rel (%p181) target = $region12
    $region11: #{block_forward.4} parent=5 // pred_region
      %s185 = ssub.s32 %s11, 1
      // Predicated region
      $region13: #{block_forward.4} parent=11 // pred_check
        %p186 = pneg %p70
      $region14: #{block_forward.4} parent=11 // pred_check_branch
        %188 = sbr.rel (%p186) target = $region16
      $region15: #{block_forward.4} parent=11 // pred_region
        _
      $region16: #{block_forward.4} parent=11 // pred_fallthru
        _
      // Predicated region
      $region17: #{block_forward.4} parent=11 // pred_check
        %p189 = pneg %p91
      $region18: #{block_forward.4} parent=11 // pred_check_branch
        %191 = sbr.rel (%p189) target = $region20
      $region19: #{block_forward.4} parent=11 // pred_region
        _
      $region20: #{block_forward.4} parent=11 // pred_fallthru
        _
      // Predicated region
      $region21: #{block_forward.4} parent=11 // pred_check
        %p192 = pneg %p117
      $region22: #{block_forward.4} parent=11 // pred_check_branch
        %194 = sbr.rel (%p192) target = $region24
      $region23: #{block_forward.4} parent=11 // pred_region
        %s195 = smul.u32 3, %s21
        %p196 = scmp.lt.s32.totalorder %s195, 2
        %s197 = scalar_select %p196, %s195, 2
        %s198 = smul.addr %s197, 4
        %s199 = scalar_lea.vmem %s3, %s198
        %s200 = smul.u32 3, %s21
      $region24: #{block_forward.4} parent=11 // pred_fallthru
        _
      // Predicated region
      $region25: #{block_forward.4} parent=11 // pred_check
        %p201 = pneg %p143
      $region26: #{block_forward.4} parent=11 // pred_check_branch
        %203 = sbr.rel (%p201) target = $region28
      $region27: #{block_forward.4} parent=11 // pred_region
        %s204 = smul.u32 3, %s21
        %p205 = scmp.lt.s32.totalorder %s204, 2
        %s206 = scalar_select %p205, %s204, 2
        %s207 = scalar_lea.vmem %s4, %s206
        %s208 = smul.u32 3, %s21
      $region28: #{block_forward.4} parent=11 // pred_fallthru
        _
    $region12: #{block_forward.4} parent=5 // pred_fallthru
      _
    %p209 = scmp.lt.s32.totalorder %s11, 2
    // Predicated region
    $region29: #{block_forward.4} parent=5 // pred_check
      %p210 = pneg %p209
    $region30: #{block_forward.4} parent=5 // pred_check_branch
      %212 = sbr.rel (%p210) target = $region32
    $region31: #{block_forward.4} parent=5 // pred_region
      // Predicated region
      $region33: #{block_forward.4} parent=31 // pred_check
        %p213 = pneg %p43
      $region34: #{block_forward.4} parent=31 // pred_check_branch
        %215 = sbr.rel (%p213) target = $region36
      $region35: #{block_forward.4} parent=31 // pred_region
        %s216 = smul.u32 8, %s18
        %p217 = scmp.lt.s32.totalorder %s216, 15
        %s218 = scalar_select %p217, %s216, 15
        %s219 = smul.addr %s218, 8
        %s220 = scalar_lea.vmem %s0, %s219
        %s221 = smul.u32 8, %s18
      $region36: #{block_forward.4} parent=31 // pred_fallthru
        _
    $region32: #{block_forward.4} parent=5 // pred_fallthru
      _
    %p222 = scmp.le.s32.totalorder 1, %s11
    %p223 = scmp.lt.s32.totalorder %s11, 3
    %p224 = pnand %p222, %p223
    %p225 = pneg %p224
    // Predicated region
    $region37: #{block_forward.4} parent=5 // pred_check
      _
    $region38: #{block_forward.4} parent=5 // pred_check_branch
      %227 = sbr.rel (%p224) target = $region40
    $region39: #{block_forward.4} parent=5 // pred_region
      %s228 = ssub.s32 %s11, 1
      %s229 = smul.u32 8, %s20
      %p230 = scmp.lt.s32.totalorder %s229, 15
      %s231 = scalar_select %p230, %s229, 15
      %s232 = smul.addr %s231, 8
      %s233 = scalar_lea.vmem %s0, %s232
      %p234 = pneg %p49
      %p235 = pneg %p46
      %p236 = pneg %p70
      %p237 = pneg %p67
      %p238 = pneg %p91
      %p239 = pneg %p88
      %s240 = smul.u32 3, %s21
      %p241 = scmp.lt.s32.totalorder %s240, 2
      %s242 = scalar_select %p241, %s240, 2
      %s243 = smul.addr %s242, 4
      %s244 = scalar_lea.vmem %s3, %s243
      %p245 = pneg %p117
      %p246 = pneg %p114
      %s247 = smul.u32 3, %s21
      %p248 = scmp.lt.s32.totalorder %s247, 2
      %s249 = scalar_select %p248, %s247, 2
      %s250 = scalar_lea.vmem %s4, %s249
      %p251 = pneg %p143
      %p252 = pneg %p140
      %p253 = pneg %p171
      %p254 = pneg %p168
      %s255 = smul.u32 8, %s20
      %s256 = smul.u32 3, %s21
      %p257 = scmp.lt.s32.totalorder %s255, 15
      %s258 = scalar_select %p257, %s255, 15
      %p259 = scmp.lt.s32.totalorder %s256, 2
      %s260 = scalar_select %p259, %s256, 2
      %s261 = smul.addr %s258, 3
      %s262 = sadd.s32 %s260, %s261
      %s263 = smul.addr %s262, 4
      %s264 = scalar_lea.vmem %s5, %s263
      %s265 = smul.u32 8, %s20
      %p266 = scmp.lt.s32.totalorder %s265, 15
      %s267 = scalar_select %p266, %s265, 15
      %s268 = smul.addr %s267, 8
      %s269 = scalar_lea.vmem %s0, %s268
      %s270 = smul.u32 8, %s20
      %s271 = smul.u32 3, %s21
      %p272 = scmp.lt.s32.totalorder %s271, 2
      %s273 = scalar_select %p272, %s271, 2
      %s274 = smul.addr %s273, 4
      %s275 = scalar_lea.vmem %s3, %s274
      %s276 = smul.u32 3, %s21
      %s277 = smul.u32 3, %s21
      %p278 = scmp.lt.s32.totalorder %s277, 2
      %s279 = scalar_select %p278, %s277, 2
      %s280 = scalar_lea.vmem %s4, %s279
      %s281 = smul.u32 3, %s21
      %s282 = smul.u32 8, %s20
      %s283 = smul.u32 3, %s21
      %p284 = scmp.lt.s32.totalorder %s282, 15
      %s285 = scalar_select %p284, %s282, 15
      %p286 = scmp.lt.s32.totalorder %s283, 2
      %s287 = scalar_select %p286, %s283, 2
      %s288 = smul.addr %s285, 3
      %s289 = sadd.s32 %s287, %s288
      %s290 = smul.addr %s289, 4
      %s291 = scalar_lea.vmem %s5, %s290
      %s292 = smul.u32 8, %s20
      %s293 = smul.u32 3, %s21
      %p295 = scmp.eq.s32.totalorder %s21, 0
      // Predicated region
      $region41: #{block_forward.4} parent=39 // pred_check
        %p296 = pneg %p295
      $region42: #{block_forward.4} parent=39 // pred_check_branch
        %298 = sbr.rel (%p296) target = $region44
      $region43: #{block_forward.4} parent=39 // pred_region
        %v299 = vld [vmem:[%s269] sm:$0xff]
        %v300 = vld [vmem:[%s269 + $0x8] sm:$0xff]
        %v301 = vld [vmem:[%s269 + $0x10] sm:$0xff]
        %v302 = vld [vmem:[%s269 + $0x18] sm:$0xff]
        %v303 = vld [vmem:[%s269 + $0x20] sm:$0xff]
        %v304 = vld [vmem:[%s269 + $0x28] sm:$0xff]
        %v305 = vld [vmem:[%s269 + $0x30] sm:$0xff]
        %v306 = vld [vmem:[%s269 + $0x38] sm:$0xff]
        %307 = vadd.xlane.f32.xlu0 %v299
        %v308 = vpop.xlane.xlu0 %307
        %309 = vadd.xlane.f32.xlu0 %v300
        %v310 = vpop.xlane.xlu0 %309
        %311 = vadd.xlane.f32.xlu0 %v301
        %v312 = vpop.xlane.xlu0 %311
        %313 = vadd.xlane.f32.xlu0 %v302
        %v314 = vpop.xlane.xlu0 %313
        %315 = vadd.xlane.f32.xlu0 %v303
        %v316 = vpop.xlane.xlu0 %315
        %317 = vadd.xlane.f32.xlu0 %v304
        %v318 = vpop.xlane.xlu0 %317
        %319 = vadd.xlane.f32.xlu0 %v305
        %v320 = vpop.xlane.xlu0 %319
        %321 = vadd.xlane.f32.xlu0 %v306
        %v322 = vpop.xlane.xlu0 %321
        %v323 = vmul.f32 %v308, 0.0078125
        %v324 = vmul.f32 %v310, 0.0078125
        %v325 = vmul.f32 %v312, 0.0078125
        %v326 = vmul.f32 %v314, 0.0078125
        %v327 = vmul.f32 %v316, 0.0078125
        %v328 = vmul.f32 %v318, 0.0078125
        %v329 = vmul.f32 %v320, 0.0078125
        %v330 = vmul.f32 %v322, 0.0078125
        %v331 = vsub.f32 %v299, %v323
        %v332 = vsub.f32 %v300, %v324
        %v333 = vsub.f32 %v301, %v325
        %v334 = vsub.f32 %v302, %v326
        %v335 = vsub.f32 %v303, %v327
        %v336 = vsub.f32 %v304, %v328
        %v337 = vsub.f32 %v305, %v329
        %v338 = vsub.f32 %v306, %v330
        %v339 = vmul.f32 %v331, %v331
        %v340 = vmul.f32 %v332, %v332
        %v341 = vmul.f32 %v333, %v333
        %v342 = vmul.f32 %v334, %v334
        %v343 = vmul.f32 %v335, %v335
        %v344 = vmul.f32 %v336, %v336
        %v345 = vmul.f32 %v337, %v337
        %v346 = vmul.f32 %v338, %v338
        %347 = vadd.xlane.f32.xlu0 %v339
        %v348 = vpop.xlane.xlu0 %347
        %349 = vadd.xlane.f32.xlu0 %v340
        %v350 = vpop.xlane.xlu0 %349
        %351 = vadd.xlane.f32.xlu0 %v341
        %v352 = vpop.xlane.xlu0 %351
        %353 = vadd.xlane.f32.xlu0 %v342
        %v354 = vpop.xlane.xlu0 %353
        %355 = vadd.xlane.f32.xlu0 %v343
        %v356 = vpop.xlane.xlu0 %355
        %357 = vadd.xlane.f32.xlu0 %v344
        %v358 = vpop.xlane.xlu0 %357
        %359 = vadd.xlane.f32.xlu0 %v345
        %v360 = vpop.xlane.xlu0 %359
        %361 = vadd.xlane.f32.xlu0 %v346
        %v362 = vpop.xlane.xlu0 %361
        %v363 = vmul.f32 %v348, 0.0078125
        %v364 = vmul.f32 %v350, 0.0078125
        %v365 = vmul.f32 %v352, 0.0078125
        %v366 = vmul.f32 %v354, 0.0078125
        %v367 = vmul.f32 %v356, 0.0078125
        %v368 = vmul.f32 %v358, 0.0078125
        %v369 = vmul.f32 %v360, 0.0078125
        %v370 = vmul.f32 %v362, 0.0078125
        %v371 = vadd.f32 %v363, 1e-05
        %v372 = vadd.f32 %v364, 1e-05
        %v373 = vadd.f32 %v365, 1e-05
        %v374 = vadd.f32 %v366, 1e-05
        %v375 = vadd.f32 %v367, 1e-05
        %v376 = vadd.f32 %v368, 1e-05
        %v377 = vadd.f32 %v369, 1e-05
        %v378 = vadd.f32 %v370, 1e-05
        %v379 = vrsqrt.pop %v371
        %v380 = vrsqrt.pop %v372
        %v381 = vrsqrt.pop %v373
        %v382 = vrsqrt.pop %v374
        %v383 = vrsqrt.pop %v375
        %v384 = vrsqrt.pop %v376
        %v385 = vrsqrt.pop %v377
        %v386 = vrsqrt.pop %v378
        %v387 = vmul.f32 %v331, %v379
        %v388 = vmul.f32 %v332, %v380
        %v389 = vmul.f32 %v333, %v381
        %v390 = vmul.f32 %v334, %v382
        %v391 = vmul.f32 %v335, %v383
        %v392 = vmul.f32 %v336, %v384
        %v393 = vmul.f32 %v337, %v385
        %v394 = vmul.f32 %v338, %v386
        %v395 = vld [vmem:[%s1] sm:$0x1]
        %v397 = vlaneseq
        %v398 = vshrl.u32 %v397, 7
        %v399 = vsub.s32 0, %v398
        %v400 = vrot.slane %v395, %v399
        %v402 = vmul.f32 %v387, %v400
        %v403 = vmul.f32 %v388, %v400
        %v404 = vmul.f32 %v389, %v400
        %v405 = vmul.f32 %v390, %v400
        %v406 = vmul.f32 %v391, %v400
        %v407 = vmul.f32 %v392, %v400
        %v408 = vmul.f32 %v393, %v400
        %v409 = vmul.f32 %v394, %v400
        %v410 = vld [vmem:[%s2] sm:$0x1]
        %v412 = vlaneseq
        %v413 = vshrl.u32 %v412, 7
        %v414 = vsub.s32 0, %v413
        %v415 = vrot.slane %v410, %v414
        %v417 = vadd.f32 %v402, %v415
        %v418 = vadd.f32 %v403, %v415
        %v419 = vadd.f32 %v404, %v415
        %v420 = vadd.f32 %v405, %v415
        %v421 = vadd.f32 %v406, %v415
        %v422 = vadd.f32 %v407, %v415
        %v423 = vadd.f32 %v408, %v415
        %v424 = vadd.f32 %v409, %v415
        %v425 = vpack.c.bf16 %v418, %v417
        %v426 = vpack.c.bf16 %v420, %v419
        %v427 = vpack.c.bf16 %v422, %v421
        %v428 = vpack.c.bf16 %v424, %v423
        %v433 = vunpack.c.l.b16 %v425
        %v434 = vunpack.c.h.b16 %v425
        %v435 = vunpack.c.l.b16 %v426
        %v436 = vunpack.c.h.b16 %v426
        %v437 = vunpack.c.l.b16 %v427
        %v438 = vunpack.c.h.b16 %v427
        %v439 = vunpack.c.l.b16 %v428
        %v440 = vunpack.c.h.b16 %v428
        %v441 = vpack.c.b16 %v433, %v433
        %v442 = vpack.c.b16 %v434, %v434
        %v443 = vpack.c.b16 %v435, %v435
        %v444 = vpack.c.b16 %v436, %v436
        %v445 = vpack.c.b16 %v437, %v437
        %v446 = vpack.c.b16 %v438, %v438
        %v447 = vpack.c.b16 %v439, %v439
        %v448 = vpack.c.b16 %v440, %v440
        %457 = vst [vmem:[#allocation2] sm:$0xf] %v441
        %458 = vst [vmem:[#allocation2 + $0x4] sm:$0xf] %v442
        %459 = vst [vmem:[#allocation2 + $0x8] sm:$0xf] %v443
        %460 = vst [vmem:[#allocation2 + $0xc] sm:$0xf] %v444
        %461 = vst [vmem:[#allocation2 + $0x10] sm:$0xf] %v445
        %462 = vst [vmem:[#allocation2 + $0x14] sm:$0xf] %v446
        %463 = vst [vmem:[#allocation2 + $0x18] sm:$0xf] %v447
        %464 = vst [vmem:[#allocation2 + $0x1c] sm:$0xf] %v448
      $region44: #{block_forward.4} parent=39 // pred_fallthru
        _
      %v465 = vld [vmem:[#allocation2] sm:$0xf]
      %v466 = vld [vmem:[#allocation2 + $0x4] sm:$0xf]
      %v467 = vld [vmem:[#allocation2 + $0x8] sm:$0xf]
      %v468 = vld [vmem:[#allocation2 + $0xc] sm:$0xf]
      %v469 = vld [vmem:[#allocation2 + $0x10] sm:$0xf]
      %v470 = vld [vmem:[#allocation2 + $0x14] sm:$0xf]
      %v471 = vld [vmem:[#allocation2 + $0x18] sm:$0xf]
      %v472 = vld [vmem:[#allocation2 + $0x1c] sm:$0xf]
      %v473 = vld [vmem:[%s275] sm:$0xff]
      %v474 = vld [vmem:[%s275 + $0x8] sm:$0xf]
      %v475 = vld [vmem:[%s275 + $0xc] sm:$0xff]
      %v476 = vld [vmem:[%s275 + $0x14] sm:$0xf]
      %v477 = vld [vmem:[%s275 + $0x18] sm:$0xff]
      %v478 = vld [vmem:[%s275 + $0x20] sm:$0xf]
      %v479 = vld [vmem:[%s275 + $0x24] sm:$0xff]
      %v480 = vld [vmem:[%s275 + $0x2c] sm:$0xf]
      %v481 = vld [vmem:[%s275 + $0x30] sm:$0xff]
      %v482 = vld [vmem:[%s275 + $0x38] sm:$0xf]
      %v483 = vld [vmem:[%s275 + $0x3c] sm:$0xff]
      %v484 = vld [vmem:[%s275 + $0x44] sm:$0xf]
      %v485 = vld [vmem:[%s275 + $0x48] sm:$0xff]
      %v486 = vld [vmem:[%s275 + $0x50] sm:$0xf]
      %v487 = vld [vmem:[%s275 + $0x54] sm:$0xff]
      %v488 = vld [vmem:[%s275 + $0x5c] sm:$0xf]
      %v489 = vld [vmem:[%s275 + $0x60] sm:$0xff]
      %v490 = vld [vmem:[%s275 + $0x68] sm:$0xf]
      %v491 = vld [vmem:[%s275 + $0x6c] sm:$0xff]
      %v492 = vld [vmem:[%s275 + $0x74] sm:$0xf]
      %v493 = vld [vmem:[%s275 + $0x78] sm:$0xff]
      %v494 = vld [vmem:[%s275 + $0x80] sm:$0xf]
      %v495 = vld [vmem:[%s275 + $0x84] sm:$0xff]
      %v496 = vld [vmem:[%s275 + $0x8c] sm:$0xf]
      %v497 = vld [vmem:[%s275 + $0x90] sm:$0xff]
      %v498 = vld [vmem:[%s275 + $0x98] sm:$0xf]
      %v499 = vld [vmem:[%s275 + $0x9c] sm:$0xff]
      %v500 = vld [vmem:[%s275 + $0xa4] sm:$0xf]
      %v501 = vld [vmem:[%s275 + $0xa8] sm:$0xff]
      %v502 = vld [vmem:[%s275 + $0xb0] sm:$0xf]
      %v503 = vld [vmem:[%s275 + $0xb4] sm:$0xff]
      %v504 = vld [vmem:[%s275 + $0xbc] sm:$0xf]
      %v505 = vld [vmem:[%s280] sm:$0x7]
      %v507 = vlaneseq
      %v508 = vshrl.u32 %v507, 7
      %v509 = vsub.s32 0, %v508
      %v510 = vrot.slane %v505, %v509
      %v511 = vlaneseq
      %v512 = vshrl.u32 %v511, 7
      %v513 = vsub.s32 1, %v512
      %v514 = vrot.slane %v505, %v513
      %v515 = vlaneseq
      %v516 = vshrl.u32 %v515, 7
      %v517 = vsub.s32 2, %v516
      %v518 = vrot.slane %v505, %v517
      %v530 = vunpack.c.l.b16 %v465
      %v531 = vunpack.c.l.b16 %v466
      %v532 = vunpack.c.l.b16 %v467
      %v533 = vunpack.c.l.b16 %v468
      %v534 = vunpack.c.l.b16 %v469
      %v535 = vunpack.c.l.b16 %v470
      %v536 = vunpack.c.l.b16 %v471
      %v537 = vunpack.c.l.b16 %v472
      %v538 = vpack.c.b16 %v531, %v530
      %v539 = vpack.c.b16 %v533, %v532
      %v540 = vpack.c.b16 %v535, %v534
      %v541 = vpack.c.b16 %v537, %v536
      %v578 = vunpack.c.l.b16 %v473
      %v579 = vunpack.c.h.b16 %v473
      %v580 = vunpack.c.l.b16 %v474
      %v581 = vunpack.c.l.b16 %v475
      %v582 = vunpack.c.h.b16 %v475
      %v583 = vunpack.c.l.b16 %v476
      %v584 = vunpack.c.l.b16 %v477
      %v585 = vunpack.c.h.b16 %v477
      %v586 = vunpack.c.l.b16 %v478
      %v587 = vunpack.c.l.b16 %v479
      %v588 = vunpack.c.h.b16 %v479
      %v589 = vunpack.c.l.b16 %v480
      %v590 = vunpack.c.l.b16 %v481
      %v591 = vunpack.c.h.b16 %v481
      %v592 = vunpack.c.l.b16 %v482
      %v593 = vunpack.c.l.b16 %v483
      %v594 = vunpack.c.h.b16 %v483
      %v595 = vunpack.c.l.b16 %v484
      %v596 = vunpack.c.l.b16 %v485
      %v597 = vunpack.c.h.b16 %v485
      %v598 = vunpack.c.l.b16 %v486
      %v599 = vunpack.c.l.b16 %v487
      %v600 = vunpack.c.h.b16 %v487
      %v601 = vunpack.c.l.b16 %v488
      %v602 = vunpack.c.l.b16 %v489
      %v603 = vunpack.c.h.b16 %v489
      %v604 = vunpack.c.l.b16 %v490
      %v605 = vunpack.c.l.b16 %v491
      %v606 = vunpack.c.h.b16 %v491
      %v607 = vunpack.c.l.b16 %v492
      %v608 = vunpack.c.l.b16 %v493
      %v609 = vunpack.c.h.b16 %v493
      %v610 = vunpack.c.l.b16 %v494
      %v611 = vunpack.c.l.b16 %v495
      %v612 = vunpack.c.h.b16 %v495
      %v613 = vunpack.c.l.b16 %v496
      %v614 = vunpack.c.l.b16 %v497
      %v615 = vunpack.c.h.b16 %v497
      %v616 = vunpack.c.l.b16 %v498
      %v617 = vunpack.c.l.b16 %v499
      %v618 = vunpack.c.h.b16 %v499
      %v619 = vunpack.c.l.b16 %v500
      %v620 = vunpack.c.l.b16 %v501
      %v621 = vunpack.c.h.b16 %v501
      %v622 = vunpack.c.l.b16 %v502
      %v623 = vunpack.c.l.b16 %v503
      %v624 = vunpack.c.h.b16 %v503
      %v625 = vunpack.c.l.b16 %v504
      %v626 = vpack.c.b16 %v581, %v578
      %v627 = vpack.c.b16 %v582, %v579
      %v628 = vpack.c.b16 %v583, %v580
      %v629 = vpack.c.b16 %v587, %v584
      %v630 = vpack.c.b16 %v588, %v585
      %v631 = vpack.c.b16 %v589, %v586
      %v632 = vpack.c.b16 %v593, %v590
      %v633 = vpack.c.b16 %v594, %v591
      %v634 = vpack.c.b16 %v595, %v592
      %v635 = vpack.c.b16 %v599, %v596
      %v636 = vpack.c.b16 %v600, %v597
      %v637 = vpack.c.b16 %v601, %v598
      %v638 = vpack.c.b16 %v605, %v602
      %v639 = vpack.c.b16 %v606, %v603
      %v640 = vpack.c.b16 %v607, %v604
      %v641 = vpack.c.b16 %v611, %v608
      %v642 = vpack.c.b16 %v612, %v609
      %v643 = vpack.c.b16 %v613, %v610
      %v644 = vpack.c.b16 %v617, %v614
      %v645 = vpack.c.b16 %v618, %v615
      %v646 = vpack.c.b16 %v619, %v616
      %v647 = vpack.c.b16 %v623, %v620
      %v648 = vpack.c.b16 %v624, %v621
      %v649 = vpack.c.b16 %v625, %v622
      %674 = vmatprep.subr.bf16.mxu0 %v648
      %675 = vmatpush1.bf16.msra.mxu0 %v647
      %676 = vmatprep.subr.bf16.mxu0 %v645
      %677 = vmatpush1.bf16.msra.mxu0 %v644
      %678 = vmatprep.subr.bf16.mxu0 %v642
      %679 = vmatpush1.bf16.msra.mxu0 %v641
      %680 = vmatprep.subr.bf16.mxu0 %v639
      %681 = vmatpush1.bf16.msra.mxu0 %v638
      %682 = vmatprep.subr.bf16.mxu0 %v636
      %683 = vmatpush1.bf16.msra.mxu0 %v635
      %684 = vmatprep.subr.bf16.mxu0 %v633
      %685 = vmatpush1.bf16.msra.mxu0 %v632
      %686 = vmatprep.subr.bf16.mxu0 %v630
      %687 = vmatpush1.bf16.msra.mxu0 %v629
      %688 = vmatprep.subr.bf16.mxu0 %v627
      %689 = vmatpush1.bf16.msra.mxu0 %v626
      %690 = vmatprep.subr.bf16.mxu0 0
      %691 = vmatpush2.bf16.msra.mxu0 0
      %692 = vmatprep.subr.bf16.mxu0 0
      %693 = vmatpush2.bf16.msra.mxu0 0
      %694 = vmatprep.subr.bf16.mxu0 0
      %695 = vmatpush2.bf16.msra.mxu0 0
      %696 = vmatprep.subr.bf16.mxu0 0
      %697 = vmatpush2.bf16.msra.mxu0 0
      %698 = vmatprep.subr.bf16.mxu0 0
      %699 = vmatpush2.bf16.msra.mxu0 0
      %700 = vmatprep.subr.bf16.mxu0 0
      %701 = vmatpush2.bf16.msra.mxu0 0
      %702 = vmatprep.subr.bf16.mxu0 0
      %703 = vmatpush2.bf16.msra.mxu0 0
      %704 = vmatprep.subr.bf16.mxu0 0
      %705 = vmatpush2.bf16.msra.mxu0 0
      %706 = vmatprep.mubr.bf16.mxu0 0
      %707 = vmatmul.mubr.bf16.gmra.mxu0 %v538
      %v708 = vpop.f32.mrf.mxu0
      %v709 = vadd.f32 %v510, %v708
      %v710 = vpop.f32.mrf.mxu0
      %v711 = vadd.f32 %v514, %v710
      %v712 = vpop.f32.mrf.mxu0
      %v713 = vadd.f32 %v510, %v712
      %v714 = vpop.f32.mrf.mxu0
      %v715 = vadd.f32 %v514, %v714
      %716 = vmatprep.mubr.bf16.mxu0 0
      %717 = vmatmul.mubr.bf16.gmra.mxu0 %v539
      %v718 = vpop.f32.mrf.mxu0
      %v719 = vadd.f32 %v510, %v718
      %v720 = vpop.f32.mrf.mxu0
      %v721 = vadd.f32 %v514, %v720
      %v722 = vpop.f32.mrf.mxu0
      %v723 = vadd.f32 %v510, %v722
      %v724 = vpop.f32.mrf.mxu0
      %v725 = vadd.f32 %v514, %v724
      %726 = vmatprep.mubr.bf16.mxu0 0
      %727 = vmatmul.mubr.bf16.gmra.mxu0 %v540
      %v728 = vpop.f32.mrf.mxu0
      %v729 = vadd.f32 %v510, %v728
      %v730 = vpop.f32.mrf.mxu0
      %v731 = vadd.f32 %v514, %v730
      %v732 = vpop.f32.mrf.mxu0
      %v733 = vadd.f32 %v510, %v732
      %v734 = vpop.f32.mrf.mxu0
      %v735 = vadd.f32 %v514, %v734
      %736 = vmatprep.mubr.bf16.mxu0 0
      %737 = vmatmul.mubr.bf16.gmra.mxu0 %v541
      %v738 = vpop.f32.mrf.mxu0
      %v739 = vadd.f32 %v510, %v738
      %v740 = vpop.f32.mrf.mxu0
      %v741 = vadd.f32 %v514, %v740
      %v742 = vpop.f32.mrf.mxu0
      %v743 = vadd.f32 %v510, %v742
      %v744 = vpop.f32.mrf.mxu0
      %v745 = vadd.f32 %v514, %v744
      %746 = vdwg.mxu0
      %747 = vmatprep.subr.bf16.mxu0 0
      %748 = vmatpush1.bf16.msra.mxu0 %v649
      %749 = vmatprep.subr.bf16.mxu0 0
      %750 = vmatpush1.bf16.msra.mxu0 %v646
      %751 = vmatprep.subr.bf16.mxu0 0
      %752 = vmatpush1.bf16.msra.mxu0 %v643
      %753 = vmatprep.subr.bf16.mxu0 0
      %754 = vmatpush1.bf16.msra.mxu0 %v640
      %755 = vmatprep.subr.bf16.mxu0 0
      %756 = vmatpush1.bf16.msra.mxu0 %v637
      %757 = vmatprep.subr.bf16.mxu0 0
      %758 = vmatpush1.bf16.msra.mxu0 %v634
      %759 = vmatprep.subr.bf16.mxu0 0
      %760 = vmatpush1.bf16.msra.mxu0 %v631
      %761 = vmatprep.subr.bf16.mxu0 0
      %762 = vmatpush1.bf16.msra.mxu0 %v628
      %763 = vmatprep.subr.bf16.mxu0 0
      %764 = vmatpush2.bf16.msra.mxu0 0
      %765 = vmatprep.subr.bf16.mxu0 0
      %766 = vmatpush2.bf16.msra.mxu0 0
      %767 = vmatprep.subr.bf16.mxu0 0
      %768 = vmatpush2.bf16.msra.mxu0 0
      %769 = vmatprep.subr.bf16.mxu0 0
      %770 = vmatpush2.bf16.msra.mxu0 0
      %771 = vmatprep.subr.bf16.mxu0 0
      %772 = vmatpush2.bf16.msra.mxu0 0
      %773 = vmatprep.subr.bf16.mxu0 0
      %774 = vmatpush2.bf16.msra.mxu0 0
      %775 = vmatprep.subr.bf16.mxu0 0
      %776 = vmatpush2.bf16.msra.mxu0 0
      %777 = vmatprep.subr.bf16.mxu0 0
      %778 = vmatpush2.bf16.msra.mxu0 0
      %779 = vmatprep.mubr.bf16.mxu0 0
      %780 = vmatmul.mubr.bf16.gmra.mxu0 %v538
      %v781 = vpop.f32.mrf.mxu0
      %v782 = vadd.f32 %v518, %v781
      %v783 = vpop.f32.mrf.mxu0
      %v784 = vpop.f32.mrf.mxu0
      %v785 = vadd.f32 %v518, %v784
      %v786 = vpop.f32.mrf.mxu0
      %787 = vmatprep.mubr.bf16.mxu0 0
      %788 = vmatmul.mubr.bf16.gmra.mxu0 %v539
      %v789 = vpop.f32.mrf.mxu0
      %v790 = vadd.f32 %v518, %v789
      %v791 = vpop.f32.mrf.mxu0
      %v792 = vpop.f32.mrf.mxu0
      %v793 = vadd.f32 %v518, %v792
      %v794 = vpop.f32.mrf.mxu0
      %795 = vmatprep.mubr.bf16.mxu0 0
      %796 = vmatmul.mubr.bf16.gmra.mxu0 %v540
      %v797 = vpop.f32.mrf.mxu0
      %v798 = vadd.f32 %v518, %v797
      %v799 = vpop.f32.mrf.mxu0
      %v800 = vpop.f32.mrf.mxu0
      %v801 = vadd.f32 %v518, %v800
      %v802 = vpop.f32.mrf.mxu0
      %803 = vmatprep.mubr.bf16.mxu0 0
      %804 = vmatmul.mubr.bf16.gmra.mxu0 %v541
      %v805 = vpop.f32.mrf.mxu0
      %v806 = vadd.f32 %v518, %v805
      %v807 = vpop.f32.mrf.mxu0
      %v808 = vpop.f32.mrf.mxu0
      %v809 = vadd.f32 %v518, %v808
      %v810 = vpop.f32.mrf.mxu0
      %811 = vdwg.mxu0
      %v812 = vpack.c.bf16 %v713, %v709
      %v813 = vpack.c.bf16 %v715, %v711
      %v814 = vpack.c.bf16 %v785, %v782
      %v815 = vpack.c.bf16 %v723, %v719
      %v816 = vpack.c.bf16 %v725, %v721
      %v817 = vpack.c.bf16 %v793, %v790
      %v818 = vpack.c.bf16 %v733, %v729
      %v819 = vpack.c.bf16 %v735, %v731
      %v820 = vpack.c.bf16 %v801, %v798
      %v821 = vpack.c.bf16 %v743, %v739
      %v822 = vpack.c.bf16 %v745, %v741
      %v823 = vpack.c.bf16 %v809, %v806
      %v836 = vunpack.c.l.b16 %v812
      %v837 = vunpack.c.l.b16 %v813
      %v838 = vunpack.c.l.b16 %v814
      %v839 = vunpack.c.h.b16 %v812
      %v840 = vunpack.c.h.b16 %v813
      %v841 = vunpack.c.h.b16 %v814
      %v842 = vunpack.c.l.b16 %v815
      %v843 = vunpack.c.l.b16 %v816
      %v844 = vunpack.c.l.b16 %v817
      %v845 = vunpack.c.h.b16 %v815
      %v846 = vunpack.c.h.b16 %v816
      %v847 = vunpack.c.h.b16 %v817
      %v848 = vunpack.c.l.b16 %v818
      %v849 = vunpack.c.l.b16 %v819
      %v850 = vunpack.c.l.b16 %v820
      %v851 = vunpack.c.h.b16 %v818
      %v852 = vunpack.c.h.b16 %v819
      %v853 = vunpack.c.h.b16 %v820
      %v854 = vunpack.c.l.b16 %v821
      %v855 = vunpack.c.l.b16 %v822
      %v856 = vunpack.c.l.b16 %v823
      %v857 = vunpack.c.h.b16 %v821
      %v858 = vunpack.c.h.b16 %v822
      %v859 = vunpack.c.h.b16 %v823
      %v860 = vpack.c.b16 %v837, %v836
      %v861 = vpack.c.b16 %v838, %v838
      %v862 = vpack.c.b16 %v840, %v839
      %v863 = vpack.c.b16 %v841, %v841
      %v864 = vpack.c.b16 %v843, %v842
      %v865 = vpack.c.b16 %v844, %v844
      %v866 = vpack.c.b16 %v846, %v845
      %v867 = vpack.c.b16 %v847, %v847
      %v868 = vpack.c.b16 %v849, %v848
      %v869 = vpack.c.b16 %v850, %v850
      %v870 = vpack.c.b16 %v852, %v851
      %v871 = vpack.c.b16 %v853, %v853
      %v872 = vpack.c.b16 %v855, %v854
      %v873 = vpack.c.b16 %v856, %v856
      %v874 = vpack.c.b16 %v858, %v857
      %v875 = vpack.c.b16 %v859, %v859
      %892 = vst [vmem:[%s291] sm:$0xff] %v860
      %893 = vst [vmem:[%s291 + $0x8] sm:$0xf] %v861
      %894 = vst [vmem:[%s291 + $0xc] sm:$0xff] %v862
      %895 = vst [vmem:[%s291 + $0x14] sm:$0xf] %v863
      %896 = vst [vmem:[%s291 + $0x18] sm:$0xff] %v864
      %897 = vst [vmem:[%s291 + $0x20] sm:$0xf] %v865
      %898 = vst [vmem:[%s291 + $0x24] sm:$0xff] %v866
      %899 = vst [vmem:[%s291 + $0x2c] sm:$0xf] %v867
      %900 = vst [vmem:[%s291 + $0x30] sm:$0xff] %v868
      %901 = vst [vmem:[%s291 + $0x38] sm:$0xf] %v869
      %902 = vst [vmem:[%s291 + $0x3c] sm:$0xff] %v870
      %903 = vst [vmem:[%s291 + $0x44] sm:$0xf] %v871
      %904 = vst [vmem:[%s291 + $0x48] sm:$0xff] %v872
      %905 = vst [vmem:[%s291 + $0x50] sm:$0xf] %v873
      %906 = vst [vmem:[%s291 + $0x54] sm:$0xff] %v874
      %907 = vst [vmem:[%s291 + $0x5c] sm:$0xf] %v875
      %s908 = smul.u32 8, %s20
      %s909 = smul.u32 3, %s21
      %p910 = scmp.lt.s32.totalorder %s908, 15
      %s911 = scalar_select %p910, %s908, 15
      %p912 = scmp.lt.s32.totalorder %s909, 2
      %s913 = scalar_select %p912, %s909, 2
      %s914 = smul.addr %s911, 3
      %s915 = sadd.s32 %s913, %s914
      %s916 = smul.addr %s915, 4
      %s917 = scalar_lea.vmem %s5, %s916
      // Predicated region
      $region45: #{block_forward.4} parent=39 // pred_check
        %p918 = pneg %p168
      $region46: #{block_forward.4} parent=39 // pred_check_branch
        %920 = sbr.rel (%p918) target = $region48
      $region47: #{block_forward.4} parent=39 // pred_region
        %s921 = smul.u32 8, %s20
        %s922 = smul.u32 3, %s21
      $region48: #{block_forward.4} parent=39 // pred_fallthru
        _
    $region40: #{block_forward.4} parent=5 // pred_fallthru
      _
    %p923 = scmp.le.s32.totalorder 2, %s11
    // Predicated region
    $region49: #{block_forward.4} parent=5 // pred_check
      %p924 = pneg %p923
    $region50: #{block_forward.4} parent=5 // pred_check_branch
      %926 = sbr.rel (%p924) target = $region52
    $region51: #{block_forward.4} parent=5 // pred_region
      %s927 = ssub.s32 %s11, 2
      // Predicated region
      $region53: #{block_forward.4} parent=51 // pred_check
        %p928 = pneg %p174
      $region54: #{block_forward.4} parent=51 // pred_check_branch
        %930 = sbr.rel (%p928) target = $region56
      $region55: #{block_forward.4} parent=51 // pred_region
        %s931 = smul.u32 8, %s22
        %s932 = smul.u32 3, %s23
        %p933 = scmp.lt.s32.totalorder %s931, 15
        %s934 = scalar_select %p933, %s931, 15
        %p935 = scmp.lt.s32.totalorder %s932, 2
        %s936 = scalar_select %p935, %s932, 2
        %s937 = smul.addr %s934, 3
        %s938 = sadd.s32 %s936, %s937
        %s939 = smul.addr %s938, 4
        %s940 = scalar_lea.vmem %s5, %s939
      $region56: #{block_forward.4} parent=51 // pred_fallthru
        _
    $region52: #{block_forward.4} parent=5 // pred_fallthru
      _
  $region6: #{block_forward.4} parent=0 // loop_footer
    %s15 = sadd.s32 1, %s11
  $region7: #{block_forward.4} parent=0 // loop_footer_branch
    %10 = sbr.rel target = $region3
  $region8: #{block_forward.4} parent=0 // loop_exit
    _

// kernel: block_forward.6
$region0: #{block_forward.6}
  #allocation0 [shape = 'u32[]', space=smem, size = 0x4, offset = 0x4, fixed_abs, tag = 'smem constant byte address 0x4 - core index']
  #allocation1 [shape = 'u32[144,128]{1,0:T(1,128)}', space=vmem, size = 0x12000, scoped, tag = 'internal scratch']
  #allocation2 [shape = 'bf16[64,128]{1,0:T(8,128)(2,1)}', space=vmem, size = 0x4000, scoped, tag = 'scratch operand']
  %s0 = inlined_call_operand.vmem [shape: f32[128,128], index: 0, kind: input, shape index: {}]
  %s1 = inlined_call_operand.vmem [shape: f32[1,128], index: 1, kind: input, shape index: {}]
  %s2 = inlined_call_operand.vmem [shape: f32[1,128], index: 2, kind: input, shape index: {}]
  %s3 = inlined_call_operand.vmem [shape: bf16[128,512], index: 3, kind: input, shape index: {}]
  %s4 = inlined_call_operand.vmem [shape: f32[1,512], index: 4, kind: input, shape index: {}]
  %s5 = inlined_call_operand.vmem [shape: bf16[128,512], index: 5, kind: output, shape index: {}]
  %s6 = sld [smem:[#allocation0]]
  $region57: #{block_forward.6} parent=0
    _
  %s8 = ssub.s32 1, %s6
  %s9 = scalar_select 0, %s8, %s6
  loop: start=0, step=1, limit=4
  $region2: #{block_forward.6} parent=0 // loop_pre_header
    _
  $region3: #{block_forward.6} parent=0 // loop_header
    %s11 = sphi 0, %s15
    %p12 = scmp.ge.s32.totalorder %s11, 4
    %s18 = sphi 0, %s30
    %s19 = sphi 0, %s26
    %s20 = sphi 0, %s18
    %s21 = sphi 0, %s19
    %s22 = sphi 0, %s20
    %s23 = sphi 0, %s21
    %s33 = sphi 0, %s35
    %s36 = sphi 0, %s33
    %s37 = sphi 0, %s36
    %s53 = sphi 0, %s37
    %s57 = sphi 0, %s57
    %s59 = sphi 0, %s57
    %s60 = sphi 0, %s59
    %s74 = sphi 0, %s60
    %s78 = sphi 0, %s78
    %s80 = sphi 0, %s78
    %s81 = sphi 0, %s80
    %s95 = sphi 0, %s81
    %s101 = sphi 0, %s103
    %s104 = sphi 0, %s101
    %s105 = sphi 0, %s104
    %s121 = sphi 0, %s105
    %s127 = sphi 0, %s129
    %s130 = sphi 0, %s127
    %s131 = sphi 0, %s130
    %s147 = sphi 0, %s131
    %s155 = sphi 0, %s157
    %s158 = sphi 0, %s155
    %s159 = sphi 0, %s158
    %s175 = sphi 0, %s159
  $region4: #{block_forward.6} parent=0 // loop_header_branch
    %14 = sbr.rel (%p12) target = $region8
  $region5: #{block_forward.6} parent=0 // loop_body
    %s16 = ssub.s32 %s11, 1
    %s17 = ssub.s32 %s11, 2
    %s24 = sadd.s32 1, %s19
    %p25 = scmp.ge.s32.totalorder %s24, 1
    %s26 = scalar_select %p25, 0, %s24
    %s27 = sadd.s32 1, %s18
    %s28 = scalar_select %p25, %s27, %s18
    %p29 = scmp.ge.s32.totalorder %s28, 2
    %s30 = scalar_select %p29, 0, %s28
    %s31 = ssub.s32 %s18, %s30
    %p32 = scmp.eq.s32.totalorder %s31, 0
    %s34 = sadd.s32 %s33, 1
    %s35 = scalar_select %p32, %s33, %s34
    %p38 = pneg %p32
    %p39 = scmp.eq.s32.totalorder %s11, 1
    %p40 = por %p38, %p39
    %p41 = scmp.ne.s32.totalorder %s33, %s36
    %p42 = scmp.eq.s32.totalorder %s11, 0
    %p43 = por %p41, %p42
    %p44 = scmp.ne.s32.totalorder %s33, %s36
    %p45 = scmp.eq.s32.totalorder %s16, 1
    %p46 = por %p44, %p45
    %p47 = scmp.ne.s32.totalorder %s36, %s37
    %p48 = scmp.eq.s32.totalorder %s16, 0
    %p49 = por %p47, %p48
    %p50 = scmp.ne.s32.totalorder %s36, %s37
    %p51 = scmp.eq.s32.totalorder %s17, 1
    %p52 = por %p50, %p51
    %p54 = scmp.ne.s32.totalorder %s37, %s53
    %p55 = scmp.eq.s32.totalorder %s17, 0
    %p56 = por %p54, %p55
    %s58 = sadd.s32 %s57, 1
    %p61 = scmp.eq.s32.totalorder %s11, 1
    %p62 = scmp.ne.s32.totalorder %s57, %s59
    %p63 = scmp.eq.s32.totalorder %s11, 0
    %p64 = por %p62, %p63
    %p65 = scmp.ne.s32.totalorder %s57, %s59
    %p66 = scmp.eq.s32.totalorder %s16, 1
    %p67 = por %p65, %p66
    %p68 = scmp.ne.s32.totalorder %s59, %s60
    %p69 = scmp.eq.s32.totalorder %s16, 0
    %p70 = por %p68, %p69
    %p71 = scmp.ne.s32.totalorder %s59, %s60
    %p72 = scmp.eq.s32.totalorder %s17, 1
    %p73 = por %p71, %p72
    %p75 = scmp.ne.s32.totalorder %s60, %s74
    %p76 = scmp.eq.s32.totalorder %s17, 0
    %p77 = por %p75, %p76
    %s79 = sadd.s32 %s78, 1
    %p82 = scmp.eq.s32.totalorder %s11, 1
    %p83 = scmp.ne.s32.totalorder %s78, %s80
    %p84 = scmp.eq.s32.totalorder %s11, 0
    %p85 = por %p83, %p84
    %p86 = scmp.ne.s32.totalorder %s78, %s80
    %p87 = scmp.eq.s32.totalorder %s16, 1
    %p88 = por %p86, %p87
    %p89 = scmp.ne.s32.totalorder %s80, %s81
    %p90 = scmp.eq.s32.totalorder %s16, 0
    %p91 = por %p89, %p90
    %p92 = scmp.ne.s32.totalorder %s80, %s81
    %p93 = scmp.eq.s32.totalorder %s17, 1
    %p94 = por %p92, %p93
    %p96 = scmp.ne.s32.totalorder %s81, %s95
    %p97 = scmp.eq.s32.totalorder %s17, 0
    %p98 = por %p96, %p97
    %s99 = ssub.s32 %s19, %s26
    %p100 = scmp.eq.s32.totalorder %s99, 0
    %s102 = sadd.s32 %s101, 1
    %s103 = scalar_select %p100, %s101, %s102
    %p106 = pneg %p100
    %p107 = scmp.eq.s32.totalorder %s11, 1
    %p108 = por %p106, %p107
    %p109 = scmp.ne.s32.totalorder %s101, %s104
    %p110 = scmp.eq.s32.totalorder %s11, 0
    %p111 = por %p109, %p110
    %p112 = scmp.ne.s32.totalorder %s101, %s104
    %p113 = scmp.eq.s32.totalorder %s16, 1
    %p114 = por %p112, %p113
    %p115 = scmp.ne.s32.totalorder %s104, %s105
    %p116 = scmp.eq.s32.totalorder %s16, 0
    %p117 = por %p115, %p116
    %p118 = scmp.ne.s32.totalorder %s104, %s105
    %p119 = scmp.eq.s32.totalorder %s17, 1
    %p120 = por %p118, %p119
    %p122 = scmp.ne.s32.totalorder %s105, %s121
    %p123 = scmp.eq.s32.totalorder %s17, 0
    %p124 = por %p122, %p123
    %s125 = ssub.s32 %s19, %s26
    %p126 = scmp.eq.s32.totalorder %s125, 0
    %s128 = sadd.s32 %s127, 1
    %s129 = scalar_select %p126, %s127, %s128
    %p132 = pneg %p126
    %p133 = scmp.eq.s32.totalorder %s11, 1
    %p134 = por %p132, %p133
    %p135 = scmp.ne.s32.totalorder %s127, %s130
    %p136 = scmp.eq.s32.totalorder %s11, 0
    %p137 = por %p135, %p136
    %p138 = scmp.ne.s32.totalorder %s127, %s130
    %p139 = scmp.eq.s32.totalorder %s16, 1
    %p140 = por %p138, %p139
    %p141 = scmp.ne.s32.totalorder %s130, %s131
    %p142 = scmp.eq.s32.totalorder %s16, 0
    %p143 = por %p141, %p142
    %p144 = scmp.ne.s32.totalorder %s130, %s131
    %p145 = scmp.eq.s32.totalorder %s17, 1
    %p146 = por %p144, %p145
    %p148 = scmp.ne.s32.totalorder %s131, %s147
    %p149 = scmp.eq.s32.totalorder %s17, 0
    %p150 = por %p148, %p149
    %s151 = ssub.s32 %s18, %s30
    %s152 = ssub.s32 %s19, %s26
    %s153 = sor.u32 %s151, %s152
    %p154 = scmp.eq.s32.totalorder %s153, 0
    %s156 = sadd.s32 %s155, 1
    %s157 = scalar_select %p154, %s155, %s156
    %p160 = pneg %p154
    %p161 = scmp.eq.s32.totalorder %s11, 1
    %p162 = por %p160, %p161
    %p163 = scmp.ne.s32.totalorder %s155, %s158
    %p164 = scmp.eq.s32.totalorder %s11, 0
    %p165 = por %p163, %p164
    %p166 = scmp.ne.s32.totalorder %s155, %s158
    %p167 = scmp.eq.s32.totalorder %s16, 1
    %p168 = por %p166, %p167
    %p169 = scmp.ne.s32.totalorder %s158, %s159
    %p170 = scmp.eq.s32.totalorder %s16, 0
    %p171 = por %p169, %p170
    %p172 = scmp.ne.s32.totalorder %s158, %s159
    %p173 = scmp.eq.s32.totalorder %s17, 1
    %p174 = por %p172, %p173
    %p176 = scmp.ne.s32.totalorder %s159, %s175
    %p177 = scmp.eq.s32.totalorder %s17, 0
    %p178 = por %p176, %p177
    %p179 = scmp.le.s32.totalorder 1, %s11
    %p180 = scmp.lt.s32.totalorder %s11, 3
    %p181 = pnand %p179, %p180
    %p182 = pneg %p181
    // Predicated region
    $region9: #{block_forward.6} parent=5 // pred_check
      _
    $region10: #{block_forward.6} parent=5 // pred_check_branch
      %184 = sbr.rel (%p181) target = $region12
    $region11: #{block_forward.6} parent=5 // pred_region
      %s185 = ssub.s32 %s11, 1
      // Predicated region
      $region13: #{block_forward.6} parent=11 // pred_check
        %p186 = pneg %p70
      $region14: #{block_forward.6} parent=11 // pred_check_branch
        %188 = sbr.rel (%p186) target = $region16
      $region15: #{block_forward.6} parent=11 // pred_region
        _
      $region16: #{block_forward.6} parent=11 // pred_fallthru
        _
      // Predicated region
      $region17: #{block_forward.6} parent=11 // pred_check
        %p189 = pneg %p91
      $region18: #{block_forward.6} parent=11 // pred_check_branch
        %191 = sbr.rel (%p189) target = $region20
      $region19: #{block_forward.6} parent=11 // pred_region
        _
      $region20: #{block_forward.6} parent=11 // pred_fallthru
        _
      // Predicated region
      $region21: #{block_forward.6} parent=11 // pred_check
        %p192 = pneg %p117
      $region22: #{block_forward.6} parent=11 // pred_check_branch
        %194 = sbr.rel (%p192) target = $region24
      $region23: #{block_forward.6} parent=11 // pred_region
        %s195 = smul.u32 4, %s21
        %p196 = scmp.lt.s32.totalorder %s195, 3
        %s197 = scalar_select %p196, %s195, 3
        %s198 = smul.addr %s197, 4
        %s199 = scalar_lea.vmem %s3, %s198
        %s200 = smul.u32 4, %s21
      $region24: #{block_forward.6} parent=11 // pred_fallthru
        _
      // Predicated region
      $region25: #{block_forward.6} parent=11 // pred_check
        %p201 = pneg %p143
      $region26: #{block_forward.6} parent=11 // pred_check_branch
        %203 = sbr.rel (%p201) target = $region28
      $region27: #{block_forward.6} parent=11 // pred_region
        %s204 = smul.u32 4, %s21
        %p205 = scmp.lt.s32.totalorder %s204, 3
        %s206 = scalar_select %p205, %s204, 3
        %s207 = scalar_lea.vmem %s4, %s206
        %s208 = smul.u32 4, %s21
      $region28: #{block_forward.6} parent=11 // pred_fallthru
        _
    $region12: #{block_forward.6} parent=5 // pred_fallthru
      _
    %p209 = scmp.lt.s32.totalorder %s11, 2
    // Predicated region
    $region29: #{block_forward.6} parent=5 // pred_check
      %p210 = pneg %p209
    $region30: #{block_forward.6} parent=5 // pred_check_branch
      %212 = sbr.rel (%p210) target = $region32
    $region31: #{block_forward.6} parent=5 // pred_region
      // Predicated region
      $region33: #{block_forward.6} parent=31 // pred_check
        %p213 = pneg %p43
      $region34: #{block_forward.6} parent=31 // pred_check_branch
        %215 = sbr.rel (%p213) target = $region36
      $region35: #{block_forward.6} parent=31 // pred_region
        %s216 = smul.u32 8, %s18
        %p217 = scmp.lt.s32.totalorder %s216, 15
        %s218 = scalar_select %p217, %s216, 15
        %s219 = smul.addr %s218, 8
        %s220 = scalar_lea.vmem %s0, %s219
        %s221 = smul.u32 8, %s18
      $region36: #{block_forward.6} parent=31 // pred_fallthru
        _
    $region32: #{block_forward.6} parent=5 // pred_fallthru
      _
    %p222 = scmp.le.s32.totalorder 1, %s11
    %p223 = scmp.lt.s32.totalorder %s11, 3
    %p224 = pnand %p222, %p223
    %p225 = pneg %p224
    // Predicated region
    $region37: #{block_forward.6} parent=5 // pred_check
      _
    $region38: #{block_forward.6} parent=5 // pred_check_branch
      %227 = sbr.rel (%p224) target = $region40
    $region39: #{block_forward.6} parent=5 // pred_region
      %s228 = ssub.s32 %s11, 1
      %s229 = smul.u32 8, %s20
      %p230 = scmp.lt.s32.totalorder %s229, 15
      %s231 = scalar_select %p230, %s229, 15
      %s232 = smul.addr %s231, 8
      %s233 = scalar_lea.vmem %s0, %s232
      %p234 = pneg %p49
      %p235 = pneg %p46
      %p236 = pneg %p70
      %p237 = pneg %p67
      %p238 = pneg %p91
      %p239 = pneg %p88
      %s240 = smul.u32 4, %s21
      %p241 = scmp.lt.s32.totalorder %s240, 3
      %s242 = scalar_select %p241, %s240, 3
      %s243 = smul.addr %s242, 4
      %s244 = scalar_lea.vmem %s3, %s243
      %p245 = pneg %p117
      %p246 = pneg %p114
      %s247 = smul.u32 4, %s21
      %p248 = scmp.lt.s32.totalorder %s247, 3
      %s249 = scalar_select %p248, %s247, 3
      %s250 = scalar_lea.vmem %s4, %s249
      %p251 = pneg %p143
      %p252 = pneg %p140
      %p253 = pneg %p171
      %p254 = pneg %p168
      %s255 = smul.u32 8, %s20
      %s256 = smul.u32 4, %s21
      %p257 = scmp.lt.s32.totalorder %s255, 15
      %s258 = scalar_select %p257, %s255, 15
      %p259 = scmp.lt.s32.totalorder %s256, 3
      %s260 = scalar_select %p259, %s256, 3
      %s261 = smul.addr %s258, 4
      %s262 = sadd.s32 %s260, %s261
      %s263 = smul.addr %s262, 4
      %s264 = scalar_lea.vmem %s5, %s263
      %s265 = smul.u32 8, %s20
      %p266 = scmp.lt.s32.totalorder %s265, 15
      %s267 = scalar_select %p266, %s265, 15
      %s268 = smul.addr %s267, 8
      %s269 = scalar_lea.vmem %s0, %s268
      %s270 = smul.u32 8, %s20
      %s271 = smul.u32 4, %s21
      %p272 = scmp.lt.s32.totalorder %s271, 3
      %s273 = scalar_select %p272, %s271, 3
      %s274 = smul.addr %s273, 4
      %s275 = scalar_lea.vmem %s3, %s274
      %s276 = smul.u32 4, %s21
      %s277 = smul.u32 4, %s21
      %p278 = scmp.lt.s32.totalorder %s277, 3
      %s279 = scalar_select %p278, %s277, 3
      %s280 = scalar_lea.vmem %s4, %s279
      %s281 = smul.u32 4, %s21
      %s282 = smul.u32 8, %s20
      %s283 = smul.u32 4, %s21
      %p284 = scmp.lt.s32.totalorder %s282, 15
      %s285 = scalar_select %p284, %s282, 15
      %p286 = scmp.lt.s32.totalorder %s283, 3
      %s287 = scalar_select %p286, %s283, 3
      %s288 = smul.addr %s285, 4
      %s289 = sadd.s32 %s287, %s288
      %s290 = smul.addr %s289, 4
      %s291 = scalar_lea.vmem %s5, %s290
      %s292 = smul.u32 8, %s20
      %s293 = smul.u32 4, %s21
      %p295 = scmp.eq.s32.totalorder %s21, 0
      // Predicated region
      $region41: #{block_forward.6} parent=39 // pred_check
        %p296 = pneg %p295
      $region42: #{block_forward.6} parent=39 // pred_check_branch
        %298 = sbr.rel (%p296) target = $region44
      $region43: #{block_forward.6} parent=39 // pred_region
        %v299 = vld [vmem:[%s269] sm:$0xff]
        %v300 = vld [vmem:[%s269 + $0x8] sm:$0xff]
        %v301 = vld [vmem:[%s269 + $0x10] sm:$0xff]
        %v302 = vld [vmem:[%s269 + $0x18] sm:$0xff]
        %v303 = vld [vmem:[%s269 + $0x20] sm:$0xff]
        %v304 = vld [vmem:[%s269 + $0x28] sm:$0xff]
        %v305 = vld [vmem:[%s269 + $0x30] sm:$0xff]
        %v306 = vld [vmem:[%s269 + $0x38] sm:$0xff]
        %307 = vadd.xlane.f32.xlu0 %v299
        %v308 = vpop.xlane.xlu0 %307
        %309 = vadd.xlane.f32.xlu0 %v300
        %v310 = vpop.xlane.xlu0 %309
        %311 = vadd.xlane.f32.xlu0 %v301
        %v312 = vpop.xlane.xlu0 %311
        %313 = vadd.xlane.f32.xlu0 %v302
        %v314 = vpop.xlane.xlu0 %313
        %315 = vadd.xlane.f32.xlu0 %v303
        %v316 = vpop.xlane.xlu0 %315
        %317 = vadd.xlane.f32.xlu0 %v304
        %v318 = vpop.xlane.xlu0 %317
        %319 = vadd.xlane.f32.xlu0 %v305
        %v320 = vpop.xlane.xlu0 %319
        %321 = vadd.xlane.f32.xlu0 %v306
        %v322 = vpop.xlane.xlu0 %321
        %v323 = vmul.f32 %v308, 0.0078125
        %v324 = vmul.f32 %v310, 0.0078125
        %v325 = vmul.f32 %v312, 0.0078125
        %v326 = vmul.f32 %v314, 0.0078125
        %v327 = vmul.f32 %v316, 0.0078125
        %v328 = vmul.f32 %v318, 0.0078125
        %v329 = vmul.f32 %v320, 0.0078125
        %v330 = vmul.f32 %v322, 0.0078125
        %v331 = vsub.f32 %v299, %v323
        %v332 = vsub.f32 %v300, %v324
        %v333 = vsub.f32 %v301, %v325
        %v334 = vsub.f32 %v302, %v326
        %v335 = vsub.f32 %v303, %v327
        %v336 = vsub.f32 %v304, %v328
        %v337 = vsub.f32 %v305, %v329
        %v338 = vsub.f32 %v306, %v330
        %v339 = vmul.f32 %v331, %v331
        %v340 = vmul.f32 %v332, %v332
        %v341 = vmul.f32 %v333, %v333
        %v342 = vmul.f32 %v334, %v334
        %v343 = vmul.f32 %v335, %v335
        %v344 = vmul.f32 %v336, %v336
        %v345 = vmul.f32 %v337, %v337
        %v346 = vmul.f32 %v338, %v338
        %347 = vadd.xlane.f32.xlu0 %v339
        %v348 = vpop.xlane.xlu0 %347
        %349 = vadd.xlane.f32.xlu0 %v340
        %v350 = vpop.xlane.xlu0 %349
        %351 = vadd.xlane.f32.xlu0 %v341
        %v352 = vpop.xlane.xlu0 %351
        %353 = vadd.xlane.f32.xlu0 %v342
        %v354 = vpop.xlane.xlu0 %353
        %355 = vadd.xlane.f32.xlu0 %v343
        %v356 = vpop.xlane.xlu0 %355
        %357 = vadd.xlane.f32.xlu0 %v344
        %v358 = vpop.xlane.xlu0 %357
        %359 = vadd.xlane.f32.xlu0 %v345
        %v360 = vpop.xlane.xlu0 %359
        %361 = vadd.xlane.f32.xlu0 %v346
        %v362 = vpop.xlane.xlu0 %361
        %v363 = vmul.f32 %v348, 0.0078125
        %v364 = vmul.f32 %v350, 0.0078125
        %v365 = vmul.f32 %v352, 0.0078125
        %v366 = vmul.f32 %v354, 0.0078125
        %v367 = vmul.f32 %v356, 0.0078125
        %v368 = vmul.f32 %v358, 0.0078125
        %v369 = vmul.f32 %v360, 0.0078125
        %v370 = vmul.f32 %v362, 0.0078125
        %v371 = vadd.f32 %v363, 1e-05
        %v372 = vadd.f32 %v364, 1e-05
        %v373 = vadd.f32 %v365, 1e-05
        %v374 = vadd.f32 %v366, 1e-05
        %v375 = vadd.f32 %v367, 1e-05
        %v376 = vadd.f32 %v368, 1e-05
        %v377 = vadd.f32 %v369, 1e-05
        %v378 = vadd.f32 %v370, 1e-05
        %v379 = vrsqrt.pop %v371
        %v380 = vrsqrt.pop %v372
        %v381 = vrsqrt.pop %v373
        %v382 = vrsqrt.pop %v374
        %v383 = vrsqrt.pop %v375
        %v384 = vrsqrt.pop %v376
        %v385 = vrsqrt.pop %v377
        %v386 = vrsqrt.pop %v378
        %v387 = vmul.f32 %v331, %v379
        %v388 = vmul.f32 %v332, %v380
        %v389 = vmul.f32 %v333, %v381
        %v390 = vmul.f32 %v334, %v382
        %v391 = vmul.f32 %v335, %v383
        %v392 = vmul.f32 %v336, %v384
        %v393 = vmul.f32 %v337, %v385
        %v394 = vmul.f32 %v338, %v386
        %v395 = vld [vmem:[%s1] sm:$0x1]
        %v397 = vlaneseq
        %v398 = vshrl.u32 %v397, 7
        %v399 = vsub.s32 0, %v398
        %v400 = vrot.slane %v395, %v399
        %v402 = vmul.f32 %v387, %v400
        %v403 = vmul.f32 %v388, %v400
        %v404 = vmul.f32 %v389, %v400
        %v405 = vmul.f32 %v390, %v400
        %v406 = vmul.f32 %v391, %v400
        %v407 = vmul.f32 %v392, %v400
        %v408 = vmul.f32 %v393, %v400
        %v409 = vmul.f32 %v394, %v400
        %v410 = vld [vmem:[%s2] sm:$0x1]
        %v412 = vlaneseq
        %v413 = vshrl.u32 %v412, 7
        %v414 = vsub.s32 0, %v413
        %v415 = vrot.slane %v410, %v414
        %v417 = vadd.f32 %v402, %v415
        %v418 = vadd.f32 %v403, %v415
        %v419 = vadd.f32 %v404, %v415
        %v420 = vadd.f32 %v405, %v415
        %v421 = vadd.f32 %v406, %v415
        %v422 = vadd.f32 %v407, %v415
        %v423 = vadd.f32 %v408, %v415
        %v424 = vadd.f32 %v409, %v415
        %v425 = vpack.c.bf16 %v418, %v417
        %v426 = vpack.c.bf16 %v420, %v419
        %v427 = vpack.c.bf16 %v422, %v421
        %v428 = vpack.c.bf16 %v424, %v423
        %v433 = vunpack.c.l.b16 %v425
        %v434 = vunpack.c.h.b16 %v425
        %v435 = vunpack.c.l.b16 %v426
        %v436 = vunpack.c.h.b16 %v426
        %v437 = vunpack.c.l.b16 %v427
        %v438 = vunpack.c.h.b16 %v427
        %v439 = vunpack.c.l.b16 %v428
        %v440 = vunpack.c.h.b16 %v428
        %v441 = vpack.c.b16 %v433, %v433
        %v442 = vpack.c.b16 %v434, %v434
        %v443 = vpack.c.b16 %v435, %v435
        %v444 = vpack.c.b16 %v436, %v436
        %v445 = vpack.c.b16 %v437, %v437
        %v446 = vpack.c.b16 %v438, %v438
        %v447 = vpack.c.b16 %v439, %v439
        %v448 = vpack.c.b16 %v440, %v440
        %457 = vst [vmem:[#allocation2] sm:$0xf] %v441
        %458 = vst [vmem:[#allocation2 + $0x4] sm:$0xf] %v442
        %459 = vst [vmem:[#allocation2 + $0x8] sm:$0xf] %v443
        %460 = vst [vmem:[#allocation2 + $0xc] sm:$0xf] %v444
        %461 = vst [vmem:[#allocation2 + $0x10] sm:$0xf] %v445
        %462 = vst [vmem:[#allocation2 + $0x14] sm:$0xf] %v446
        %463 = vst [vmem:[#allocation2 + $0x18] sm:$0xf] %v447
        %464 = vst [vmem:[#allocation2 + $0x1c] sm:$0xf] %v448
      $region44: #{block_forward.6} parent=39 // pred_fallthru
        _
      %v465 = vld [vmem:[#allocation2] sm:$0xf]
      %v466 = vld [vmem:[#allocation2 + $0x4] sm:$0xf]
      %v467 = vld [vmem:[#allocation2 + $0x8] sm:$0xf]
      %v468 = vld [vmem:[#allocation2 + $0xc] sm:$0xf]
      %v469 = vld [vmem:[#allocation2 + $0x10] sm:$0xf]
      %v470 = vld [vmem:[#allocation2 + $0x14] sm:$0xf]
      %v471 = vld [vmem:[#allocation2 + $0x18] sm:$0xf]
      %v472 = vld [vmem:[#allocation2 + $0x1c] sm:$0xf]
      %v473 = vld [vmem:[%s275] sm:$0xff]
      %v474 = vld [vmem:[%s275 + $0x8] sm:$0xff]
      %v475 = vld [vmem:[%s275 + $0x10] sm:$0xff]
      %v476 = vld [vmem:[%s275 + $0x18] sm:$0xff]
      %v477 = vld [vmem:[%s275 + $0x20] sm:$0xff]
      %v478 = vld [vmem:[%s275 + $0x28] sm:$0xff]
      %v479 = vld [vmem:[%s275 + $0x30] sm:$0xff]
      %v480 = vld [vmem:[%s275 + $0x38] sm:$0xff]
      %v481 = vld [vmem:[%s275 + $0x40] sm:$0xff]
      %v482 = vld [vmem:[%s275 + $0x48] sm:$0xff]
      %v483 = vld [vmem:[%s275 + $0x50] sm:$0xff]
      %v484 = vld [vmem:[%s275 + $0x58] sm:$0xff]
      %v485 = vld [vmem:[%s275 + $0x60] sm:$0xff]
      %v486 = vld [vmem:[%s275 + $0x68] sm:$0xff]
      %v487 = vld [vmem:[%s275 + $0x70] sm:$0xff]
      %v488 = vld [vmem:[%s275 + $0x78] sm:$0xff]
      %v489 = vld [vmem:[%s275 + $0x80] sm:$0xff]
      %v490 = vld [vmem:[%s275 + $0x88] sm:$0xff]
      %v491 = vld [vmem:[%s275 + $0x90] sm:$0xff]
      %v492 = vld [vmem:[%s275 + $0x98] sm:$0xff]
      %v493 = vld [vmem:[%s275 + $0xa0] sm:$0xff]
      %v494 = vld [vmem:[%s275 + $0xa8] sm:$0xff]
      %v495 = vld [vmem:[%s275 + $0xb0] sm:$0xff]
      %v496 = vld [vmem:[%s275 + $0xb8] sm:$0xff]
      %v497 = vld [vmem:[%s275 + $0xc0] sm:$0xff]
      %v498 = vld [vmem:[%s275 + $0xc8] sm:$0xff]
      %v499 = vld [vmem:[%s275 + $0xd0] sm:$0xff]
      %v500 = vld [vmem:[%s275 + $0xd8] sm:$0xff]
      %v501 = vld [vmem:[%s275 + $0xe0] sm:$0xff]
      %v502 = vld [vmem:[%s275 + $0xe8] sm:$0xff]
      %v503 = vld [vmem:[%s275 + $0xf0] sm:$0xff]
      %v504 = vld [vmem:[%s275 + $0xf8] sm:$0xff]
      %v505 = vld [vmem:[%s280] sm:$0xf]
      %v507 = vlaneseq
      %v508 = vshrl.u32 %v507, 7
      %v509 = vsub.s32 0, %v508
      %v510 = vrot.slane %v505, %v509
      %v511 = vlaneseq
      %v512 = vshrl.u32 %v511, 7
      %v513 = vsub.s32 1, %v512
      %v514 = vrot.slane %v505, %v513
      %v515 = vlaneseq
      %v516 = vshrl.u32 %v515, 7
      %v517 = vsub.s32 2, %v516
      %v518 = vrot.slane %v505, %v517
      %v519 = vlaneseq
      %v520 = vshrl.u32 %v519, 7
      %v521 = vsub.s32 3, %v520
      %v522 = vrot.slane %v505, %v521
      %v535 = vunpack.c.l.b16 %v465
      %v536 = vunpack.c.l.b16 %v466
      %v537 = vunpack.c.l.b16 %v467
      %v538 = vunpack.c.l.b16 %v468
      %v539 = vunpack.c.l.b16 %v469
      %v540 = vunpack.c.l.b16 %v470
      %v541 = vunpack.c.l.b16 %v471
      %v542 = vunpack.c.l.b16 %v472
      %v543 = vpack.c.b16 %v536, %v535
      %v544 = vpack.c.b16 %v538, %v537
      %v545 = vpack.c.b16 %v540, %v539
      %v546 = vpack.c.b16 %v542, %v541
      %v583 = vunpack.c.l.b16 %v473
      %v584 = vunpack.c.h.b16 %v473
      %v585 = vunpack.c.l.b16 %v474
      %v586 = vunpack.c.h.b16 %v474
      %v587 = vunpack.c.l.b16 %v475
      %v588 = vunpack.c.h.b16 %v475
      %v589 = vunpack.c.l.b16 %v476
      %v590 = vunpack.c.h.b16 %v476
      %v591 = vunpack.c.l.b16 %v477
      %v592 = vunpack.c.h.b16 %v477
      %v593 = vunpack.c.l.b16 %v478
      %v594 = vunpack.c.h.b16 %v478
      %v595 = vunpack.c.l.b16 %v479
      %v596 = vunpack.c.h.b16 %v479
      %v597 = vunpack.c.l.b16 %v480
      %v598 = vunpack.c.h.b16 %v480
      %v599 = vunpack.c.l.b16 %v481
      %v600 = vunpack.c.h.b16 %v481
      %v601 = vunpack.c.l.b16 %v482
      %v602 = vunpack.c.h.b16 %v482
      %v603 = vunpack.c.l.b16 %v483
      %v604 = vunpack.c.h.b16 %v483
      %v605 = vunpack.c.l.b16 %v484
      %v606 = vunpack.c.h.b16 %v484
      %v607 = vunpack.c.l.b16 %v485
      %v608 = vunpack.c.h.b16 %v485
      %v609 = vunpack.c.l.b16 %v486
      %v610 = vunpack.c.h.b16 %v486
      %v611 = vunpack.c.l.b16 %v487
      %v612 = vunpack.c.h.b16 %v487
      %v613 = vunpack.c.l.b16 %v488
      %v614 = vunpack.c.h.b16 %v488
      %v615 = vunpack.c.l.b16 %v489
      %v616 = vunpack.c.h.b16 %v489
      %v617 = vunpack.c.l.b16 %v490
      %v618 = vunpack.c.h.b16 %v490
      %v619 = vunpack.c.l.b16 %v491
      %v620 = vunpack.c.h.b16 %v491
      %v621 = vunpack.c.l.b16 %v492
      %v622 = vunpack.c.h.b16 %v492
      %v623 = vunpack.c.l.b16 %v493
      %v624 = vunpack.c.h.b16 %v493
      %v625 = vunpack.c.l.b16 %v494
      %v626 = vunpack.c.h.b16 %v494
      %v627 = vunpack.c.l.b16 %v495
      %v628 = vunpack.c.h.b16 %v495
      %v629 = vunpack.c.l.b16 %v496
      %v630 = vunpack.c.h.b16 %v496
      %v631 = vunpack.c.l.b16 %v497
      %v632 = vunpack.c.h.b16 %v497
      %v633 = vunpack.c.l.b16 %v498
      %v634 = vunpack.c.h.b16 %v498
      %v635 = vunpack.c.l.b16 %v499
      %v636 = vunpack.c.h.b16 %v499
      %v637 = vunpack.c.l.b16 %v500
      %v638 = vunpack.c.h.b16 %v500
      %v639 = vunpack.c.l.b16 %v501
      %v640 = vunpack.c.h.b16 %v501
      %v641 = vunpack.c.l.b16 %v502
      %v642 = vunpack.c.h.b16 %v502
      %v643 = vunpack.c.l.b16 %v503
      %v644 = vunpack.c.h.b16 %v503
      %v645 = vunpack.c.l.b16 %v504
      %v646 = vunpack.c.h.b16 %v504
      %v647 = vpack.c.b16 %v587, %v583
      %v648 = vpack.c.b16 %v588, %v584
      %v649 = vpack.c.b16 %v589, %v585
      %v650 = vpack.c.b16 %v590, %v586
      %v651 = vpack.c.b16 %v595, %v591
      %v652 = vpack.c.b16 %v596, %v592
      %v653 = vpack.c.b16 %v597, %v593
      %v654 = vpack.c.b16 %v598, %v594
      %v655 = vpack.c.b16 %v603, %v599
      %v656 = vpack.c.b16 %v604, %v600
      %v657 = vpack.c.b16 %v605, %v601
      %v658 = vpack.c.b16 %v606, %v602
      %v659 = vpack.c.b16 %v611, %v607
      %v660 = vpack.c.b16 %v612, %v608
      %v661 = vpack.c.b16 %v613, %v609
      %v662 = vpack.c.b16 %v614, %v610
      %v663 = vpack.c.b16 %v619, %v615
      %v664 = vpack.c.b16 %v620, %v616
      %v665 = vpack.c.b16 %v621, %v617
      %v666 = vpack.c.b16 %v622, %v618
      %v667 = vpack.c.b16 %v627, %v623
      %v668 = vpack.c.b16 %v628, %v624
      %v669 = vpack.c.b16 %v629, %v625
      %v670 = vpack.c.b16 %v630, %v626
      %v671 = vpack.c.b16 %v635, %v631
      %v672 = vpack.c.b16 %v636, %v632
      %v673 = vpack.c.b16 %v637, %v633
      %v674 = vpack.c.b16 %v638, %v634
      %v675 = vpack.c.b16 %v643, %v639
      %v676 = vpack.c.b16 %v644, %v640
      %v677 = vpack.c.b16 %v645, %v641
      %v678 = vpack.c.b16 %v646, %v642
      %711 = vmatprep.subr.bf16.mxu0 %v676
      %712 = vmatpush1.bf16.msra.mxu0 %v675
      %713 = vmatprep.subr.bf16.mxu0 %v672
      %714 = vmatpush1.bf16.msra.mxu0 %v671
      %715 = vmatprep.subr.bf16.mxu0 %v668
      %716 = vmatpush1.bf16.msra.mxu0 %v667
      %717 = vmatprep.subr.bf16.mxu0 %v664
      %718 = vmatpush1.bf16.msra.mxu0 %v663
      %719 = vmatprep.subr.bf16.mxu0 %v660
      %720 = vmatpush1.bf16.msra.mxu0 %v659
      %721 = vmatprep.subr.bf16.mxu0 %v656
      %722 = vmatpush1.bf16.msra.mxu0 %v655
      %723 = vmatprep.subr.bf16.mxu0 %v652
      %724 = vmatpush1.bf16.msra.mxu0 %v651
      %725 = vmatprep.subr.bf16.mxu0 %v648
      %726 = vmatpush1.bf16.msra.mxu0 %v647
      %727 = vmatprep.subr.bf16.mxu0 0
      %728 = vmatpush2.bf16.msra.mxu0 0
      %729 = vmatprep.subr.bf16.mxu0 0
      %730 = vmatpush2.bf16.msra.mxu0 0
      %731 = vmatprep.subr.bf16.mxu0 0
      %732 = vmatpush2.bf16.msra.mxu0 0
      %733 = vmatprep.subr.bf16.mxu0 0
      %734 = vmatpush2.bf16.msra.mxu0 0
      %735 = vmatprep.subr.bf16.mxu0 0
      %736 = vmatpush2.bf16.msra.mxu0 0
      %737 = vmatprep.subr.bf16.mxu0 0
      %738 = vmatpush2.bf16.msra.mxu0 0
      %739 = vmatprep.subr.bf16.mxu0 0
      %740 = vmatpush2.bf16.msra.mxu0 0
      %741 = vmatprep.subr.bf16.mxu0 0
      %742 = vmatpush2.bf16.msra.mxu0 0
      %743 = vmatprep.mubr.bf16.mxu0 0
      %744 = vmatmul.mubr.bf16.gmra.mxu0 %v543
      %v745 = vpop.f32.mrf.mxu0
      %v746 = vadd.f32 %v510, %v745
      %v747 = vpop.f32.mrf.mxu0
      %v748 = vadd.f32 %v514, %v747
      %v749 = vpop.f32.mrf.mxu0
      %v750 = vadd.f32 %v510, %v749
      %v751 = vpop.f32.mrf.mxu0
      %v752 = vadd.f32 %v514, %v751
      %753 = vmatprep.mubr.bf16.mxu0 0
      %754 = vmatmul.mubr.bf16.gmra.mxu0 %v544
      %v755 = vpop.f32.mrf.mxu0
      %v756 = vadd.f32 %v510, %v755
      %v757 = vpop.f32.mrf.mxu0
      %v758 = vadd.f32 %v514, %v757
      %v759 = vpop.f32.mrf.mxu0
      %v760 = vadd.f32 %v510, %v759
      %v761 = vpop.f32.mrf.mxu0
      %v762 = vadd.f32 %v514, %v761
      %763 = vmatprep.mubr.bf16.mxu0 0
      %764 = vmatmul.mubr.bf16.gmra.mxu0 %v545
      %v765 = vpop.f32.mrf.mxu0
      %v766 = vadd.f32 %v510, %v765
      %v767 = vpop.f32.mrf.mxu0
      %v768 = vadd.f32 %v514, %v767
      %v769 = vpop.f32.mrf.mxu0
      %v770 = vadd.f32 %v510, %v769
      %v771 = vpop.f32.mrf.mxu0
      %v772 = vadd.f32 %v514, %v771
      %773 = vmatprep.mubr.bf16.mxu0 0
      %774 = vmatmul.mubr.bf16.gmra.mxu0 %v546
      %v775 = vpop.f32.mrf.mxu0
      %v776 = vadd.f32 %v510, %v775
      %v777 = vpop.f32.mrf.mxu0
      %v778 = vadd.f32 %v514, %v777
      %v779 = vpop.f32.mrf.mxu0
      %v780 = vadd.f32 %v510, %v779
      %v781 = vpop.f32.mrf.mxu0
      %v782 = vadd.f32 %v514, %v781
      %783 = vdwg.mxu0
      %784 = vmatprep.subr.bf16.mxu0 %v678
      %785 = vmatpush1.bf16.msra.mxu0 %v677
      %786 = vmatprep.subr.bf16.mxu0 %v674
      %787 = vmatpush1.bf16.msra.mxu0 %v673
      %788 = vmatprep.subr.bf16.mxu0 %v670
      %789 = vmatpush1.bf16.msra.mxu0 %v669
      %790 = vmatprep.subr.bf16.mxu0 %v666
      %791 = vmatpush1.bf16.msra.mxu0 %v665
      %792 = vmatprep.subr.bf16.mxu0 %v662
      %793 = vmatpush1.bf16.msra.mxu0 %v661
      %794 = vmatprep.subr.bf16.mxu0 %v658
      %795 = vmatpush1.bf16.msra.mxu0 %v657
      %796 = vmatprep.subr.bf16.mxu0 %v654
      %797 = vmatpush1.bf16.msra.mxu0 %v653
      %798 = vmatprep.subr.bf16.mxu0 %v650
      %799 = vmatpush1.bf16.msra.mxu0 %v649
      %800 = vmatprep.subr.bf16.mxu0 0
      %801 = vmatpush2.bf16.msra.mxu0 0
      %802 = vmatprep.subr.bf16.mxu0 0
      %803 = vmatpush2.bf16.msra.mxu0 0
      %804 = vmatprep.subr.bf16.mxu0 0
      %805 = vmatpush2.bf16.msra.mxu0 0
      %806 = vmatprep.subr.bf16.mxu0 0
      %807 = vmatpush2.bf16.msra.mxu0 0
      %808 = vmatprep.subr.bf16.mxu0 0
      %809 = vmatpush2.bf16.msra.mxu0 0
      %810 = vmatprep.subr.bf16.mxu0 0
      %811 = vmatpush2.bf16.msra.mxu0 0
      %812 = vmatprep.subr.bf16.mxu0 0
      %813 = vmatpush2.bf16.msra.mxu0 0
      %814 = vmatprep.subr.bf16.mxu0 0
      %815 = vmatpush2.bf16.msra.mxu0 0
      %816 = vmatprep.mubr.bf16.mxu0 0
      %817 = vmatmul.mubr.bf16.gmra.mxu0 %v543
      %v818 = vpop.f32.mrf.mxu0
      %v819 = vadd.f32 %v518, %v818
      %v820 = vpop.f32.mrf.mxu0
      %v821 = vadd.f32 %v522, %v820
      %v822 = vpop.f32.mrf.mxu0
      %v823 = vadd.f32 %v518, %v822
      %v824 = vpop.f32.mrf.mxu0
      %v825 = vadd.f32 %v522, %v824
      %826 = vmatprep.mubr.bf16.mxu0 0
      %827 = vmatmul.mubr.bf16.gmra.mxu0 %v544
      %v828 = vpop.f32.mrf.mxu0
      %v829 = vadd.f32 %v518, %v828
      %v830 = vpop.f32.mrf.mxu0
      %v831 = vadd.f32 %v522, %v830
      %v832 = vpop.f32.mrf.mxu0
      %v833 = vadd.f32 %v518, %v832
      %v834 = vpop.f32.mrf.mxu0
      %v835 = vadd.f32 %v522, %v834
      %836 = vmatprep.mubr.bf16.mxu0 0
      %837 = vmatmul.mubr.bf16.gmra.mxu0 %v545
      %v838 = vpop.f32.mrf.mxu0
      %v839 = vadd.f32 %v518, %v838
      %v840 = vpop.f32.mrf.mxu0
      %v841 = vadd.f32 %v522, %v840
      %v842 = vpop.f32.mrf.mxu0
      %v843 = vadd.f32 %v518, %v842
      %v844 = vpop.f32.mrf.mxu0
      %v845 = vadd.f32 %v522, %v844
      %846 = vmatprep.mubr.bf16.mxu0 0
      %847 = vmatmul.mubr.bf16.gmra.mxu0 %v546
      %v848 = vpop.f32.mrf.mxu0
      %v849 = vadd.f32 %v518, %v848
      %v850 = vpop.f32.mrf.mxu0
      %v851 = vadd.f32 %v522, %v850
      %v852 = vpop.f32.mrf.mxu0
      %v853 = vadd.f32 %v518, %v852
      %v854 = vpop.f32.mrf.mxu0
      %v855 = vadd.f32 %v522, %v854
      %856 = vdwg.mxu0
      %v857 = vmax.f32 %v746, 0.0
      %v858 = vmax.f32 %v748, 0.0
      %v859 = vmax.f32 %v819, 0.0
      %v860 = vmax.f32 %v821, 0.0
      %v861 = vmax.f32 %v750, 0.0
      %v862 = vmax.f32 %v752, 0.0
      %v863 = vmax.f32 %v823, 0.0
      %v864 = vmax.f32 %v825, 0.0
      %v865 = vmax.f32 %v756, 0.0
      %v866 = vmax.f32 %v758, 0.0
      %v867 = vmax.f32 %v829, 0.0
      %v868 = vmax.f32 %v831, 0.0
      %v869 = vmax.f32 %v760, 0.0
      %v870 = vmax.f32 %v762, 0.0
      %v871 = vmax.f32 %v833, 0.0
      %v872 = vmax.f32 %v835, 0.0
      %v873 = vmax.f32 %v766, 0.0
      %v874 = vmax.f32 %v768, 0.0
      %v875 = vmax.f32 %v839, 0.0
      %v876 = vmax.f32 %v841, 0.0
      %v877 = vmax.f32 %v770, 0.0
      %v878 = vmax.f32 %v772, 0.0
      %v879 = vmax.f32 %v843, 0.0
      %v880 = vmax.f32 %v845, 0.0
      %v881 = vmax.f32 %v776, 0.0
      %v882 = vmax.f32 %v778, 0.0
      %v883 = vmax.f32 %v849, 0.0
      %v884 = vmax.f32 %v851, 0.0
      %v885 = vmax.f32 %v780, 0.0
      %v886 = vmax.f32 %v782, 0.0
      %v887 = vmax.f32 %v853, 0.0
      %v888 = vmax.f32 %v855, 0.0
      %v889 = vpack.c.bf16 %v861, %v857
      %v890 = vpack.c.bf16 %v862, %v858
      %v891 = vpack.c.bf16 %v863, %v859
      %v892 = vpack.c.bf16 %v864, %v860
      %v893 = vpack.c.bf16 %v869, %v865
      %v894 = vpack.c.bf16 %v870, %v866
      %v895 = vpack.c.bf16 %v871, %v867
      %v896 = vpack.c.bf16 %v872, %v868
      %v897 = vpack.c.bf16 %v877, %v873
      %v898 = vpack.c.bf16 %v878, %v874
      %v899 = vpack.c.bf16 %v879, %v875
      %v900 = vpack.c.bf16 %v880, %v876
      %v901 = vpack.c.bf16 %v885, %v881
      %v902 = vpack.c.bf16 %v886, %v882
      %v903 = vpack.c.bf16 %v887, %v883
      %v904 = vpack.c.bf16 %v888, %v884
      %v921 = vunpack.c.l.b16 %v889
      %v922 = vunpack.c.l.b16 %v890
      %v923 = vunpack.c.l.b16 %v891
      %v924 = vunpack.c.l.b16 %v892
      %v925 = vunpack.c.h.b16 %v889
      %v926 = vunpack.c.h.b16 %v890
      %v927 = vunpack.c.h.b16 %v891
      %v928 = vunpack.c.h.b16 %v892
      %v929 = vunpack.c.l.b16 %v893
      %v930 = vunpack.c.l.b16 %v894
      %v931 = vunpack.c.l.b16 %v895
      %v932 = vunpack.c.l.b16 %v896
      %v933 = vunpack.c.h.b16 %v893
      %v934 = vunpack.c.h.b16 %v894
      %v935 = vunpack.c.h.b16 %v895
      %v936 = vunpack.c.h.b16 %v896
      %v937 = vunpack.c.l.b16 %v897
      %v938 = vunpack.c.l.b16 %v898
      %v939 = vunpack.c.l.b16 %v899
      %v940 = vunpack.c.l.b16 %v900
      %v941 = vunpack.c.h.b16 %v897
      %v942 = vunpack.c.h.b16 %v898
      %v943 = vunpack.c.h.b16 %v899
      %v944 = vunpack.c.h.b16 %v900
      %v945 = vunpack.c.l.b16 %v901
      %v946 = vunpack.c.l.b16 %v902
      %v947 = vunpack.c.l.b16 %v903
      %v948 = vunpack.c.l.b16 %v904
      %v949 = vunpack.c.h.b16 %v901
      %v950 = vunpack.c.h.b16 %v902
      %v951 = vunpack.c.h.b16 %v903
      %v952 = vunpack.c.h.b16 %v904
      %v953 = vpack.c.b16 %v922, %v921
      %v954 = vpack.c.b16 %v924, %v923
      %v955 = vpack.c.b16 %v926, %v925
      %v956 = vpack.c.b16 %v928, %v927
      %v957 = vpack.c.b16 %v930, %v929
      %v958 = vpack.c.b16 %v932, %v931
      %v959 = vpack.c.b16 %v934, %v933
      %v960 = vpack.c.b16 %v936, %v935
      %v961 = vpack.c.b16 %v938, %v937
      %v962 = vpack.c.b16 %v940, %v939
      %v963 = vpack.c.b16 %v942, %v941
      %v964 = vpack.c.b16 %v944, %v943
      %v965 = vpack.c.b16 %v946, %v945
      %v966 = vpack.c.b16 %v948, %v947
      %v967 = vpack.c.b16 %v950, %v949
      %v968 = vpack.c.b16 %v952, %v951
      %985 = vst [vmem:[%s291] sm:$0xff] %v953
      %986 = vst [vmem:[%s291 + $0x8] sm:$0xff] %v954
      %987 = vst [vmem:[%s291 + $0x10] sm:$0xff] %v955
      %988 = vst [vmem:[%s291 + $0x18] sm:$0xff] %v956
      %989 = vst [vmem:[%s291 + $0x20] sm:$0xff] %v957
      %990 = vst [vmem:[%s291 + $0x28] sm:$0xff] %v958
      %991 = vst [vmem:[%s291 + $0x30] sm:$0xff] %v959
      %992 = vst [vmem:[%s291 + $0x38] sm:$0xff] %v960
      %993 = vst [vmem:[%s291 + $0x40] sm:$0xff] %v961
      %994 = vst [vmem:[%s291 + $0x48] sm:$0xff] %v962
      %995 = vst [vmem:[%s291 + $0x50] sm:$0xff] %v963
      %996 = vst [vmem:[%s291 + $0x58] sm:$0xff] %v964
      %997 = vst [vmem:[%s291 + $0x60] sm:$0xff] %v965
      %998 = vst [vmem:[%s291 + $0x68] sm:$0xff] %v966
      %999 = vst [vmem:[%s291 + $0x70] sm:$0xff] %v967
      %1000 = vst [vmem:[%s291 + $0x78] sm:$0xff] %v968
      %s1001 = smul.u32 8, %s20
      %s1002 = smul.u32 4, %s21
      %p1003 = scmp.lt.s32.totalorder %s1001, 15
      %s1004 = scalar_select %p1003, %s1001, 15
      %p1005 = scmp.lt.s32.totalorder %s1002, 3
      %s1006 = scalar_select %p1005, %s1002, 3
      %s1007 = smul.addr %s1004, 4
      %s1008 = sadd.s32 %s1006, %s1007
      %s1009 = smul.addr %s1008, 4
      %s1010 = scalar_lea.vmem %s5, %s1009
      // Predicated region
      $region45: #{block_forward.6} parent=39 // pred_check
        %p1011 = pneg %p168
      $region46: #{block_forward.6} parent=39 // pred_check_branch
        %1013 = sbr.rel (%p1011) target = $region48
      $region47: #{block_forward.6} parent=39 // pred_region
        %s1014 = smul.u32 8, %s20
        %s1015 = smul.u32 4, %s21
      $region48: #{block_forward.6} parent=39 // pred_fallthru
        _
    $region40: #{block_forward.6} parent=5 // pred_fallthru
      _
    %p1016 = scmp.le.s32.totalorder 2, %s11
    // Predicated region
    $region49: #{block_forward.6} parent=5 // pred_check
      %p1017 = pneg %p1016
    $region50: #{block_forward.6} parent=5 // pred_check_branch
      %1019 = sbr.rel (%p1017) target = $region52
    $region51: #{block_forward.6} parent=5 // pred_region
      %s1020 = ssub.s32 %s11, 2
      // Predicated region
      $region53: #{block_forward.6} parent=51 // pred_check
        %p1021 = pneg %p174
      $region54: #{block_forward.6} parent=51 // pred_check_branch
        %1023 = sbr.rel (%p1021) target = $region56
      $region55: #{block_forward.6} parent=51 // pred_region
        %s1024 = smul.u32 8, %s22
        %s1025 = smul.u32 4, %s23
        %p1026 = scmp.lt.s32.totalorder %s1024, 15
        %s1027 = scalar_select %p1026, %s1024, 15
        %p1028 = scmp.lt.s32.totalorder %s1025, 3
        %s1029 = scalar_select %p1028, %s1025, 3
        %s1030 = smul.addr %s1027, 4
        %s1031 = sadd.s32 %s1029, %s1030
        %s1032 = smul.addr %s1031, 4
        %s1033 = scalar_lea.vmem %s5, %s1032
      $region56: #{block_forward.6} parent=51 // pred_fallthru
        _
    $region52: #{block_forward.6} parent=5 // pred_fallthru
      _
  $region6: #{block_forward.6} parent=0 // loop_footer
    %s15 = sadd.s32 1, %s11
  $region7: #{block_forward.6} parent=0 // loop_footer_branch
    %10 = sbr.rel target = $region3
  $region8: #{block_forward.6} parent=0 // loop_exit
    _

// kernel: block_forward.5
$region0: #{block_forward.5}
  #allocation0 [shape = 'u32[]', space=smem, size = 0x4, offset = 0x4, fixed_abs, tag = 'smem constant byte address 0x4 - core index']
  #allocation1 [shape = 'u32[144,128]{1,0:T(1,128)}', space=vmem, size = 0x12000, scoped, tag = 'internal scratch']
  %s0 = inlined_call_operand.vmem [shape: bf16[2,64,384], index: 0, kind: input, shape index: {}]
  %s1 = inlined_call_operand.vmem [shape: bf16[128,128], index: 1, kind: input, shape index: {}]
  %s2 = inlined_call_operand.vmem [shape: f32[1,128], index: 2, kind: input, shape index: {}]
  %s3 = inlined_call_operand.vmem [shape: f32[2,64,128], index: 3, kind: input, shape index: {}, may-alias: {3,4}]
  %s4 = inlined_call_operand.vmem [shape: f32[2,64,128], index: 4, kind: output, shape index: {}, may-alias: {3,4}]
  %s5 = sld [smem:[#allocation0]]
  $region49: #{block_forward.5} parent=0
    _
  %s7 = ssub.s32 1, %s5
  %s8 = scalar_select 0, %s7, %s5
  loop: start=0, step=1, limit=4
  $region2: #{block_forward.5} parent=0 // loop_pre_header
    _
  $region3: #{block_forward.5} parent=0 // loop_header
    %s10 = sphi 0, %s14
    %p11 = scmp.ge.s32.totalorder %s10, 4
    %s20 = sphi 0, %s22
    %s23 = sphi 0, %s20
    %s24 = sphi 0, %s23
    %s40 = sphi 0, %s24
    %s44 = sphi 0, %s44
    %s46 = sphi 0, %s44
    %s47 = sphi 0, %s46
    %s61 = sphi 0, %s47
    %s65 = sphi 0, %s65
    %s67 = sphi 0, %s65
    %s68 = sphi 0, %s67
    %s82 = sphi 0, %s68
    %s88 = sphi 0, %s90
    %s91 = sphi 0, %s88
    %s92 = sphi 0, %s91
    %s108 = sphi 0, %s92
    %s114 = sphi 0, %s116
    %s117 = sphi 0, %s114
    %s118 = sphi 0, %s117
    %s134 = sphi 0, %s118
  $region4: #{block_forward.5} parent=0 // loop_header_branch
    %13 = sbr.rel (%p11) target = $region8
  $region5: #{block_forward.5} parent=0 // loop_body
    %s15 = ssub.s32 %s10, 1
    %s16 = ssub.s32 %s10, 2
    %s17 = sadd.s32 %s10, 1
    %s18 = ssub.s32 %s10, %s17
    %p19 = scmp.eq.s32.totalorder %s18, 0
    %s21 = sadd.s32 %s20, 1
    %s22 = scalar_select %p19, %s20, %s21
    %p25 = pneg %p19
    %p26 = scmp.eq.s32.totalorder %s10, 1
    %p27 = por %p25, %p26
    %p28 = scmp.ne.s32.totalorder %s20, %s23
    %p29 = scmp.eq.s32.totalorder %s10, 0
    %p30 = por %p28, %p29
    %p31 = scmp.ne.s32.totalorder %s20, %s23
    %p32 = scmp.eq.s32.totalorder %s15, 1
    %p33 = por %p31, %p32
    %p34 = scmp.ne.s32.totalorder %s23, %s24
    %p35 = scmp.eq.s32.totalorder %s15, 0
    %p36 = por %p34, %p35
    %p37 = scmp.ne.s32.totalorder %s23, %s24
    %p38 = scmp.eq.s32.totalorder %s16, 1
    %p39 = por %p37, %p38
    %p41 = scmp.ne.s32.totalorder %s24, %s40
    %p42 = scmp.eq.s32.totalorder %s16, 0
    %p43 = por %p41, %p42
    %s45 = sadd.s32 %s44, 1
    %p48 = scmp.eq.s32.totalorder %s10, 1
    %p49 = scmp.ne.s32.totalorder %s44, %s46
    %p50 = scmp.eq.s32.totalorder %s10, 0
    %p51 = por %p49, %p50
    %p52 = scmp.ne.s32.totalorder %s44, %s46
    %p53 = scmp.eq.s32.totalorder %s15, 1
    %p54 = por %p52, %p53
    %p55 = scmp.ne.s32.totalorder %s46, %s47
    %p56 = scmp.eq.s32.totalorder %s15, 0
    %p57 = por %p55, %p56
    %p58 = scmp.ne.s32.totalorder %s46, %s47
    %p59 = scmp.eq.s32.totalorder %s16, 1
    %p60 = por %p58, %p59
    %p62 = scmp.ne.s32.totalorder %s47, %s61
    %p63 = scmp.eq.s32.totalorder %s16, 0
    %p64 = por %p62, %p63
    %s66 = sadd.s32 %s65, 1
    %p69 = scmp.eq.s32.totalorder %s10, 1
    %p70 = scmp.ne.s32.totalorder %s65, %s67
    %p71 = scmp.eq.s32.totalorder %s10, 0
    %p72 = por %p70, %p71
    %p73 = scmp.ne.s32.totalorder %s65, %s67
    %p74 = scmp.eq.s32.totalorder %s15, 1
    %p75 = por %p73, %p74
    %p76 = scmp.ne.s32.totalorder %s67, %s68
    %p77 = scmp.eq.s32.totalorder %s15, 0
    %p78 = por %p76, %p77
    %p79 = scmp.ne.s32.totalorder %s67, %s68
    %p80 = scmp.eq.s32.totalorder %s16, 1
    %p81 = por %p79, %p80
    %p83 = scmp.ne.s32.totalorder %s68, %s82
    %p84 = scmp.eq.s32.totalorder %s16, 0
    %p85 = por %p83, %p84
    %s86 = ssub.s32 %s10, %s17
    %p87 = scmp.eq.s32.totalorder %s86, 0
    %s89 = sadd.s32 %s88, 1
    %s90 = scalar_select %p87, %s88, %s89
    %p93 = pneg %p87
    %p94 = scmp.eq.s32.totalorder %s10, 1
    %p95 = por %p93, %p94
    %p96 = scmp.ne.s32.totalorder %s88, %s91
    %p97 = scmp.eq.s32.totalorder %s10, 0
    %p98 = por %p96, %p97
    %p99 = scmp.ne.s32.totalorder %s88, %s91
    %p100 = scmp.eq.s32.totalorder %s15, 1
    %p101 = por %p99, %p100
    %p102 = scmp.ne.s32.totalorder %s91, %s92
    %p103 = scmp.eq.s32.totalorder %s15, 0
    %p104 = por %p102, %p103
    %p105 = scmp.ne.s32.totalorder %s91, %s92
    %p106 = scmp.eq.s32.totalorder %s16, 1
    %p107 = por %p105, %p106
    %p109 = scmp.ne.s32.totalorder %s92, %s108
    %p110 = scmp.eq.s32.totalorder %s16, 0
    %p111 = por %p109, %p110
    %s112 = ssub.s32 %s10, %s17
    %p113 = scmp.eq.s32.totalorder %s112, 0
    %s115 = sadd.s32 %s114, 1
    %s116 = scalar_select %p113, %s114, %s115
    %p119 = pneg %p113
    %p120 = scmp.eq.s32.totalorder %s10, 1
    %p121 = por %p119, %p120
    %p122 = scmp.ne.s32.totalorder %s114, %s117
    %p123 = scmp.eq.s32.totalorder %s10, 0
    %p124 = por %p122, %p123
    %p125 = scmp.ne.s32.totalorder %s114, %s117
    %p126 = scmp.eq.s32.totalorder %s15, 1
    %p127 = por %p125, %p126
    %p128 = scmp.ne.s32.totalorder %s117, %s118
    %p129 = scmp.eq.s32.totalorder %s15, 0
    %p130 = por %p128, %p129
    %p131 = scmp.ne.s32.totalorder %s117, %s118
    %p132 = scmp.eq.s32.totalorder %s16, 1
    %p133 = por %p131, %p132
    %p135 = scmp.ne.s32.totalorder %s118, %s134
    %p136 = scmp.eq.s32.totalorder %s16, 0
    %p137 = por %p135, %p136
    %p138 = scmp.le.s32.totalorder 1, %s10
    %p139 = scmp.lt.s32.totalorder %s10, 3
    %p140 = pnand %p138, %p139
    %p141 = pneg %p140
    // Predicated region
    $region9: #{block_forward.5} parent=5 // pred_check
      _
    $region10: #{block_forward.5} parent=5 // pred_check_branch
      %143 = sbr.rel (%p140) target = $region12
    $region11: #{block_forward.5} parent=5 // pred_region
      %s144 = ssub.s32 %s10, 1
      // Predicated region
      $region13: #{block_forward.5} parent=11 // pred_check
        %p145 = pneg %p57
      $region14: #{block_forward.5} parent=11 // pred_check_branch
        %147 = sbr.rel (%p145) target = $region16
      $region15: #{block_forward.5} parent=11 // pred_region
        _
      $region16: #{block_forward.5} parent=11 // pred_fallthru
        _
      // Predicated region
      $region17: #{block_forward.5} parent=11 // pred_check
        %p148 = pneg %p78
      $region18: #{block_forward.5} parent=11 // pred_check_branch
        %150 = sbr.rel (%p148) target = $region20
      $region19: #{block_forward.5} parent=11 // pred_region
        _
      $region20: #{block_forward.5} parent=11 // pred_fallthru
        _
    $region12: #{block_forward.5} parent=5 // pred_fallthru
      _
    %p151 = scmp.lt.s32.totalorder %s10, 2
    // Predicated region
    $region21: #{block_forward.5} parent=5 // pred_check
      %p152 = pneg %p151
    $region22: #{block_forward.5} parent=5 // pred_check_branch
      %154 = sbr.rel (%p152) target = $region24
    $region23: #{block_forward.5} parent=5 // pred_region
      // Predicated region
      $region25: #{block_forward.5} parent=23 // pred_check
        %p155 = pneg %p30
      $region26: #{block_forward.5} parent=23 // pred_check_branch
        %157 = sbr.rel (%p155) target = $region28
      $region27: #{block_forward.5} parent=23 // pred_region
        %p158 = scmp.lt.s32.totalorder %s10, 1
        %s159 = scalar_select %p158, %s10, 1
        %s160 = smul.addr %s159, 24
        %s161 = smul.addr %s160, 4
        %s162 = scalar_lea.vmem %s0, %s161
      $region28: #{block_forward.5} parent=23 // pred_fallthru
        _
      // Predicated region
      $region29: #{block_forward.5} parent=23 // pred_check
        %p163 = pneg %p98
      $region30: #{block_forward.5} parent=23 // pred_check_branch
        %165 = sbr.rel (%p163) target = $region32
      $region31: #{block_forward.5} parent=23 // pred_region
        %p166 = scmp.lt.s32.totalorder %s10, 1
        %s167 = scalar_select %p166, %s10, 1
        %s168 = smul.addr %s167, 8
        %s169 = smul.addr %s168, 8
        %s170 = scalar_lea.vmem %s3, %s169
      $region32: #{block_forward.5} parent=23 // pred_fallthru
        _
    $region24: #{block_forward.5} parent=5 // pred_fallthru
      _
    %p171 = scmp.le.s32.totalorder 1, %s10
    %p172 = scmp.lt.s32.totalorder %s10, 3
    %p173 = pnand %p171, %p172
    %p174 = pneg %p173
    // Predicated region
    $region33: #{block_forward.5} parent=5 // pred_check
      _
    $region34: #{block_forward.5} parent=5 // pred_check_branch
      %176 = sbr.rel (%p173) target = $region36
    $region35: #{block_forward.5} parent=5 // pred_region
      %s177 = ssub.s32 %s10, 1
      %p178 = scmp.lt.s32.totalorder %s15, 1
      %s179 = scalar_select %p178, %s15, 1
      %s180 = smul.addr %s179, 24
      %s181 = smul.addr %s180, 4
      %s182 = scalar_lea.vmem %s0, %s181
      %p183 = pneg %p36
      %p184 = pneg %p33
      %p185 = pneg %p57
      %p186 = pneg %p54
      %p187 = pneg %p78
      %p188 = pneg %p75
      %p189 = scmp.lt.s32.totalorder %s15, 1
      %s190 = scalar_select %p189, %s15, 1
      %s191 = smul.addr %s190, 8
      %s192 = smul.addr %s191, 8
      %s193 = scalar_lea.vmem %s3, %s192
      %p194 = pneg %p104
      %p195 = pneg %p101
      %p196 = pneg %p130
      %p197 = pneg %p127
      %p198 = scmp.lt.s32.totalorder %s15, 1
      %s199 = scalar_select %p198, %s15, 1
      %s200 = smul.addr %s199, 8
      %s201 = smul.addr %s200, 8
      %s202 = scalar_lea.vmem %s4, %s201
      %p203 = scmp.lt.s32.totalorder %s15, 1
      %s204 = scalar_select %p203, %s15, 1
      %s205 = smul.addr %s204, 24
      %s206 = smul.addr %s205, 4
      %s207 = scalar_lea.vmem %s0, %s206
      %p208 = scmp.lt.s32.totalorder %s15, 1
      %s209 = scalar_select %p208, %s15, 1
      %s210 = smul.addr %s209, 8
      %s211 = smul.addr %s210, 8
      %s212 = scalar_lea.vmem %s3, %s211
      %p213 = scmp.lt.s32.totalorder %s15, 1
      %s214 = scalar_select %p213, %s15, 1
      %s215 = smul.addr %s214, 8
      %s216 = smul.addr %s215, 8
      %s217 = scalar_lea.vmem %s4, %s216
      %v219 = vld [vmem:[%s207] sm:$0xff]
      %v220 = vld [vmem:[%s207 + $0x8] sm:$0xf]
      %v221 = vld [vmem:[%s207 + $0xc] sm:$0xff]
      %v222 = vld [vmem:[%s207 + $0x14] sm:$0xf]
      %v223 = vld [vmem:[%s207 + $0x18] sm:$0xff]
      %v224 = vld [vmem:[%s207 + $0x20] sm:$0xf]
      %v225 = vld [vmem:[%s207 + $0x24] sm:$0xff]
      %v226 = vld [vmem:[%s207 + $0x2c] sm:$0xf]
      %v227 = vld [vmem:[%s207 + $0x30] sm:$0xff]
      %v228 = vld [vmem:[%s207 + $0x38] sm:$0xf]
      %v229 = vld [vmem:[%s207 + $0x3c] sm:$0xff]
      %v230 = vld [vmem:[%s207 + $0x44] sm:$0xf]
      %v231 = vld [vmem:[%s207 + $0x48] sm:$0xff]
      %v232 = vld [vmem:[%s207 + $0x50] sm:$0xf]
      %v233 = vld [vmem:[%s207 + $0x54] sm:$0xff]
      %v234 = vld [vmem:[%s207 + $0x5c] sm:$0xf]
      %v235 = vld [vmem:[%s2] sm:$0x1]
      %v236 = vld [vmem:[%s212] sm:$0xff]
      %v237 = vld [vmem:[%s212 + $0x8] sm:$0xff]
      %v238 = vld [vmem:[%s212 + $0x10] sm:$0xff]
      %v239 = vld [vmem:[%s212 + $0x18] sm:$0xff]
      %v240 = vld [vmem:[%s212 + $0x20] sm:$0xff]
      %v241 = vld [vmem:[%s212 + $0x28] sm:$0xff]
      %v242 = vld [vmem:[%s212 + $0x30] sm:$0xff]
      %v243 = vld [vmem:[%s212 + $0x38] sm:$0xff]
      %v245 = vlaneseq
      %v246 = vshrl.u32 %v245, 7
      %v247 = vsub.s32 0, %v246
      %v248 = vrot.slane %v235, %v247
      %v250 = vadd.f32 %v248, %v236
      %v251 = vadd.f32 %v248, %v237
      %v252 = vadd.f32 %v248, %v238
      %v253 = vadd.f32 %v248, %v239
      %v254 = vadd.f32 %v248, %v240
      %v255 = vadd.f32 %v248, %v241
      %v256 = vadd.f32 %v248, %v242
      %v257 = vadd.f32 %v248, %v243
      %v266 = vunpack.c.l.b16 %v219
      %v267 = vunpack.c.l.b16 %v221
      %v268 = vunpack.c.l.b16 %v223
      %v269 = vunpack.c.l.b16 %v225
      %v270 = vunpack.c.l.b16 %v227
      %v271 = vunpack.c.l.b16 %v229
      %v272 = vunpack.c.l.b16 %v231
      %v273 = vunpack.c.l.b16 %v233
      %v274 = vpack.c.b16 %v267, %v266
      %v275 = vpack.c.b16 %v269, %v268
      %v276 = vpack.c.b16 %v271, %v270
      %v277 = vpack.c.b16 %v273, %v272
      %v278 = vunpack.c.h.b16 %v219
      %v279 = vunpack.c.h.b16 %v221
      %v280 = vunpack.c.h.b16 %v223
      %v281 = vunpack.c.h.b16 %v225
      %v282 = vunpack.c.h.b16 %v227
      %v283 = vunpack.c.h.b16 %v229
      %v284 = vunpack.c.h.b16 %v231
      %v285 = vunpack.c.h.b16 %v233
      %v286 = vpack.c.b16 %v279, %v278
      %v287 = vpack.c.b16 %v281, %v280
      %v288 = vpack.c.b16 %v283, %v282
      %v289 = vpack.c.b16 %v285, %v284
      %vm290 = vcmask 261120
      %v292 = vsel %vm290, %v274, 0
      %v295 = vsel %vm290, %v275, 0
      %v298 = vsel %vm290, %v276, 0
      %v301 = vsel %vm290, %v277, 0
      %v304 = vsel %vm290, %v286, 0
      %v307 = vsel %vm290, %v287, 0
      %v310 = vsel %vm290, %v288, 0
      %v313 = vsel %vm290, %v289, 0
      %315 = vmatprep.subr.bf16.mxu0 0
      %316 = vmatpush1.bf16.xpose.msra.mxu0 0
      %317 = vmatprep.subr.bf16.mxu0 0
      %318 = vmatpush1.bf16.xpose.msra.mxu0 0
      %319 = vmatprep.subr.bf16.mxu0 0
      %320 = vmatpush1.bf16.xpose.msra.mxu0 0
      %321 = vmatprep.subr.bf16.mxu0 0
      %322 = vmatpush1.bf16.xpose.msra.mxu0 0
      %323 = vmatprep.subr.bf16.mxu0 0
      %324 = vmatpush1.bf16.xpose.msra.mxu0 %v313
      %325 = vmatprep.subr.bf16.mxu0 0
      %326 = vmatpush1.bf16.xpose.msra.mxu0 %v310
      %327 = vmatprep.subr.bf16.mxu0 0
      %328 = vmatpush1.bf16.xpose.msra.mxu0 %v307
      %329 = vmatprep.subr.bf16.mxu0 0
      %330 = vmatpush1.bf16.xpose.msra.mxu0 %v304
      %331 = vmatprep.subr.bf16.mxu0 0
      %332 = vmatpush2.bf16.xpose.msra.mxu0 0
      %333 = vmatprep.subr.bf16.mxu0 0
      %334 = vmatpush2.bf16.xpose.msra.mxu0 0
      %335 = vmatprep.subr.bf16.mxu0 0
      %336 = vmatpush2.bf16.xpose.msra.mxu0 0
      %337 = vmatprep.subr.bf16.mxu0 0
      %338 = vmatpush2.bf16.xpose.msra.mxu0 0
      %339 = vmatprep.subr.bf16.mxu0 0
      %340 = vmatpush2.bf16.xpose.msra.mxu0 0
      %341 = vmatprep.subr.bf16.mxu0 0
      %342 = vmatpush2.bf16.xpose.msra.mxu0 0
      %343 = vmatprep.subr.bf16.mxu0 0
      %344 = vmatpush2.bf16.xpose.msra.mxu0 0
      %345 = vmatprep.subr.bf16.mxu0 0
      %346 = vmatpush2.bf16.xpose.msra.mxu0 0
      %347 = vmatprep.mubr.bf16.mxu0 0
      %348 = vmatmul.mubr.bf16.gmra.mxu0 %v292
      %v349 = vpop.f32.mrf.mxu0
      %v350 = vadd.f32 0.0, %v349
      %v351 = vpop.f32.mrf.mxu0
      %v352 = vpop.f32.mrf.mxu0
      %v353 = vadd.f32 0.0, %v352
      %v354 = vpop.f32.mrf.mxu0
      %355 = vmatprep.mubr.bf16.mxu0 0
      %356 = vmatmul.mubr.bf16.gmra.mxu0 %v295
      %v357 = vpop.f32.mrf.mxu0
      %v358 = vadd.f32 0.0, %v357
      %v359 = vpop.f32.mrf.mxu0
      %v360 = vpop.f32.mrf.mxu0
      %v361 = vadd.f32 0.0, %v360
      %v362 = vpop.f32.mrf.mxu0
      %363 = vmatprep.mubr.bf16.mxu0 0
      %364 = vmatmul.mubr.bf16.gmra.mxu0 %v298
      %v365 = vpop.f32.mrf.mxu0
      %v366 = vadd.f32 0.0, %v365
      %v367 = vpop.f32.mrf.mxu0
      %v368 = vpop.f32.mrf.mxu0
      %v369 = vadd.f32 0.0, %v368
      %v370 = vpop.f32.mrf.mxu0
      %371 = vmatprep.mubr.bf16.mxu0 0
      %372 = vmatmul.mubr.bf16.gmra.mxu0 %v301
      %v373 = vpop.f32.mrf.mxu0
      %v374 = vadd.f32 0.0, %v373
      %v375 = vpop.f32.mrf.mxu0
      %v376 = vpop.f32.mrf.mxu0
      %v377 = vadd.f32 0.0, %v376
      %v378 = vpop.f32.mrf.mxu0
      %379 = vdwg.mxu0
      %v380 = vmul.f32 %v350, 0.17677669
      %v381 = vmul.f32 %v353, 0.17677669
      %v382 = vmul.f32 %v358, 0.17677669
      %v383 = vmul.f32 %v361, 0.17677669
      %v384 = vmul.f32 %v366, 0.17677669
      %v385 = vmul.f32 %v369, 0.17677669
      %v386 = vmul.f32 %v374, 0.17677669
      %v387 = vmul.f32 %v377, 0.17677669
      %vm388 = vcmask 523264
      %v389 = vsel %vm388, %v380, -inf
      %390 = vmax.xlane.f32.xlu0 %v389
      %v391 = vpop.xlane.xlu0 %390
      %v392 = vsel %vm388, %v381, -inf
      %393 = vmax.xlane.f32.xlu0 %v392
      %v394 = vpop.xlane.xlu0 %393
      %v395 = vsel %vm388, %v382, -inf
      %396 = vmax.xlane.f32.xlu0 %v395
      %v397 = vpop.xlane.xlu0 %396
      %v398 = vsel %vm388, %v383, -inf
      %399 = vmax.xlane.f32.xlu0 %v398
      %v400 = vpop.xlane.xlu0 %399
      %v401 = vsel %vm388, %v384, -inf
      %402 = vmax.xlane.f32.xlu0 %v401
      %v403 = vpop.xlane.xlu0 %402
      %v404 = vsel %vm388, %v385, -inf
      %405 = vmax.xlane.f32.xlu0 %v404
      %v406 = vpop.xlane.xlu0 %405
      %v407 = vsel %vm388, %v386, -inf
      %408 = vmax.xlane.f32.xlu0 %v407
      %v409 = vpop.xlane.xlu0 %408
      %v410 = vsel %vm388, %v387, -inf
      %411 = vmax.xlane.f32.xlu0 %v410
      %v412 = vpop.xlane.xlu0 %411
      %v413 = vsub.f32 %v380, %v391
      %v414 = vsub.f32 %v381, %v394
      %v415 = vsub.f32 %v382, %v397
      %v416 = vsub.f32 %v383, %v400
      %v417 = vsub.f32 %v384, %v403
      %v418 = vsub.f32 %v385, %v406
      %v419 = vsub.f32 %v386, %v409
      %v420 = vsub.f32 %v387, %v412
      %v421 = vmul.f32 %v413, 1.442695
      %v422 = vpow.pop %v421
      %v423 = vmul.f32 %v414, 1.442695
      %v424 = vpow.pop %v423
      %v425 = vmul.f32 %v415, 1.442695
      %v426 = vpow.pop %v425
      %v427 = vmul.f32 %v416, 1.442695
      %v428 = vpow.pop %v427
      %v429 = vmul.f32 %v417, 1.442695
      %v430 = vpow.pop %v429
      %v431 = vmul.f32 %v418, 1.442695
      %v432 = vpow.pop %v431
      %v433 = vmul.f32 %v419, 1.442695
      %v434 = vpow.pop %v433
      %v435 = vmul.f32 %v420, 1.442695
      %v436 = vpow.pop %v435
      %v437 = vsel %vm388, %v422, 0.0
      %438 = vadd.xlane.f32.xlu0 %v437
      %v439 = vpop.xlane.xlu0 %438
      %v440 = vsel %vm388, %v424, 0.0
      %441 = vadd.xlane.f32.xlu0 %v440
      %v442 = vpop.xlane.xlu0 %441
      %v443 = vsel %vm388, %v426, 0.0
      %444 = vadd.xlane.f32.xlu0 %v443
      %v445 = vpop.xlane.xlu0 %444
      %v446 = vsel %vm388, %v428, 0.0
      %447 = vadd.xlane.f32.xlu0 %v446
      %v448 = vpop.xlane.xlu0 %447
      %v449 = vsel %vm388, %v430, 0.0
      %450 = vadd.xlane.f32.xlu0 %v449
      %v451 = vpop.xlane.xlu0 %450
      %v452 = vsel %vm388, %v432, 0.0
      %453 = vadd.xlane.f32.xlu0 %v452
      %v454 = vpop.xlane.xlu0 %453
      %v455 = vsel %vm388, %v434, 0.0
      %456 = vadd.xlane.f32.xlu0 %v455
      %v457 = vpop.xlane.xlu0 %456
      %v458 = vsel %vm388, %v436, 0.0
      %459 = vadd.xlane.f32.xlu0 %v458
      %v460 = vpop.xlane.xlu0 %459
      %v461 = vrcp.pop %v439
      %v462 = vrcp.pop %v442
      %v463 = vrcp.pop %v445
      %v464 = vrcp.pop %v448
      %v465 = vrcp.pop %v451
      %v466 = vrcp.pop %v454
      %v467 = vrcp.pop %v457
      %v468 = vrcp.pop %v460
      %v469 = vmul.f32 %v422, %v461
      %v470 = vmul.f32 %v424, %v462
      %v471 = vmul.f32 %v426, %v463
      %v472 = vmul.f32 %v428, %v464
      %v473 = vmul.f32 %v430, %v465
      %v474 = vmul.f32 %v432, %v466
      %v475 = vmul.f32 %v434, %v467
      %v476 = vmul.f32 %v436, %v468
      %v477 = vpack.c.bf16 %v470, %v469
      %v478 = vpack.c.bf16 %v472, %v471
      %v479 = vpack.c.bf16 %v474, %v473
      %v480 = vpack.c.bf16 %v476, %v475
      %v489 = vunpack.c.l.b16 %v220
      %v490 = vunpack.c.l.b16 %v222
      %v491 = vunpack.c.l.b16 %v224
      %v492 = vunpack.c.l.b16 %v226
      %v493 = vunpack.c.l.b16 %v228
      %v494 = vunpack.c.l.b16 %v230
      %v495 = vunpack.c.l.b16 %v232
      %v496 = vunpack.c.l.b16 %v234
      %v497 = vpack.c.b16 %v490, %v489
      %v498 = vpack.c.b16 %v492, %v491
      %v499 = vpack.c.b16 %v494, %v493
      %v500 = vpack.c.b16 %v496, %v495
      %v506 = vsel %vm388, %v477, 0
      %v509 = vsel %vm388, %v478, 0
      %v512 = vsel %vm388, %v479, 0
      %v515 = vsel %vm388, %v480, 0
      %517 = vmatprep.subr.bf16.mxu0 0
      %518 = vmatpush1.bf16.msra.mxu0 0
      %519 = vmatprep.subr.bf16.mxu0 0
      %520 = vmatpush1.bf16.msra.mxu0 0
      %521 = vmatprep.subr.bf16.mxu0 0
      %522 = vmatpush1.bf16.msra.mxu0 0
      %523 = vmatprep.subr.bf16.mxu0 0
      %524 = vmatpush1.bf16.msra.mxu0 0
      %525 = vmatprep.subr.bf16.mxu0 0
      %526 = vmatpush1.bf16.msra.mxu0 %v500
      %527 = vmatprep.subr.bf16.mxu0 0
      %528 = vmatpush1.bf16.msra.mxu0 %v499
      %529 = vmatprep.subr.bf16.mxu0 0
      %530 = vmatpush1.bf16.msra.mxu0 %v498
      %531 = vmatprep.subr.bf16.mxu0 0
      %532 = vmatpush1.bf16.msra.mxu0 %v497
      %533 = vmatprep.subr.bf16.mxu0 0
      %534 = vmatpush2.bf16.msra.mxu0 0
      %535 = vmatprep.subr.bf16.mxu0 0
      %536 = vmatpush2.bf16.msra.mxu0 0
      %537 = vmatprep.subr.bf16.mxu0 0
      %538 = vmatpush2.bf16.msra.mxu0 0
      %539 = vmatprep.subr.bf16.mxu0 0
      %540 = vmatpush2.bf16.msra.mxu0 0
      %541 = vmatprep.subr.bf16.mxu0 0
      %542 = vmatpush2.bf16.msra.mxu0 0
      %543 = vmatprep.subr.bf16.mxu0 0
      %544 = vmatpush2.bf16.msra.mxu0 0
      %545 = vmatprep.subr.bf16.mxu0 0
      %546 = vmatpush2.bf16.msra.mxu0 0
      %547 = vmatprep.subr.bf16.mxu0 0
      %548 = vmatpush2.bf16.msra.mxu0 0
      %549 = vmatprep.mubr.bf16.mxu0 0
      %550 = vmatmul.mubr.bf16.gmra.mxu0 %v506
      %v551 = vpop.f32.mrf.mxu0
      %v552 = vadd.f32 0.0, %v551
      %v553 = vpop.f32.mrf.mxu0
      %v554 = vpop.f32.mrf.mxu0
      %v555 = vadd.f32 0.0, %v554
      %v556 = vpop.f32.mrf.mxu0
      %557 = vmatprep.mubr.bf16.mxu0 0
      %558 = vmatmul.mubr.bf16.gmra.mxu0 %v509
      %v559 = vpop.f32.mrf.mxu0
      %v560 = vadd.f32 0.0, %v559
      %v561 = vpop.f32.mrf.mxu0
      %v562 = vpop.f32.mrf.mxu0
      %v563 = vadd.f32 0.0, %v562
      %v564 = vpop.f32.mrf.mxu0
      %565 = vmatprep.mubr.bf16.mxu0 0
      %566 = vmatmul.mubr.bf16.gmra.mxu0 %v512
      %v567 = vpop.f32.mrf.mxu0
      %v568 = vadd.f32 0.0, %v567
      %v569 = vpop.f32.mrf.mxu0
      %v570 = vpop.f32.mrf.mxu0
      %v571 = vadd.f32 0.0, %v570
      %v572 = vpop.f32.mrf.mxu0
      %573 = vmatprep.mubr.bf16.mxu0 0
      %574 = vmatmul.mubr.bf16.gmra.mxu0 %v515
      %v575 = vpop.f32.mrf.mxu0
      %v576 = vadd.f32 0.0, %v575
      %v577 = vpop.f32.mrf.mxu0
      %v578 = vpop.f32.mrf.mxu0
      %v579 = vadd.f32 0.0, %v578
      %v580 = vpop.f32.mrf.mxu0
      %581 = vdwg.mxu0
      %v582 = vpack.c.bf16 %v555, %v552
      %v583 = vpack.c.bf16 %v563, %v560
      %v584 = vpack.c.bf16 %v571, %v568
      %v585 = vpack.c.bf16 %v579, %v576
      %v586 = vld [vmem:[%s1] sm:$0xf]
      %v587 = vld [vmem:[%s1 + $0x4] sm:$0xf]
      %v588 = vld [vmem:[%s1 + $0x8] sm:$0xf]
      %v589 = vld [vmem:[%s1 + $0xc] sm:$0xf]
      %v594 = vunpack.c.l.b16 %v586
      %v595 = vunpack.c.l.b16 %v587
      %v596 = vunpack.c.l.b16 %v588
      %v597 = vunpack.c.l.b16 %v589
      %v598 = vpack.c.b16 %v595, %v594
      %v599 = vpack.c.b16 %v597, %v596
      %v603 = vsel %vm290, %v582, 0
      %v606 = vsel %vm290, %v583, 0
      %v609 = vsel %vm290, %v584, 0
      %v612 = vsel %vm290, %v585, 0
      %614 = vmatprep.subr.bf16.mxu0 0
      %615 = vmatpush1.bf16.msra.mxu0 0
      %616 = vmatprep.subr.bf16.mxu0 0
      %617 = vmatpush1.bf16.msra.mxu0 0
      %618 = vmatprep.subr.bf16.mxu0 0
      %619 = vmatpush1.bf16.msra.mxu0 0
      %620 = vmatprep.subr.bf16.mxu0 0
      %621 = vmatpush1.bf16.msra.mxu0 0
      %622 = vmatprep.subr.bf16.mxu0 0
      %623 = vmatpush1.bf16.msra.mxu0 0
      %624 = vmatprep.subr.bf16.mxu0 0
      %625 = vmatpush1.bf16.msra.mxu0 0
      %626 = vmatprep.subr.bf16.mxu0 0
      %627 = vmatpush1.bf16.msra.mxu0 %v599
      %628 = vmatprep.subr.bf16.mxu0 0
      %629 = vmatpush1.bf16.msra.mxu0 %v598
      %630 = vmatprep.subr.bf16.mxu0 0
      %631 = vmatpush2.bf16.msra.mxu0 0
      %632 = vmatprep.subr.bf16.mxu0 0
      %633 = vmatpush2.bf16.msra.mxu0 0
      %634 = vmatprep.subr.bf16.mxu0 0
      %635 = vmatpush2.bf16.msra.mxu0 0
      %636 = vmatprep.subr.bf16.mxu0 0
      %637 = vmatpush2.bf16.msra.mxu0 0
      %638 = vmatprep.subr.bf16.mxu0 0
      %639 = vmatpush2.bf16.msra.mxu0 0
      %640 = vmatprep.subr.bf16.mxu0 0
      %641 = vmatpush2.bf16.msra.mxu0 0
      %642 = vmatprep.subr.bf16.mxu0 0
      %643 = vmatpush2.bf16.msra.mxu0 0
      %644 = vmatprep.subr.bf16.mxu0 0
      %645 = vmatpush2.bf16.msra.mxu0 0
      %646 = vmatprep.mubr.bf16.mxu0 0
      %647 = vmatmul.mubr.bf16.gmra.mxu0 %v603
      %v648 = vpop.f32.mrf.mxu0
      %v649 = vadd.f32 0.0, %v648
      %v650 = vpop.f32.mrf.mxu0
      %v651 = vpop.f32.mrf.mxu0
      %v652 = vadd.f32 0.0, %v651
      %v653 = vpop.f32.mrf.mxu0
      %654 = vmatprep.mubr.bf16.mxu0 0
      %655 = vmatmul.mubr.bf16.gmra.mxu0 %v606
      %v656 = vpop.f32.mrf.mxu0
      %v657 = vadd.f32 0.0, %v656
      %v658 = vpop.f32.mrf.mxu0
      %v659 = vpop.f32.mrf.mxu0
      %v660 = vadd.f32 0.0, %v659
      %v661 = vpop.f32.mrf.mxu0
      %662 = vmatprep.mubr.bf16.mxu0 0
      %663 = vmatmul.mubr.bf16.gmra.mxu0 %v609
      %v664 = vpop.f32.mrf.mxu0
      %v665 = vadd.f32 0.0, %v664
      %v666 = vpop.f32.mrf.mxu0
      %v667 = vpop.f32.mrf.mxu0
      %v668 = vadd.f32 0.0, %v667
      %v669 = vpop.f32.mrf.mxu0
      %670 = vmatprep.mubr.bf16.mxu0 0
      %671 = vmatmul.mubr.bf16.gmra.mxu0 %v612
      %v672 = vpop.f32.mrf.mxu0
      %v673 = vadd.f32 0.0, %v672
      %v674 = vpop.f32.mrf.mxu0
      %v675 = vpop.f32.mrf.mxu0
      %v676 = vadd.f32 0.0, %v675
      %v677 = vpop.f32.mrf.mxu0
      %678 = vdwg.mxu0
      %v679 = vadd.f32 %v250, %v649
      %v680 = vadd.f32 %v251, %v652
      %v681 = vadd.f32 %v252, %v657
      %v682 = vadd.f32 %v253, %v660
      %v683 = vadd.f32 %v254, %v665
      %v684 = vadd.f32 %v255, %v668
      %v685 = vadd.f32 %v256, %v673
      %v686 = vadd.f32 %v257, %v676
      %687 = vrot.lane.b32.xlu0 %v274, 96
      %v688 = vpop.permute.xlu0 %687
      %689 = vrot.lane.b32.xlu0 %v275, 96
      %v690 = vpop.permute.xlu0 %689
      %691 = vrot.lane.b32.xlu0 %v276, 96
      %v692 = vpop.permute.xlu0 %691
      %693 = vrot.lane.b32.xlu0 %v277, 96
      %v694 = vpop.permute.xlu0 %693
      %695 = vrot.lane.b32.xlu0 %v286, 96
      %v696 = vpop.permute.xlu0 %695
      %697 = vrot.lane.b32.xlu0 %v287, 96
      %v698 = vpop.permute.xlu0 %697
      %699 = vrot.lane.b32.xlu0 %v288, 96
      %v700 = vpop.permute.xlu0 %699
      %701 = vrot.lane.b32.xlu0 %v289, 96
      %v702 = vpop.permute.xlu0 %701
      %v704 = vsel %vm290, %v688, 0
      %v707 = vsel %vm290, %v690, 0
      %v710 = vsel %vm290, %v692, 0
      %v713 = vsel %vm290, %v694, 0
      %v716 = vsel %vm290, %v696, 0
      %v719 = vsel %vm290, %v698, 0
      %v722 = vsel %vm290, %v700, 0
      %v725 = vsel %vm290, %v702, 0
      %727 = vmatprep.subr.bf16.mxu0 0
      %728 = vmatpush1.bf16.xpose.msra.mxu0 0
      %729 = vmatprep.subr.bf16.mxu0 0
      %730 = vmatpush1.bf16.xpose.msra.mxu0 0
      %731 = vmatprep.subr.bf16.mxu0 0
      %732 = vmatpush1.bf16.xpose.msra.mxu0 0
      %733 = vmatprep.subr.bf16.mxu0 0
      %734 = vmatpush1.bf16.xpose.msra.mxu0 0
      %735 = vmatprep.subr.bf16.mxu0 0
      %736 = vmatpush1.bf16.xpose.msra.mxu0 %v725
      %737 = vmatprep.subr.bf16.mxu0 0
      %738 = vmatpush1.bf16.xpose.msra.mxu0 %v722
      %739 = vmatprep.subr.bf16.mxu0 0
      %740 = vmatpush1.bf16.xpose.msra.mxu0 %v719
      %741 = vmatprep.subr.bf16.mxu0 0
      %742 = vmatpush1.bf16.xpose.msra.mxu0 %v716
      %743 = vmatprep.subr.bf16.mxu0 0
      %744 = vmatpush2.bf16.xpose.msra.mxu0 0
      %745 = vmatprep.subr.bf16.mxu0 0
      %746 = vmatpush2.bf16.xpose.msra.mxu0 0
      %747 = vmatprep.subr.bf16.mxu0 0
      %748 = vmatpush2.bf16.xpose.msra.mxu0 0
      %749 = vmatprep.subr.bf16.mxu0 0
      %750 = vmatpush2.bf16.xpose.msra.mxu0 0
      %751 = vmatprep.subr.bf16.mxu0 0
      %752 = vmatpush2.bf16.xpose.msra.mxu0 0
      %753 = vmatprep.subr.bf16.mxu0 0
      %754 = vmatpush2.bf16.xpose.msra.mxu0 0
      %755 = vmatprep.subr.bf16.mxu0 0
      %756 = vmatpush2.bf16.xpose.msra.mxu0 0
      %757 = vmatprep.subr.bf16.mxu0 0
      %758 = vmatpush2.bf16.xpose.msra.mxu0 0
      %759 = vmatprep.mubr.bf16.mxu0 0
      %760 = vmatmul.mubr.bf16.gmra.mxu0 %v704
      %v761 = vpop.f32.mrf.mxu0
      %v762 = vadd.f32 0.0, %v761
      %v763 = vpop.f32.mrf.mxu0
      %v764 = vpop.f32.mrf.mxu0
      %v765 = vadd.f32 0.0, %v764
      %v766 = vpop.f32.mrf.mxu0
      %767 = vmatprep.mubr.bf16.mxu0 0
      %768 = vmatmul.mubr.bf16.gmra.mxu0 %v707
      %v769 = vpop.f32.mrf.mxu0
      %v770 = vadd.f32 0.0, %v769
      %v771 = vpop.f32.mrf.mxu0
      %v772 = vpop.f32.mrf.mxu0
      %v773 = vadd.f32 0.0, %v772
      %v774 = vpop.f32.mrf.mxu0
      %775 = vmatprep.mubr.bf16.mxu0 0
      %776 = vmatmul.mubr.bf16.gmra.mxu0 %v710
      %v777 = vpop.f32.mrf.mxu0
      %v778 = vadd.f32 0.0, %v777
      %v779 = vpop.f32.mrf.mxu0
      %v780 = vpop.f32.mrf.mxu0
      %v781 = vadd.f32 0.0, %v780
      %v782 = vpop.f32.mrf.mxu0
      %783 = vmatprep.mubr.bf16.mxu0 0
      %784 = vmatmul.mubr.bf16.gmra.mxu0 %v713
      %v785 = vpop.f32.mrf.mxu0
      %v786 = vadd.f32 0.0, %v785
      %v787 = vpop.f32.mrf.mxu0
      %v788 = vpop.f32.mrf.mxu0
      %v789 = vadd.f32 0.0, %v788
      %v790 = vpop.f32.mrf.mxu0
      %791 = vdwg.mxu0
      %v792 = vmul.f32 %v762, 0.17677669
      %v793 = vmul.f32 %v765, 0.17677669
      %v794 = vmul.f32 %v770, 0.17677669
      %v795 = vmul.f32 %v773, 0.17677669
      %v796 = vmul.f32 %v778, 0.17677669
      %v797 = vmul.f32 %v781, 0.17677669
      %v798 = vmul.f32 %v786, 0.17677669
      %v799 = vmul.f32 %v789, 0.17677669
      %v800 = vsel %vm388, %v792, -inf
      %801 = vmax.xlane.f32.xlu0 %v800
      %v802 = vpop.xlane.xlu0 %801
      %v803 = vsel %vm388, %v793, -inf
      %804 = vmax.xlane.f32.xlu0 %v803
      %v805 = vpop.xlane.xlu0 %804
      %v806 = vsel %vm388, %v794, -inf
      %807 = vmax.xlane.f32.xlu0 %v806
      %v808 = vpop.xlane.xlu0 %807
      %v809 = vsel %vm388, %v795, -inf
      %810 = vmax.xlane.f32.xlu0 %v809
      %v811 = vpop.xlane.xlu0 %810
      %v812 = vsel %vm388, %v796, -inf
      %813 = vmax.xlane.f32.xlu0 %v812
      %v814 = vpop.xlane.xlu0 %813
      %v815 = vsel %vm388, %v797, -inf
      %816 = vmax.xlane.f32.xlu0 %v815
      %v817 = vpop.xlane.xlu0 %816
      %v818 = vsel %vm388, %v798, -inf
      %819 = vmax.xlane.f32.xlu0 %v818
      %v820 = vpop.xlane.xlu0 %819
      %v821 = vsel %vm388, %v799, -inf
      %822 = vmax.xlane.f32.xlu0 %v821
      %v823 = vpop.xlane.xlu0 %822
      %v824 = vsub.f32 %v792, %v802
      %v825 = vsub.f32 %v793, %v805
      %v826 = vsub.f32 %v794, %v808
      %v827 = vsub.f32 %v795, %v811
      %v828 = vsub.f32 %v796, %v814
      %v829 = vsub.f32 %v797, %v817
      %v830 = vsub.f32 %v798, %v820
      %v831 = vsub.f32 %v799, %v823
      %v832 = vmul.f32 %v824, 1.442695
      %v833 = vpow.pop %v832
      %v834 = vmul.f32 %v825, 1.442695
      %v835 = vpow.pop %v834
      %v836 = vmul.f32 %v826, 1.442695
      %v837 = vpow.pop %v836
      %v838 = vmul.f32 %v827, 1.442695
      %v839 = vpow.pop %v838
      %v840 = vmul.f32 %v828, 1.442695
      %v841 = vpow.pop %v840
      %v842 = vmul.f32 %v829, 1.442695
      %v843 = vpow.pop %v842
      %v844 = vmul.f32 %v830, 1.442695
      %v845 = vpow.pop %v844
      %v846 = vmul.f32 %v831, 1.442695
      %v847 = vpow.pop %v846
      %v848 = vsel %vm388, %v833, 0.0
      %849 = vadd.xlane.f32.xlu0 %v848
      %v850 = vpop.xlane.xlu0 %849
      %v851 = vsel %vm388, %v835, 0.0
      %852 = vadd.xlane.f32.xlu0 %v851
      %v853 = vpop.xlane.xlu0 %852
      %v854 = vsel %vm388, %v837, 0.0
      %855 = vadd.xlane.f32.xlu0 %v854
      %v856 = vpop.xlane.xlu0 %855
      %v857 = vsel %vm388, %v839, 0.0
      %858 = vadd.xlane.f32.xlu0 %v857
      %v859 = vpop.xlane.xlu0 %858
      %v860 = vsel %vm388, %v841, 0.0
      %861 = vadd.xlane.f32.xlu0 %v860
      %v862 = vpop.xlane.xlu0 %861
      %v863 = vsel %vm388, %v843, 0.0
      %864 = vadd.xlane.f32.xlu0 %v863
      %v865 = vpop.xlane.xlu0 %864
      %v866 = vsel %vm388, %v845, 0.0
      %867 = vadd.xlane.f32.xlu0 %v866
      %v868 = vpop.xlane.xlu0 %867
      %v869 = vsel %vm388, %v847, 0.0
      %870 = vadd.xlane.f32.xlu0 %v869
      %v871 = vpop.xlane.xlu0 %870
      %v872 = vrcp.pop %v850
      %v873 = vrcp.pop %v853
      %v874 = vrcp.pop %v856
      %v875 = vrcp.pop %v859
      %v876 = vrcp.pop %v862
      %v877 = vrcp.pop %v865
      %v878 = vrcp.pop %v868
      %v879 = vrcp.pop %v871
      %v880 = vmul.f32 %v833, %v872
      %v881 = vmul.f32 %v835, %v873
      %v882 = vmul.f32 %v837, %v874
      %v883 = vmul.f32 %v839, %v875
      %v884 = vmul.f32 %v841, %v876
      %v885 = vmul.f32 %v843, %v877
      %v886 = vmul.f32 %v845, %v878
      %v887 = vmul.f32 %v847, %v879
      %v888 = vpack.c.bf16 %v881, %v880
      %v889 = vpack.c.bf16 %v883, %v882
      %v890 = vpack.c.bf16 %v885, %v884
      %v891 = vpack.c.bf16 %v887, %v886
      %892 = vrot.lane.b32.xlu0 %v497, 96
      %v893 = vpop.permute.xlu0 %892
      %894 = vrot.lane.b32.xlu0 %v498, 96
      %v895 = vpop.permute.xlu0 %894
      %896 = vrot.lane.b32.xlu0 %v499, 96
      %v897 = vpop.permute.xlu0 %896
      %898 = vrot.lane.b32.xlu0 %v500, 96
      %v899 = vpop.permute.xlu0 %898
      %v905 = vsel %vm388, %v888, 0
      %v908 = vsel %vm388, %v889, 0
      %v911 = vsel %vm388, %v890, 0
      %v914 = vsel %vm388, %v891, 0
      %916 = vmatprep.subr.bf16.mxu0 0
      %917 = vmatpush1.bf16.msra.mxu0 0
      %918 = vmatprep.subr.bf16.mxu0 0
      %919 = vmatpush1.bf16.msra.mxu0 0
      %920 = vmatprep.subr.bf16.mxu0 0
      %921 = vmatpush1.bf16.msra.mxu0 0
      %922 = vmatprep.subr.bf16.mxu0 0
      %923 = vmatpush1.bf16.msra.mxu0 0
      %924 = vmatprep.subr.bf16.mxu0 0
      %925 = vmatpush1.bf16.msra.mxu0 %v899
      %926 = vmatprep.subr.bf16.mxu0 0
      %927 = vmatpush1.bf16.msra.mxu0 %v897
      %928 = vmatprep.subr.bf16.mxu0 0
      %929 = vmatpush1.bf16.msra.mxu0 %v895
      %930 = vmatprep.subr.bf16.mxu0 0
      %931 = vmatpush1.bf16.msra.mxu0 %v893
      %932 = vmatprep.subr.bf16.mxu0 0
      %933 = vmatpush2.bf16.msra.mxu0 0
      %934 = vmatprep.subr.bf16.mxu0 0
      %935 = vmatpush2.bf16.msra.mxu0 0
      %936 = vmatprep.subr.bf16.mxu0 0
      %937 = vmatpush2.bf16.msra.mxu0 0
      %938 = vmatprep.subr.bf16.mxu0 0
      %939 = vmatpush2.bf16.msra.mxu0 0
      %940 = vmatprep.subr.bf16.mxu0 0
      %941 = vmatpush2.bf16.msra.mxu0 0
      %942 = vmatprep.subr.bf16.mxu0 0
      %943 = vmatpush2.bf16.msra.mxu0 0
      %944 = vmatprep.subr.bf16.mxu0 0
      %945 = vmatpush2.bf16.msra.mxu0 0
      %946 = vmatprep.subr.bf16.mxu0 0
      %947 = vmatpush2.bf16.msra.mxu0 0
      %948 = vmatprep.mubr.bf16.mxu0 0
      %949 = vmatmul.mubr.bf16.gmra.mxu0 %v905
      %v950 = vpop.f32.mrf.mxu0
      %v951 = vadd.f32 0.0, %v950
      %v952 = vpop.f32.mrf.mxu0
      %v953 = vpop.f32.mrf.mxu0
      %v954 = vadd.f32 0.0, %v953
      %v955 = vpop.f32.mrf.mxu0
      %956 = vmatprep.mubr.bf16.mxu0 0
      %957 = vmatmul.mubr.bf16.gmra.mxu0 %v908
      %v958 = vpop.f32.mrf.mxu0
      %v959 = vadd.f32 0.0, %v958
      %v960 = vpop.f32.mrf.mxu0
      %v961 = vpop.f32.mrf.mxu0
      %v962 = vadd.f32 0.0, %v961
      %v963 = vpop.f32.mrf.mxu0
      %964 = vmatprep.mubr.bf16.mxu0 0
      %965 = vmatmul.mubr.bf16.gmra.mxu0 %v911
      %v966 = vpop.f32.mrf.mxu0
      %v967 = vadd.f32 0.0, %v966
      %v968 = vpop.f32.mrf.mxu0
      %v969 = vpop.f32.mrf.mxu0
      %v970 = vadd.f32 0.0, %v969
      %v971 = vpop.f32.mrf.mxu0
      %972 = vmatprep.mubr.bf16.mxu0 0
      %973 = vmatmul.mubr.bf16.gmra.mxu0 %v914
      %v974 = vpop.f32.mrf.mxu0
      %v975 = vadd.f32 0.0, %v974
      %v976 = vpop.f32.mrf.mxu0
      %v977 = vpop.f32.mrf.mxu0
      %v978 = vadd.f32 0.0, %v977
      %v979 = vpop.f32.mrf.mxu0
      %980 = vdwg.mxu0
      %v981 = vpack.c.bf16 %v954, %v951
      %v982 = vpack.c.bf16 %v962, %v959
      %v983 = vpack.c.bf16 %v970, %v967
      %v984 = vpack.c.bf16 %v978, %v975
      %v985 = vld [vmem:[%s1 + $0x10] sm:$0xf]
      %v986 = vld [vmem:[%s1 + $0x14] sm:$0xf]
      %v987 = vld [vmem:[%s1 + $0x18] sm:$0xf]
      %v988 = vld [vmem:[%s1 + $0x1c] sm:$0xf]
      %v993 = vunpack.c.l.b16 %v985
      %v994 = vunpack.c.l.b16 %v986
      %v995 = vunpack.c.l.b16 %v987
      %v996 = vunpack.c.l.b16 %v988
      %v997 = vpack.c.b16 %v994, %v993
      %v998 = vpack.c.b16 %v996, %v995
      %v1002 = vsel %vm290, %v981, 0
      %v1005 = vsel %vm290, %v982, 0
      %v1008 = vsel %vm290, %v983, 0
      %v1011 = vsel %vm290, %v984, 0
      %1013 = vmatprep.subr.bf16.mxu0 0
      %1014 = vmatpush1.bf16.msra.mxu0 0
      %1015 = vmatprep.subr.bf16.mxu0 0
      %1016 = vmatpush1.bf16.msra.mxu0 0
      %1017 = vmatprep.subr.bf16.mxu0 0
      %1018 = vmatpush1.bf16.msra.mxu0 0
      %1019 = vmatprep.subr.bf16.mxu0 0
      %1020 = vmatpush1.bf16.msra.mxu0 0
      %1021 = vmatprep.subr.bf16.mxu0 0
      %1022 = vmatpush1.bf16.msra.mxu0 0
      %1023 = vmatprep.subr.bf16.mxu0 0
      %1024 = vmatpush1.bf16.msra.mxu0 0
      %1025 = vmatprep.subr.bf16.mxu0 0
      %1026 = vmatpush1.bf16.msra.mxu0 %v998
      %1027 = vmatprep.subr.bf16.mxu0 0
      %1028 = vmatpush1.bf16.msra.mxu0 %v997
      %1029 = vmatprep.subr.bf16.mxu0 0
      %1030 = vmatpush2.bf16.msra.mxu0 0
      %1031 = vmatprep.subr.bf16.mxu0 0
      %1032 = vmatpush2.bf16.msra.mxu0 0
      %1033 = vmatprep.subr.bf16.mxu0 0
      %1034 = vmatpush2.bf16.msra.mxu0 0
      %1035 = vmatprep.subr.bf16.mxu0 0
      %1036 = vmatpush2.bf16.msra.mxu0 0
      %1037 = vmatprep.subr.bf16.mxu0 0
      %1038 = vmatpush2.bf16.msra.mxu0 0
      %1039 = vmatprep.subr.bf16.mxu0 0
      %1040 = vmatpush2.bf16.msra.mxu0 0
      %1041 = vmatprep.subr.bf16.mxu0 0
      %1042 = vmatpush2.bf16.msra.mxu0 0
      %1043 = vmatprep.subr.bf16.mxu0 0
      %1044 = vmatpush2.bf16.msra.mxu0 0
      %1045 = vmatprep.mubr.bf16.mxu0 0
      %1046 = vmatmul.mubr.bf16.gmra.mxu0 %v1002
      %v1047 = vpop.f32.mrf.mxu0
      %v1048 = vadd.f32 0.0, %v1047
      %v1049 = vpop.f32.mrf.mxu0
      %v1050 = vpop.f32.mrf.mxu0
      %v1051 = vadd.f32 0.0, %v1050
      %v1052 = vpop.f32.mrf.mxu0
      %1053 = vmatprep.mubr.bf16.mxu0 0
      %1054 = vmatmul.mubr.bf16.gmra.mxu0 %v1005
      %v1055 = vpop.f32.mrf.mxu0
      %v1056 = vadd.f32 0.0, %v1055
      %v1057 = vpop.f32.mrf.mxu0
      %v1058 = vpop.f32.mrf.mxu0
      %v1059 = vadd.f32 0.0, %v1058
      %v1060 = vpop.f32.mrf.mxu0
      %1061 = vmatprep.mubr.bf16.mxu0 0
      %1062 = vmatmul.mubr.bf16.gmra.mxu0 %v1008
      %v1063 = vpop.f32.mrf.mxu0
      %v1064 = vadd.f32 0.0, %v1063
      %v1065 = vpop.f32.mrf.mxu0
      %v1066 = vpop.f32.mrf.mxu0
      %v1067 = vadd.f32 0.0, %v1066
      %v1068 = vpop.f32.mrf.mxu0
      %1069 = vmatprep.mubr.bf16.mxu0 0
      %1070 = vmatmul.mubr.bf16.gmra.mxu0 %v1011
      %v1071 = vpop.f32.mrf.mxu0
      %v1072 = vadd.f32 0.0, %v1071
      %v1073 = vpop.f32.mrf.mxu0
      %v1074 = vpop.f32.mrf.mxu0
      %v1075 = vadd.f32 0.0, %v1074
      %v1076 = vpop.f32.mrf.mxu0
      %1077 = vdwg.mxu0
      %v1078 = vadd.f32 %v679, %v1048
      %v1079 = vadd.f32 %v680, %v1051
      %v1080 = vadd.f32 %v681, %v1056
      %v1081 = vadd.f32 %v682, %v1059
      %v1082 = vadd.f32 %v683, %v1064
      %v1083 = vadd.f32 %v684, %v1067
      %v1084 = vadd.f32 %v685, %v1072
      %v1085 = vadd.f32 %v686, %v1075
      %1086 = vrot.lane.b32.xlu0 %v274, 64
      %v1087 = vpop.permute.xlu0 %1086
      %1088 = vrot.lane.b32.xlu0 %v275, 64
      %v1089 = vpop.permute.xlu0 %1088
      %1090 = vrot.lane.b32.xlu0 %v276, 64
      %v1091 = vpop.permute.xlu0 %1090
      %1092 = vrot.lane.b32.xlu0 %v277, 64
      %v1093 = vpop.permute.xlu0 %1092
      %1094 = vrot.lane.b32.xlu0 %v286, 64
      %v1095 = vpop.permute.xlu0 %1094
      %1096 = vrot.lane.b32.xlu0 %v287, 64
      %v1097 = vpop.permute.xlu0 %1096
      %1098 = vrot.lane.b32.xlu0 %v288, 64
      %v1099 = vpop.permute.xlu0 %1098
      %1100 = vrot.lane.b32.xlu0 %v289, 64
      %v1101 = vpop.permute.xlu0 %1100
      %v1103 = vsel %vm290, %v1087, 0
      %v1106 = vsel %vm290, %v1089, 0
      %v1109 = vsel %vm290, %v1091, 0
      %v1112 = vsel %vm290, %v1093, 0
      %v1115 = vsel %vm290, %v1095, 0
      %v1118 = vsel %vm290, %v1097, 0
      %v1121 = vsel %vm290, %v1099, 0
      %v1124 = vsel %vm290, %v1101, 0
      %1126 = vmatprep.subr.bf16.mxu0 0
      %1127 = vmatpush1.bf16.xpose.msra.mxu0 0
      %1128 = vmatprep.subr.bf16.mxu0 0
      %1129 = vmatpush1.bf16.xpose.msra.mxu0 0
      %1130 = vmatprep.subr.bf16.mxu0 0
      %1131 = vmatpush1.bf16.xpose.msra.mxu0 0
      %1132 = vmatprep.subr.bf16.mxu0 0
      %1133 = vmatpush1.bf16.xpose.msra.mxu0 0
      %1134 = vmatprep.subr.bf16.mxu0 0
      %1135 = vmatpush1.bf16.xpose.msra.mxu0 %v1124
      %1136 = vmatprep.subr.bf16.mxu0 0
      %1137 = vmatpush1.bf16.xpose.msra.mxu0 %v1121
      %1138 = vmatprep.subr.bf16.mxu0 0
      %1139 = vmatpush1.bf16.xpose.msra.mxu0 %v1118
      %1140 = vmatprep.subr.bf16.mxu0 0
      %1141 = vmatpush1.bf16.xpose.msra.mxu0 %v1115
      %1142 = vmatprep.subr.bf16.mxu0 0
      %1143 = vmatpush2.bf16.xpose.msra.mxu0 0
      %1144 = vmatprep.subr.bf16.mxu0 0
      %1145 = vmatpush2.bf16.xpose.msra.mxu0 0
      %1146 = vmatprep.subr.bf16.mxu0 0
      %1147 = vmatpush2.bf16.xpose.msra.mxu0 0
      %1148 = vmatprep.subr.bf16.mxu0 0
      %1149 = vmatpush2.bf16.xpose.msra.mxu0 0
      %1150 = vmatprep.subr.bf16.mxu0 0
      %1151 = vmatpush2.bf16.xpose.msra.mxu0 0
      %1152 = vmatprep.subr.bf16.mxu0 0
      %1153 = vmatpush2.bf16.xpose.msra.mxu0 0
      %1154 = vmatprep.subr.bf16.mxu0 0
      %1155 = vmatpush2.bf16.xpose.msra.mxu0 0
      %1156 = vmatprep.subr.bf16.mxu0 0
      %1157 = vmatpush2.bf16.xpose.msra.mxu0 0
      %1158 = vmatprep.mubr.bf16.mxu0 0
      %1159 = vmatmul.mubr.bf16.gmra.mxu0 %v1103
      %v1160 = vpop.f32.mrf.mxu0
      %v1161 = vadd.f32 0.0, %v1160
      %v1162 = vpop.f32.mrf.mxu0
      %v1163 = vpop.f32.mrf.mxu0
      %v1164 = vadd.f32 0.0, %v1163
      %v1165 = vpop.f32.mrf.mxu0
      %1166 = vmatprep.mubr.bf16.mxu0 0
      %1167 = vmatmul.mubr.bf16.gmra.mxu0 %v1106
      %v1168 = vpop.f32.mrf.mxu0
      %v1169 = vadd.f32 0.0, %v1168
      %v1170 = vpop.f32.mrf.mxu0
      %v1171 = vpop.f32.mrf.mxu0
      %v1172 = vadd.f32 0.0, %v1171
      %v1173 = vpop.f32.mrf.mxu0
      %1174 = vmatprep.mubr.bf16.mxu0 0
      %1175 = vmatmul.mubr.bf16.gmra.mxu0 %v1109
      %v1176 = vpop.f32.mrf.mxu0
      %v1177 = vadd.f32 0.0, %v1176
      %v1178 = vpop.f32.mrf.mxu0
      %v1179 = vpop.f32.mrf.mxu0
      %v1180 = vadd.f32 0.0, %v1179
      %v1181 = vpop.f32.mrf.mxu0
      %1182 = vmatprep.mubr.bf16.mxu0 0
      %1183 = vmatmul.mubr.bf16.gmra.mxu0 %v1112
      %v1184 = vpop.f32.mrf.mxu0
      %v1185 = vadd.f32 0.0, %v1184
      %v1186 = vpop.f32.mrf.mxu0
      %v1187 = vpop.f32.mrf.mxu0
      %v1188 = vadd.f32 0.0, %v1187
      %v1189 = vpop.f32.mrf.mxu0
      %1190 = vdwg.mxu0
      %v1191 = vmul.f32 %v1161, 0.17677669
      %v1192 = vmul.f32 %v1164, 0.17677669
      %v1193 = vmul.f32 %v1169, 0.17677669
      %v1194 = vmul.f32 %v1172, 0.17677669
      %v1195 = vmul.f32 %v1177, 0.17677669
      %v1196 = vmul.f32 %v1180, 0.17677669
      %v1197 = vmul.f32 %v1185, 0.17677669
      %v1198 = vmul.f32 %v1188, 0.17677669
      %v1199 = vsel %vm388, %v1191, -inf
      %1200 = vmax.xlane.f32.xlu0 %v1199
      %v1201 = vpop.xlane.xlu0 %1200
      %v1202 = vsel %vm388, %v1192, -inf
      %1203 = vmax.xlane.f32.xlu0 %v1202
      %v1204 = vpop.xlane.xlu0 %1203
      %v1205 = vsel %vm388, %v1193, -inf
      %1206 = vmax.xlane.f32.xlu0 %v1205
      %v1207 = vpop.xlane.xlu0 %1206
      %v1208 = vsel %vm388, %v1194, -inf
      %1209 = vmax.xlane.f32.xlu0 %v1208
      %v1210 = vpop.xlane.xlu0 %1209
      %v1211 = vsel %vm388, %v1195, -inf
      %1212 = vmax.xlane.f32.xlu0 %v1211
      %v1213 = vpop.xlane.xlu0 %1212
      %v1214 = vsel %vm388, %v1196, -inf
      %1215 = vmax.xlane.f32.xlu0 %v1214
      %v1216 = vpop.xlane.xlu0 %1215
      %v1217 = vsel %vm388, %v1197, -inf
      %1218 = vmax.xlane.f32.xlu0 %v1217
      %v1219 = vpop.xlane.xlu0 %1218
      %v1220 = vsel %vm388, %v1198, -inf
      %1221 = vmax.xlane.f32.xlu0 %v1220
      %v1222 = vpop.xlane.xlu0 %1221
      %v1223 = vsub.f32 %v1191, %v1201
      %v1224 = vsub.f32 %v1192, %v1204
      %v1225 = vsub.f32 %v1193, %v1207
      %v1226 = vsub.f32 %v1194, %v1210
      %v1227 = vsub.f32 %v1195, %v1213
      %v1228 = vsub.f32 %v1196, %v1216
      %v1229 = vsub.f32 %v1197, %v1219
      %v1230 = vsub.f32 %v1198, %v1222
      %v1231 = vmul.f32 %v1223, 1.442695
      %v1232 = vpow.pop %v1231
      %v1233 = vmul.f32 %v1224, 1.442695
      %v1234 = vpow.pop %v1233
      %v1235 = vmul.f32 %v1225, 1.442695
      %v1236 = vpow.pop %v1235
      %v1237 = vmul.f32 %v1226, 1.442695
      %v1238 = vpow.pop %v1237
      %v1239 = vmul.f32 %v1227, 1.442695
      %v1240 = vpow.pop %v1239
      %v1241 = vmul.f32 %v1228, 1.442695
      %v1242 = vpow.pop %v1241
      %v1243 = vmul.f32 %v1229, 1.442695
      %v1244 = vpow.pop %v1243
      %v1245 = vmul.f32 %v1230, 1.442695
      %v1246 = vpow.pop %v1245
      %v1247 = vsel %vm388, %v1232, 0.0
      %1248 = vadd.xlane.f32.xlu0 %v1247
      %v1249 = vpop.xlane.xlu0 %1248
      %v1250 = vsel %vm388, %v1234, 0.0
      %1251 = vadd.xlane.f32.xlu0 %v1250
      %v1252 = vpop.xlane.xlu0 %1251
      %v1253 = vsel %vm388, %v1236, 0.0
      %1254 = vadd.xlane.f32.xlu0 %v1253
      %v1255 = vpop.xlane.xlu0 %1254
      %v1256 = vsel %vm388, %v1238, 0.0
      %1257 = vadd.xlane.f32.xlu0 %v1256
      %v1258 = vpop.xlane.xlu0 %1257
      %v1259 = vsel %vm388, %v1240, 0.0
      %1260 = vadd.xlane.f32.xlu0 %v1259
      %v1261 = vpop.xlane.xlu0 %1260
      %v1262 = vsel %vm388, %v1242, 0.0
      %1263 = vadd.xlane.f32.xlu0 %v1262
      %v1264 = vpop.xlane.xlu0 %1263
      %v1265 = vsel %vm388, %v1244, 0.0
      %1266 = vadd.xlane.f32.xlu0 %v1265
      %v1267 = vpop.xlane.xlu0 %1266
      %v1268 = vsel %vm388, %v1246, 0.0
      %1269 = vadd.xlane.f32.xlu0 %v1268
      %v1270 = vpop.xlane.xlu0 %1269
      %v1271 = vrcp.pop %v1249
      %v1272 = vrcp.pop %v1252
      %v1273 = vrcp.pop %v1255
      %v1274 = vrcp.pop %v1258
      %v1275 = vrcp.pop %v1261
      %v1276 = vrcp.pop %v1264
      %v1277 = vrcp.pop %v1267
      %v1278 = vrcp.pop %v1270
      %v1279 = vmul.f32 %v1232, %v1271
      %v1280 = vmul.f32 %v1234, %v1272
      %v1281 = vmul.f32 %v1236, %v1273
      %v1282 = vmul.f32 %v1238, %v1274
      %v1283 = vmul.f32 %v1240, %v1275
      %v1284 = vmul.f32 %v1242, %v1276
      %v1285 = vmul.f32 %v1244, %v1277
      %v1286 = vmul.f32 %v1246, %v1278
      %v1287 = vpack.c.bf16 %v1280, %v1279
      %v1288 = vpack.c.bf16 %v1282, %v1281
      %v1289 = vpack.c.bf16 %v1284, %v1283
      %v1290 = vpack.c.bf16 %v1286, %v1285
      %1291 = vrot.lane.b32.xlu0 %v497, 64
      %v1292 = vpop.permute.xlu0 %1291
      %1293 = vrot.lane.b32.xlu0 %v498, 64
      %v1294 = vpop.permute.xlu0 %1293
      %1295 = vrot.lane.b32.xlu0 %v499, 64
      %v1296 = vpop.permute.xlu0 %1295
      %1297 = vrot.lane.b32.xlu0 %v500, 64
      %v1298 = vpop.permute.xlu0 %1297
      %v1304 = vsel %vm388, %v1287, 0
      %v1307 = vsel %vm388, %v1288, 0
      %v1310 = vsel %vm388, %v1289, 0
      %v1313 = vsel %vm388, %v1290, 0
      %1315 = vmatprep.subr.bf16.mxu0 0
      %1316 = vmatpush1.bf16.msra.mxu0 0
      %1317 = vmatprep.subr.bf16.mxu0 0
      %1318 = vmatpush1.bf16.msra.mxu0 0
      %1319 = vmatprep.subr.bf16.mxu0 0
      %1320 = vmatpush1.bf16.msra.mxu0 0
      %1321 = vmatprep.subr.bf16.mxu0 0
      %1322 = vmatpush1.bf16.msra.mxu0 0
      %1323 = vmatprep.subr.bf16.mxu0 0
      %1324 = vmatpush1.bf16.msra.mxu0 %v1298
      %1325 = vmatprep.subr.bf16.mxu0 0
      %1326 = vmatpush1.bf16.msra.mxu0 %v1296
      %1327 = vmatprep.subr.bf16.mxu0 0
      %1328 = vmatpush1.bf16.msra.mxu0 %v1294
      %1329 = vmatprep.subr.bf16.mxu0 0
      %1330 = vmatpush1.bf16.msra.mxu0 %v1292
      %1331 = vmatprep.subr.bf16.mxu0 0
      %1332 = vmatpush2.bf16.msra.mxu0 0
      %1333 = vmatprep.subr.bf16.mxu0 0
      %1334 = vmatpush2.bf16.msra.mxu0 0
      %1335 = vmatprep.subr.bf16.mxu0 0
      %1336 = vmatpush2.bf16.msra.mxu0 0
      %1337 = vmatprep.subr.bf16.mxu0 0
      %1338 = vmatpush2.bf16.msra.mxu0 0
      %1339 = vmatprep.subr.bf16.mxu0 0
      %1340 = vmatpush2.bf16.msra.mxu0 0
      %1341 = vmatprep.subr.bf16.mxu0 0
      %1342 = vmatpush2.bf16.msra.mxu0 0
      %1343 = vmatprep.subr.bf16.mxu0 0
      %1344 = vmatpush2.bf16.msra.mxu0 0
      %1345 = vmatprep.subr.bf16.mxu0 0
      %1346 = vmatpush2.bf16.msra.mxu0 0
      %1347 = vmatprep.mubr.bf16.mxu0 0
      %1348 = vmatmul.mubr.bf16.gmra.mxu0 %v1304
      %v1349 = vpop.f32.mrf.mxu0
      %v1350 = vadd.f32 0.0, %v1349
      %v1351 = vpop.f32.mrf.mxu0
      %v1352 = vpop.f32.mrf.mxu0
      %v1353 = vadd.f32 0.0, %v1352
      %v1354 = vpop.f32.mrf.mxu0
      %1355 = vmatprep.mubr.bf16.mxu0 0
      %1356 = vmatmul.mubr.bf16.gmra.mxu0 %v1307
      %v1357 = vpop.f32.mrf.mxu0
      %v1358 = vadd.f32 0.0, %v1357
      %v1359 = vpop.f32.mrf.mxu0
      %v1360 = vpop.f32.mrf.mxu0
      %v1361 = vadd.f32 0.0, %v1360
      %v1362 = vpop.f32.mrf.mxu0
      %1363 = vmatprep.mubr.bf16.mxu0 0
      %1364 = vmatmul.mubr.bf16.gmra.mxu0 %v1310
      %v1365 = vpop.f32.mrf.mxu0
      %v1366 = vadd.f32 0.0, %v1365
      %v1367 = vpop.f32.mrf.mxu0
      %v1368 = vpop.f32.mrf.mxu0
      %v1369 = vadd.f32 0.0, %v1368
      %v1370 = vpop.f32.mrf.mxu0
      %1371 = vmatprep.mubr.bf16.mxu0 0
      %1372 = vmatmul.mubr.bf16.gmra.mxu0 %v1313
      %v1373 = vpop.f32.mrf.mxu0
      %v1374 = vadd.f32 0.0, %v1373
      %v1375 = vpop.f32.mrf.mxu0
      %v1376 = vpop.f32.mrf.mxu0
      %v1377 = vadd.f32 0.0, %v1376
      %v1378 = vpop.f32.mrf.mxu0
      %1379 = vdwg.mxu0
      %v1380 = vpack.c.bf16 %v1353, %v1350
      %v1381 = vpack.c.bf16 %v1361, %v1358
      %v1382 = vpack.c.bf16 %v1369, %v1366
      %v1383 = vpack.c.bf16 %v1377, %v1374
      %v1384 = vld [vmem:[%s1 + $0x20] sm:$0xf]
      %v1385 = vld [vmem:[%s1 + $0x24] sm:$0xf]
      %v1386 = vld [vmem:[%s1 + $0x28] sm:$0xf]
      %v1387 = vld [vmem:[%s1 + $0x2c] sm:$0xf]
      %v1392 = vunpack.c.l.b16 %v1384
      %v1393 = vunpack.c.l.b16 %v1385
      %v1394 = vunpack.c.l.b16 %v1386
      %v1395 = vunpack.c.l.b16 %v1387
      %v1396 = vpack.c.b16 %v1393, %v1392
      %v1397 = vpack.c.b16 %v1395, %v1394
      %v1401 = vsel %vm290, %v1380, 0
      %v1404 = vsel %vm290, %v1381, 0
      %v1407 = vsel %vm290, %v1382, 0
      %v1410 = vsel %vm290, %v1383, 0
      %1412 = vmatprep.subr.bf16.mxu0 0
      %1413 = vmatpush1.bf16.msra.mxu0 0
      %1414 = vmatprep.subr.bf16.mxu0 0
      %1415 = vmatpush1.bf16.msra.mxu0 0
      %1416 = vmatprep.subr.bf16.mxu0 0
      %1417 = vmatpush1.bf16.msra.mxu0 0
      %1418 = vmatprep.subr.bf16.mxu0 0
      %1419 = vmatpush1.bf16.msra.mxu0 0
      %1420 = vmatprep.subr.bf16.mxu0 0
      %1421 = vmatpush1.bf16.msra.mxu0 0
      %1422 = vmatprep.subr.bf16.mxu0 0
      %1423 = vmatpush1.bf16.msra.mxu0 0
      %1424 = vmatprep.subr.bf16.mxu0 0
      %1425 = vmatpush1.bf16.msra.mxu0 %v1397
      %1426 = vmatprep.subr.bf16.mxu0 0
      %1427 = vmatpush1.bf16.msra.mxu0 %v1396
      %1428 = vmatprep.subr.bf16.mxu0 0
      %1429 = vmatpush2.bf16.msra.mxu0 0
      %1430 = vmatprep.subr.bf16.mxu0 0
      %1431 = vmatpush2.bf16.msra.mxu0 0
      %1432 = vmatprep.subr.bf16.mxu0 0
      %1433 = vmatpush2.bf16.msra.mxu0 0
      %1434 = vmatprep.subr.bf16.mxu0 0
      %1435 = vmatpush2.bf16.msra.mxu0 0
      %1436 = vmatprep.subr.bf16.mxu0 0
      %1437 = vmatpush2.bf16.msra.mxu0 0
      %1438 = vmatprep.subr.bf16.mxu0 0
      %1439 = vmatpush2.bf16.msra.mxu0 0
      %1440 = vmatprep.subr.bf16.mxu0 0
      %1441 = vmatpush2.bf16.msra.mxu0 0
      %1442 = vmatprep.subr.bf16.mxu0 0
      %1443 = vmatpush2.bf16.msra.mxu0 0
      %1444 = vmatprep.mubr.bf16.mxu0 0
      %1445 = vmatmul.mubr.bf16.gmra.mxu0 %v1401
      %v1446 = vpop.f32.mrf.mxu0
      %v1447 = vadd.f32 0.0, %v1446
      %v1448 = vpop.f32.mrf.mxu0
      %v1449 = vpop.f32.mrf.mxu0
      %v1450 = vadd.f32 0.0, %v1449
      %v1451 = vpop.f32.mrf.mxu0
      %1452 = vmatprep.mubr.bf16.mxu0 0
      %1453 = vmatmul.mubr.bf16.gmra.mxu0 %v1404
      %v1454 = vpop.f32.mrf.mxu0
      %v1455 = vadd.f32 0.0, %v1454
      %v1456 = vpop.f32.mrf.mxu0
      %v1457 = vpop.f32.mrf.mxu0
      %v1458 = vadd.f32 0.0, %v1457
      %v1459 = vpop.f32.mrf.mxu0
      %1460 = vmatprep.mubr.bf16.mxu0 0
      %1461 = vmatmul.mubr.bf16.gmra.mxu0 %v1407
      %v1462 = vpop.f32.mrf.mxu0
      %v1463 = vadd.f32 0.0, %v1462
      %v1464 = vpop.f32.mrf.mxu0
      %v1465 = vpop.f32.mrf.mxu0
      %v1466 = vadd.f32 0.0, %v1465
      %v1467 = vpop.f32.mrf.mxu0
      %1468 = vmatprep.mubr.bf16.mxu0 0
      %1469 = vmatmul.mubr.bf16.gmra.mxu0 %v1410
      %v1470 = vpop.f32.mrf.mxu0
      %v1471 = vadd.f32 0.0, %v1470
      %v1472 = vpop.f32.mrf.mxu0
      %v1473 = vpop.f32.mrf.mxu0
      %v1474 = vadd.f32 0.0, %v1473
      %v1475 = vpop.f32.mrf.mxu0
      %1476 = vdwg.mxu0
      %v1477 = vadd.f32 %v1078, %v1447
      %v1478 = vadd.f32 %v1079, %v1450
      %v1479 = vadd.f32 %v1080, %v1455
      %v1480 = vadd.f32 %v1081, %v1458
      %v1481 = vadd.f32 %v1082, %v1463
      %v1482 = vadd.f32 %v1083, %v1466
      %v1483 = vadd.f32 %v1084, %v1471
      %v1484 = vadd.f32 %v1085, %v1474
      %1485 = vrot.lane.b32.xlu0 %v274, 32
      %v1486 = vpop.permute.xlu0 %1485
      %1487 = vrot.lane.b32.xlu0 %v275, 32
      %v1488 = vpop.permute.xlu0 %1487
      %1489 = vrot.lane.b32.xlu0 %v276, 32
      %v1490 = vpop.permute.xlu0 %1489
      %1491 = vrot.lane.b32.xlu0 %v277, 32
      %v1492 = vpop.permute.xlu0 %1491
      %1493 = vrot.lane.b32.xlu0 %v286, 32
      %v1494 = vpop.permute.xlu0 %1493
      %1495 = vrot.lane.b32.xlu0 %v287, 32
      %v1496 = vpop.permute.xlu0 %1495
      %1497 = vrot.lane.b32.xlu0 %v288, 32
      %v1498 = vpop.permute.xlu0 %1497
      %1499 = vrot.lane.b32.xlu0 %v289, 32
      %v1500 = vpop.permute.xlu0 %1499
      %v1502 = vsel %vm290, %v1486, 0
      %v1505 = vsel %vm290, %v1488, 0
      %v1508 = vsel %vm290, %v1490, 0
      %v1511 = vsel %vm290, %v1492, 0
      %v1514 = vsel %vm290, %v1494, 0
      %v1517 = vsel %vm290, %v1496, 0
      %v1520 = vsel %vm290, %v1498, 0
      %v1523 = vsel %vm290, %v1500, 0
      %1525 = vmatprep.subr.bf16.mxu0 0
      %1526 = vmatpush1.bf16.xpose.msra.mxu0 0
      %1527 = vmatprep.subr.bf16.mxu0 0
      %1528 = vmatpush1.bf16.xpose.msra.mxu0 0
      %1529 = vmatprep.subr.bf16.mxu0 0
      %1530 = vmatpush1.bf16.xpose.msra.mxu0 0
      %1531 = vmatprep.subr.bf16.mxu0 0
      %1532 = vmatpush1.bf16.xpose.msra.mxu0 0
      %1533 = vmatprep.subr.bf16.mxu0 0
      %1534 = vmatpush1.bf16.xpose.msra.mxu0 %v1523
      %1535 = vmatprep.subr.bf16.mxu0 0
      %1536 = vmatpush1.bf16.xpose.msra.mxu0 %v1520
      %1537 = vmatprep.subr.bf16.mxu0 0
      %1538 = vmatpush1.bf16.xpose.msra.mxu0 %v1517
      %1539 = vmatprep.subr.bf16.mxu0 0
      %1540 = vmatpush1.bf16.xpose.msra.mxu0 %v1514
      %1541 = vmatprep.subr.bf16.mxu0 0
      %1542 = vmatpush2.bf16.xpose.msra.mxu0 0
      %1543 = vmatprep.subr.bf16.mxu0 0
      %1544 = vmatpush2.bf16.xpose.msra.mxu0 0
      %1545 = vmatprep.subr.bf16.mxu0 0
      %1546 = vmatpush2.bf16.xpose.msra.mxu0 0
      %1547 = vmatprep.subr.bf16.mxu0 0
      %1548 = vmatpush2.bf16.xpose.msra.mxu0 0
      %1549 = vmatprep.subr.bf16.mxu0 0
      %1550 = vmatpush2.bf16.xpose.msra.mxu0 0
      %1551 = vmatprep.subr.bf16.mxu0 0
      %1552 = vmatpush2.bf16.xpose.msra.mxu0 0
      %1553 = vmatprep.subr.bf16.mxu0 0
      %1554 = vmatpush2.bf16.xpose.msra.mxu0 0
      %1555 = vmatprep.subr.bf16.mxu0 0
      %1556 = vmatpush2.bf16.xpose.msra.mxu0 0
      %1557 = vmatprep.mubr.bf16.mxu0 0
      %1558 = vmatmul.mubr.bf16.gmra.mxu0 %v1502
      %v1559 = vpop.f32.mrf.mxu0
      %v1560 = vadd.f32 0.0, %v1559
      %v1561 = vpop.f32.mrf.mxu0
      %v1562 = vpop.f32.mrf.mxu0
      %v1563 = vadd.f32 0.0, %v1562
      %v1564 = vpop.f32.mrf.mxu0
      %1565 = vmatprep.mubr.bf16.mxu0 0
      %1566 = vmatmul.mubr.bf16.gmra.mxu0 %v1505
      %v1567 = vpop.f32.mrf.mxu0
      %v1568 = vadd.f32 0.0, %v1567
      %v1569 = vpop.f32.mrf.mxu0
      %v1570 = vpop.f32.mrf.mxu0
      %v1571 = vadd.f32 0.0, %v1570
      %v1572 = vpop.f32.mrf.mxu0
      %1573 = vmatprep.mubr.bf16.mxu0 0
      %1574 = vmatmul.mubr.bf16.gmra.mxu0 %v1508
      %v1575 = vpop.f32.mrf.mxu0
      %v1576 = vadd.f32 0.0, %v1575
      %v1577 = vpop.f32.mrf.mxu0
      %v1578 = vpop.f32.mrf.mxu0
      %v1579 = vadd.f32 0.0, %v1578
      %v1580 = vpop.f32.mrf.mxu0
      %1581 = vmatprep.mubr.bf16.mxu0 0
      %1582 = vmatmul.mubr.bf16.gmra.mxu0 %v1511
      %v1583 = vpop.f32.mrf.mxu0
      %v1584 = vadd.f32 0.0, %v1583
      %v1585 = vpop.f32.mrf.mxu0
      %v1586 = vpop.f32.mrf.mxu0
      %v1587 = vadd.f32 0.0, %v1586
      %v1588 = vpop.f32.mrf.mxu0
      %1589 = vdwg.mxu0
      %v1590 = vmul.f32 %v1560, 0.17677669
      %v1591 = vmul.f32 %v1563, 0.17677669
      %v1592 = vmul.f32 %v1568, 0.17677669
      %v1593 = vmul.f32 %v1571, 0.17677669
      %v1594 = vmul.f32 %v1576, 0.17677669
      %v1595 = vmul.f32 %v1579, 0.17677669
      %v1596 = vmul.f32 %v1584, 0.17677669
      %v1597 = vmul.f32 %v1587, 0.17677669
      %v1598 = vsel %vm388, %v1590, -inf
      %1599 = vmax.xlane.f32.xlu0 %v1598
      %v1600 = vpop.xlane.xlu0 %1599
      %v1601 = vsel %vm388, %v1591, -inf
      %1602 = vmax.xlane.f32.xlu0 %v1601
      %v1603 = vpop.xlane.xlu0 %1602
      %v1604 = vsel %vm388, %v1592, -inf
      %1605 = vmax.xlane.f32.xlu0 %v1604
      %v1606 = vpop.xlane.xlu0 %1605
      %v1607 = vsel %vm388, %v1593, -inf
      %1608 = vmax.xlane.f32.xlu0 %v1607
      %v1609 = vpop.xlane.xlu0 %1608
      %v1610 = vsel %vm388, %v1594, -inf
      %1611 = vmax.xlane.f32.xlu0 %v1610
      %v1612 = vpop.xlane.xlu0 %1611
      %v1613 = vsel %vm388, %v1595, -inf
      %1614 = vmax.xlane.f32.xlu0 %v1613
      %v1615 = vpop.xlane.xlu0 %1614
      %v1616 = vsel %vm388, %v1596, -inf
      %1617 = vmax.xlane.f32.xlu0 %v1616
      %v1618 = vpop.xlane.xlu0 %1617
      %v1619 = vsel %vm388, %v1597, -inf
      %1620 = vmax.xlane.f32.xlu0 %v1619
      %v1621 = vpop.xlane.xlu0 %1620
      %v1622 = vsub.f32 %v1590, %v1600
      %v1623 = vsub.f32 %v1591, %v1603
      %v1624 = vsub.f32 %v1592, %v1606
      %v1625 = vsub.f32 %v1593, %v1609
      %v1626 = vsub.f32 %v1594, %v1612
      %v1627 = vsub.f32 %v1595, %v1615
      %v1628 = vsub.f32 %v1596, %v1618
      %v1629 = vsub.f32 %v1597, %v1621
      %v1630 = vmul.f32 %v1622, 1.442695
      %v1631 = vpow.pop %v1630
      %v1632 = vmul.f32 %v1623, 1.442695
      %v1633 = vpow.pop %v1632
      %v1634 = vmul.f32 %v1624, 1.442695
      %v1635 = vpow.pop %v1634
      %v1636 = vmul.f32 %v1625, 1.442695
      %v1637 = vpow.pop %v1636
      %v1638 = vmul.f32 %v1626, 1.442695
      %v1639 = vpow.pop %v1638
      %v1640 = vmul.f32 %v1627, 1.442695
      %v1641 = vpow.pop %v1640
      %v1642 = vmul.f32 %v1628, 1.442695
      %v1643 = vpow.pop %v1642
      %v1644 = vmul.f32 %v1629, 1.442695
      %v1645 = vpow.pop %v1644
      %v1646 = vsel %vm388, %v1631, 0.0
      %1647 = vadd.xlane.f32.xlu0 %v1646
      %v1648 = vpop.xlane.xlu0 %1647
      %v1649 = vsel %vm388, %v1633, 0.0
      %1650 = vadd.xlane.f32.xlu0 %v1649
      %v1651 = vpop.xlane.xlu0 %1650
      %v1652 = vsel %vm388, %v1635, 0.0
      %1653 = vadd.xlane.f32.xlu0 %v1652
      %v1654 = vpop.xlane.xlu0 %1653
      %v1655 = vsel %vm388, %v1637, 0.0
      %1656 = vadd.xlane.f32.xlu0 %v1655
      %v1657 = vpop.xlane.xlu0 %1656
      %v1658 = vsel %vm388, %v1639, 0.0
      %1659 = vadd.xlane.f32.xlu0 %v1658
      %v1660 = vpop.xlane.xlu0 %1659
      %v1661 = vsel %vm388, %v1641, 0.0
      %1662 = vadd.xlane.f32.xlu0 %v1661
      %v1663 = vpop.xlane.xlu0 %1662
      %v1664 = vsel %vm388, %v1643, 0.0
      %1665 = vadd.xlane.f32.xlu0 %v1664
      %v1666 = vpop.xlane.xlu0 %1665
      %v1667 = vsel %vm388, %v1645, 0.0
      %1668 = vadd.xlane.f32.xlu0 %v1667
      %v1669 = vpop.xlane.xlu0 %1668
      %v1670 = vrcp.pop %v1648
      %v1671 = vrcp.pop %v1651
      %v1672 = vrcp.pop %v1654
      %v1673 = vrcp.pop %v1657
      %v1674 = vrcp.pop %v1660
      %v1675 = vrcp.pop %v1663
      %v1676 = vrcp.pop %v1666
      %v1677 = vrcp.pop %v1669
      %v1678 = vmul.f32 %v1631, %v1670
      %v1679 = vmul.f32 %v1633, %v1671
      %v1680 = vmul.f32 %v1635, %v1672
      %v1681 = vmul.f32 %v1637, %v1673
      %v1682 = vmul.f32 %v1639, %v1674
      %v1683 = vmul.f32 %v1641, %v1675
      %v1684 = vmul.f32 %v1643, %v1676
      %v1685 = vmul.f32 %v1645, %v1677
      %v1686 = vpack.c.bf16 %v1679, %v1678
      %v1687 = vpack.c.bf16 %v1681, %v1680
      %v1688 = vpack.c.bf16 %v1683, %v1682
      %v1689 = vpack.c.bf16 %v1685, %v1684
      %1690 = vrot.lane.b32.xlu0 %v497, 32
      %v1691 = vpop.permute.xlu0 %1690
      %1692 = vrot.lane.b32.xlu0 %v498, 32
      %v1693 = vpop.permute.xlu0 %1692
      %1694 = vrot.lane.b32.xlu0 %v499, 32
      %v1695 = vpop.permute.xlu0 %1694
      %1696 = vrot.lane.b32.xlu0 %v500, 32
      %v1697 = vpop.permute.xlu0 %1696
      %v1703 = vsel %vm388, %v1686, 0
      %v1706 = vsel %vm388, %v1687, 0
      %v1709 = vsel %vm388, %v1688, 0
      %v1712 = vsel %vm388, %v1689, 0
      %1714 = vmatprep.subr.bf16.mxu0 0
      %1715 = vmatpush1.bf16.msra.mxu0 0
      %1716 = vmatprep.subr.bf16.mxu0 0
      %1717 = vmatpush1.bf16.msra.mxu0 0
      %1718 = vmatprep.subr.bf16.mxu0 0
      %1719 = vmatpush1.bf16.msra.mxu0 0
      %1720 = vmatprep.subr.bf16.mxu0 0
      %1721 = vmatpush1.bf16.msra.mxu0 0
      %1722 = vmatprep.subr.bf16.mxu0 0
      %1723 = vmatpush1.bf16.msra.mxu0 %v1697
      %1724 = vmatprep.subr.bf16.mxu0 0
      %1725 = vmatpush1.bf16.msra.mxu0 %v1695
      %1726 = vmatprep.subr.bf16.mxu0 0
      %1727 = vmatpush1.bf16.msra.mxu0 %v1693
      %1728 = vmatprep.subr.bf16.mxu0 0
      %1729 = vmatpush1.bf16.msra.mxu0 %v1691
      %1730 = vmatprep.subr.bf16.mxu0 0
      %1731 = vmatpush2.bf16.msra.mxu0 0
      %1732 = vmatprep.subr.bf16.mxu0 0
      %1733 = vmatpush2.bf16.msra.mxu0 0
      %1734 = vmatprep.subr.bf16.mxu0 0
      %1735 = vmatpush2.bf16.msra.mxu0 0
      %1736 = vmatprep.subr.bf16.mxu0 0
      %1737 = vmatpush2.bf16.msra.mxu0 0
      %1738 = vmatprep.subr.bf16.mxu0 0
      %1739 = vmatpush2.bf16.msra.mxu0 0
      %1740 = vmatprep.subr.bf16.mxu0 0
      %1741 = vmatpush2.bf16.msra.mxu0 0
      %1742 = vmatprep.subr.bf16.mxu0 0
      %1743 = vmatpush2.bf16.msra.mxu0 0
      %1744 = vmatprep.subr.bf16.mxu0 0
      %1745 = vmatpush2.bf16.msra.mxu0 0
      %1746 = vmatprep.mubr.bf16.mxu0 0
      %1747 = vmatmul.mubr.bf16.gmra.mxu0 %v1703
      %v1748 = vpop.f32.mrf.mxu0
      %v1749 = vadd.f32 0.0, %v1748
      %v1750 = vpop.f32.mrf.mxu0
      %v1751 = vpop.f32.mrf.mxu0
      %v1752 = vadd.f32 0.0, %v1751
      %v1753 = vpop.f32.mrf.mxu0
      %1754 = vmatprep.mubr.bf16.mxu0 0
      %1755 = vmatmul.mubr.bf16.gmra.mxu0 %v1706
      %v1756 = vpop.f32.mrf.mxu0
      %v1757 = vadd.f32 0.0, %v1756
      %v1758 = vpop.f32.mrf.mxu0
      %v1759 = vpop.f32.mrf.mxu0
      %v1760 = vadd.f32 0.0, %v1759
      %v1761 = vpop.f32.mrf.mxu0
      %1762 = vmatprep.mubr.bf16.mxu0 0
      %1763 = vmatmul.mubr.bf16.gmra.mxu0 %v1709
      %v1764 = vpop.f32.mrf.mxu0
      %v1765 = vadd.f32 0.0, %v1764
      %v1766 = vpop.f32.mrf.mxu0
      %v1767 = vpop.f32.mrf.mxu0
      %v1768 = vadd.f32 0.0, %v1767
      %v1769 = vpop.f32.mrf.mxu0
      %1770 = vmatprep.mubr.bf16.mxu0 0
      %1771 = vmatmul.mubr.bf16.gmra.mxu0 %v1712
      %v1772 = vpop.f32.mrf.mxu0
      %v1773 = vadd.f32 0.0, %v1772
      %v1774 = vpop.f32.mrf.mxu0
      %v1775 = vpop.f32.mrf.mxu0
      %v1776 = vadd.f32 0.0, %v1775
      %v1777 = vpop.f32.mrf.mxu0
      %1778 = vdwg.mxu0
      %v1779 = vpack.c.bf16 %v1752, %v1749
      %v1780 = vpack.c.bf16 %v1760, %v1757
      %v1781 = vpack.c.bf16 %v1768, %v1765
      %v1782 = vpack.c.bf16 %v1776, %v1773
      %v1783 = vld [vmem:[%s1 + $0x30] sm:$0xf]
      %v1784 = vld [vmem:[%s1 + $0x34] sm:$0xf]
      %v1785 = vld [vmem:[%s1 + $0x38] sm:$0xf]
      %v1786 = vld [vmem:[%s1 + $0x3c] sm:$0xf]
      %v1791 = vunpack.c.l.b16 %v1783
      %v1792 = vunpack.c.l.b16 %v1784
      %v1793 = vunpack.c.l.b16 %v1785
      %v1794 = vunpack.c.l.b16 %v1786
      %v1795 = vpack.c.b16 %v1792, %v1791
      %v1796 = vpack.c.b16 %v1794, %v1793
      %v1800 = vsel %vm290, %v1779, 0
      %v1803 = vsel %vm290, %v1780, 0
      %v1806 = vsel %vm290, %v1781, 0
      %v1809 = vsel %vm290, %v1782, 0
      %1811 = vmatprep.subr.bf16.mxu0 0
      %1812 = vmatpush1.bf16.msra.mxu0 0
      %1813 = vmatprep.subr.bf16.mxu0 0
      %1814 = vmatpush1.bf16.msra.mxu0 0
      %1815 = vmatprep.subr.bf16.mxu0 0
      %1816 = vmatpush1.bf16.msra.mxu0 0
      %1817 = vmatprep.subr.bf16.mxu0 0
      %1818 = vmatpush1.bf16.msra.mxu0 0
      %1819 = vmatprep.subr.bf16.mxu0 0
      %1820 = vmatpush1.bf16.msra.mxu0 0
      %1821 = vmatprep.subr.bf16.mxu0 0
      %1822 = vmatpush1.bf16.msra.mxu0 0
      %1823 = vmatprep.subr.bf16.mxu0 0
      %1824 = vmatpush1.bf16.msra.mxu0 %v1796
      %1825 = vmatprep.subr.bf16.mxu0 0
      %1826 = vmatpush1.bf16.msra.mxu0 %v1795
      %1827 = vmatprep.subr.bf16.mxu0 0
      %1828 = vmatpush2.bf16.msra.mxu0 0
      %1829 = vmatprep.subr.bf16.mxu0 0
      %1830 = vmatpush2.bf16.msra.mxu0 0
      %1831 = vmatprep.subr.bf16.mxu0 0
      %1832 = vmatpush2.bf16.msra.mxu0 0
      %1833 = vmatprep.subr.bf16.mxu0 0
      %1834 = vmatpush2.bf16.msra.mxu0 0
      %1835 = vmatprep.subr.bf16.mxu0 0
      %1836 = vmatpush2.bf16.msra.mxu0 0
      %1837 = vmatprep.subr.bf16.mxu0 0
      %1838 = vmatpush2.bf16.msra.mxu0 0
      %1839 = vmatprep.subr.bf16.mxu0 0
      %1840 = vmatpush2.bf16.msra.mxu0 0
      %1841 = vmatprep.subr.bf16.mxu0 0
      %1842 = vmatpush2.bf16.msra.mxu0 0
      %1843 = vmatprep.mubr.bf16.mxu0 0
      %1844 = vmatmul.mubr.bf16.gmra.mxu0 %v1800
      %v1845 = vpop.f32.mrf.mxu0
      %v1846 = vadd.f32 0.0, %v1845
      %v1847 = vpop.f32.mrf.mxu0
      %v1848 = vpop.f32.mrf.mxu0
      %v1849 = vadd.f32 0.0, %v1848
      %v1850 = vpop.f32.mrf.mxu0
      %1851 = vmatprep.mubr.bf16.mxu0 0
      %1852 = vmatmul.mubr.bf16.gmra.mxu0 %v1803
      %v1853 = vpop.f32.mrf.mxu0
      %v1854 = vadd.f32 0.0, %v1853
      %v1855 = vpop.f32.mrf.mxu0
      %v1856 = vpop.f32.mrf.mxu0
      %v1857 = vadd.f32 0.0, %v1856
      %v1858 = vpop.f32.mrf.mxu0
      %1859 = vmatprep.mubr.bf16.mxu0 0
      %1860 = vmatmul.mubr.bf16.gmra.mxu0 %v1806
      %v1861 = vpop.f32.mrf.mxu0
      %v1862 = vadd.f32 0.0, %v1861
      %v1863 = vpop.f32.mrf.mxu0
      %v1864 = vpop.f32.mrf.mxu0
      %v1865 = vadd.f32 0.0, %v1864
      %v1866 = vpop.f32.mrf.mxu0
      %1867 = vmatprep.mubr.bf16.mxu0 0
      %1868 = vmatmul.mubr.bf16.gmra.mxu0 %v1809
      %v1869 = vpop.f32.mrf.mxu0
      %v1870 = vadd.f32 0.0, %v1869
      %v1871 = vpop.f32.mrf.mxu0
      %v1872 = vpop.f32.mrf.mxu0
      %v1873 = vadd.f32 0.0, %v1872
      %v1874 = vpop.f32.mrf.mxu0
      %1875 = vdwg.mxu0
      %v1876 = vadd.f32 %v1477, %v1846
      %v1877 = vadd.f32 %v1478, %v1849
      %v1878 = vadd.f32 %v1479, %v1854
      %v1879 = vadd.f32 %v1480, %v1857
      %v1880 = vadd.f32 %v1481, %v1862
      %v1881 = vadd.f32 %v1482, %v1865
      %v1882 = vadd.f32 %v1483, %v1870
      %v1883 = vadd.f32 %v1484, %v1873
      %1884 = vst [vmem:[%s217] sm:$0xff] %v1876
      %1885 = vst [vmem:[%s217 + $0x8] sm:$0xff] %v1877
      %1886 = vst [vmem:[%s217 + $0x10] sm:$0xff] %v1878
      %1887 = vst [vmem:[%s217 + $0x18] sm:$0xff] %v1879
      %1888 = vst [vmem:[%s217 + $0x20] sm:$0xff] %v1880
      %1889 = vst [vmem:[%s217 + $0x28] sm:$0xff] %v1881
      %1890 = vst [vmem:[%s217 + $0x30] sm:$0xff] %v1882
      %1891 = vst [vmem:[%s217 + $0x38] sm:$0xff] %v1883
      %p1892 = scmp.lt.s32.totalorder %s15, 1
      %s1893 = scalar_select %p1892, %s15, 1
      %s1894 = smul.addr %s1893, 8
      %s1895 = smul.addr %s1894, 8
      %s1896 = scalar_lea.vmem %s4, %s1895
      // Predicated region
      $region37: #{block_forward.5} parent=35 // pred_check
        %p1897 = pneg %p127
      $region38: #{block_forward.5} parent=35 // pred_check_branch
        %1899 = sbr.rel (%p1897) target = $region40
      $region39: #{block_forward.5} parent=35 // pred_region
        _
      $region40: #{block_forward.5} parent=35 // pred_fallthru
        _
    $region36: #{block_forward.5} parent=5 // pred_fallthru
      _
    %p1900 = scmp.le.s32.totalorder 2, %s10
    // Predicated region
    $region41: #{block_forward.5} parent=5 // pred_check
      %p1901 = pneg %p1900
    $region42: #{block_forward.5} parent=5 // pred_check_branch
      %1903 = sbr.rel (%p1901) target = $region44
    $region43: #{block_forward.5} parent=5 // pred_region
      %s1904 = ssub.s32 %s10, 2
      // Predicated region
      $region45: #{block_forward.5} parent=43 // pred_check
        %p1905 = pneg %p133
      $region46: #{block_forward.5} parent=43 // pred_check_branch
        %1907 = sbr.rel (%p1905) target = $region48
      $region47: #{block_forward.5} parent=43 // pred_region
        %p1908 = scmp.lt.s32.totalorder %s16, 1
        %s1909 = scalar_select %p1908, %s16, 1
        %s1910 = smul.addr %s1909, 8
        %s1911 = smul.addr %s1910, 8
        %s1912 = scalar_lea.vmem %s4, %s1911
      $region48: #{block_forward.5} parent=43 // pred_fallthru
        _
    $region44: #{block_forward.5} parent=5 // pred_fallthru
      _
  $region6: #{block_forward.5} parent=0 // loop_footer
    %s14 = sadd.s32 1, %s10
  $region7: #{block_forward.5} parent=0 // loop_footer_branch
    %9 = sbr.rel target = $region3
  $region8: #{block_forward.5} parent=0 // loop_exit
    _

</llo_original>
